<compile_context>
chip_gen: v7x
topology: tpu7x:2x2x1
jax: 0.10.0
libtpu: 0.0.40
codegen_flags: <defaults>
</compile_context>

<pallas_src>
import functools
import math

import jax
import jax.numpy as jnp
from jax.experimental import pallas as pl
from jax.experimental.pallas import tpu as pltpu


# --------------------------------------------------------------------------
# Generation-aware VMEM budget and tile preferences
# --------------------------------------------------------------------------
def _tpu_vmem_capacity_bytes():
    try:
        info = pltpu.get_tpu_info()
        cap = getattr(info, "vmem_capacity_bytes", None)
        if cap:
            return int(cap)
    except Exception:
        pass
    return 64 * 1024 * 1024  # conservative (v7x-sized) fallback


_VMEM_CAP = _tpu_vmem_capacity_bytes()
_VMEM_LIMIT = int(_VMEM_CAP * 0.8)          # leave headroom below physical VMEM
_BIG_VMEM = _VMEM_CAP >= 96 * 1024 * 1024   # v5e/v6e (128 MiB) vs v7x (64 MiB)
_TFF_PREF = 2048 if _BIG_VMEM else 1024     # MLP d_ff tile
_TV_PREF = 2048 if _BIG_VMEM else 1024      # vocab tile (lane-dense)
_TM_PREF = 256                              # token (M) tile rows


def _cparams(sem):
    return pltpu.CompilerParams(dimension_semantics=sem,
                                vmem_limit_bytes=_VMEM_LIMIT)


def _pick_tile(total, preferred, align):
    """Largest multiple-of-`align` tile <= preferred that divides total."""
    t = min(preferred, total)
    t -= t % align
    while t >= align:
        if total % t == 0:
            return t
        t -= align
    return total  # falls back to full extent (always legal for BlockSpec)


def _layernorm(x, g, b, eps=1e-5):
    # PyTorch LayerNorm: biased variance over the last dim, f32 math.
    mu = jnp.mean(x, axis=-1, keepdims=True)
    xc = x - mu
    var = jnp.mean(xc * xc, axis=-1, keepdims=True)
    return xc * jax.lax.rsqrt(var + eps) * g + b


# --------------------------------------------------------------------------
# Kernel 1: fused pre-norm + QKV proj + causal MHA + out-proj + residual.
# One grid step per batch row; q/k/v never leave VMEM.
# --------------------------------------------------------------------------
def attn_layer_kernel(x_ref, g_ref, b_ref, wq_ref, wk_ref, wv_ref,
                      bq_ref, bk_ref, bv_ref, wo_ref, bo_ref, out_ref,
                      *, n_heads, scale):
    x = x_ref[0].astype(jnp.float32)                       # (S, D)
    S, D = x.shape
    dh = D // n_heads

    h = _layernorm(x, g_ref[...], b_ref[...]).astype(jnp.bfloat16)

    # Full K = D, N = D projections (lane-dense), f32 accumulation on the MXU.
    # Scale folded into q (S*D mults) instead of the (S, S) score matrix.
    q = ((jnp.dot(h, wq_ref[...], preferred_element_type=jnp.float32)
          + bq_ref[...]) * scale).astype(jnp.bfloat16)
    k = (jnp.dot(h, wk_ref[...], preferred_element_type=jnp.float32)
         + bk_ref[...]).astype(jnp.bfloat16)
    v = (jnp.dot(h, wv_ref[...], preferred_element_type=jnp.float32)
         + bv_ref[...]).astype(jnp.bfloat16)

    # Causal mask built once and shared across heads.
    row = jax.lax.broadcasted_iota(jnp.int32, (S, S), 0)
    col = jax.lax.broadcasted_iota(jnp.int32, (S, S), 1)
    causal = row >= col

    # All heads in one grid step (statically unrolled); no k.T materialization
    # (dot_general contracts the head dim), f32 accumulation throughout.
    ctx_heads = []
    for hh in range(n_heads):
        qh = q[:, hh * dh:(hh + 1) * dh]
        kh = k[:, hh * dh:(hh + 1) * dh]
        vh = v[:, hh * dh:(hh + 1) * dh]
        s = jax.lax.dot_general(qh, kh, (((1,), (1,)), ((), ())),
                                preferred_element_type=jnp.float32)   # (S, S)
        s = jnp.where(causal, s, -1e30)
        m = jnp.max(s, axis=-1, keepdims=True)
        p = jnp.exp(s - m)
        denom = jnp.sum(p, axis=-1, keepdims=True)
        p = p * pl.reciprocal(denom, approx=True)          # divide on the EUP
        ctx_heads.append(jnp.dot(p.astype(jnp.bfloat16), vh,
                                 preferred_element_type=jnp.float32))  # (S, dh)

    ctx = jnp.concatenate(ctx_heads, axis=-1).astype(jnp.bfloat16)     # (S, D)
    # Single output projection with K = D (fills the 256-wide v6e/v7x MXU).
    attn = jnp.dot(ctx, wo_ref[...],
                   preferred_element_type=jnp.float32) + bo_ref[...]
    out_ref[0] = (x + attn).astype(out_ref.dtype)


def run_attn_layer(x, ln_g, ln_b, wq, wk, wv, bq, bk, bv, wo, bo, n_heads):
    B, S, D = x.shape
    dh = D // n_heads
    scale = 1.0 / math.sqrt(dh)

    flops = B * (8 * S * D * D + 4 * S * S * D)
    transcendentals = B * n_heads * S * S
    bytes_accessed = 2 * B * S * D * 2 + 4 * D * D * 2 + 8 * D * 4
    cost = pl.CostEstimate(flops=flops, transcendentals=transcendentals,
                           bytes_accessed=bytes_accessed)

    vec_spec = pl.BlockSpec((1, D), lambda b: (0, 0))
    mat_spec = pl.BlockSpec((D, D), lambda b: (0, 0))
    x_spec = pl.BlockSpec((1, S, D), lambda b: (b, 0, 0))

    return pl.pallas_call(
        functools.partial(attn_layer_kernel, n_heads=n_heads, scale=scale),
        out_shape=jax.ShapeDtypeStruct((B, S, D), jnp.bfloat16),
        grid=(B,),
        in_specs=[
            x_spec,
            vec_spec, vec_spec,              # ln1 gamma / beta
            mat_spec, mat_spec, mat_spec,    # wq, wk, wv
            vec_spec, vec_spec, vec_spec,    # bq, bk, bv
            mat_spec, vec_spec,              # wo, bo
        ],
        out_specs=x_spec,
        input_output_aliases={0: 0},         # residual stream updated in place
        compiler_params=_cparams(("parallel",)),
        cost_estimate=cost,
    )(x, ln_g, ln_b, wq, wk, wv, bq, bk, bv, wo, bo)


# --------------------------------------------------------------------------
# Kernel 2: pre-norm MLP, token-tiled M, d_ff-tiled K/N with a VMEM f32
# accumulator seeded with the residual.
# --------------------------------------------------------------------------
def mlp_kernel(x_ref, g_ref, b_ref, w1_ref, b1_ref, w2_ref, b2_ref,
               out_ref, h_ref, acc_ref):
    f = pl.program_id(1)

    @pl.when(f == 0)
    def _():
        xf = x_ref[...].astype(jnp.float32)                # (tm, D)
        h_ref[...] = _layernorm(xf, g_ref[...], b_ref[...]).astype(jnp.bfloat16)
        acc_ref[...] = xf                                   # residual seed

    a = jnp.dot(h_ref[...], w1_ref[...],
                preferred_element_type=jnp.float32) + b1_ref[...]   # (tm, tff)
    a = jax.nn.gelu(a, approximate=True)
    acc_ref[...] += jnp.dot(a.astype(jnp.bfloat16), w2_ref[...],
                            preferred_element_type=jnp.float32)      # (tm, D)

    @pl.when(f == pl.num_programs(1) - 1)
    def _():
        out_ref[...] = (acc_ref[...] + b2_ref[...]).astype(out_ref.dtype)


def run_mlp(x, ln_g, ln_b, w1, b1, w2, b2):
    B, S, D = x.shape
    T = B * S
    d_ff = w1.shape[1]
    xt = x.reshape(T, D)                                    # token-flattened M

    tm = _pick_tile(T, _TM_PREF, 8)
    tff = _pick_tile(d_ff, _TFF_PREF, 128)

    cost = pl.CostEstimate(flops=4 * T * D * d_ff,
                           transcendentals=T * d_ff,
                           bytes_accessed=2 * T * D * 2 + 2 * D * d_ff * 2
                                          + (d_ff + 3 * D) * 4)

    out = pl.pallas_call(
        mlp_kernel,
        out_shape=jax.ShapeDtypeStruct((T, D), jnp.bfloat16),
        grid=(T // tm, d_ff // tff),
        in_specs=[
            pl.BlockSpec((tm, D), lambda t, f: (t, 0)),
            pl.BlockSpec((1, D), lambda t, f: (0, 0)),
            pl.BlockSpec((1, D), lambda t, f: (0, 0)),
            pl.BlockSpec((D, tff), lambda t, f: (0, f)),
            pl.BlockSpec((1, tff), lambda t, f: (0, f)),
            pl.BlockSpec((tff, D), lambda t, f: (f, 0)),
            pl.BlockSpec((1, D), lambda t, f: (0, 0)),
        ],
        out_specs=pl.BlockSpec((tm, D), lambda t, f: (t, 0)),
        scratch_shapes=[pltpu.VMEM((tm, D), jnp.bfloat16),
                        pltpu.VMEM((tm, D), jnp.float32)],
        input_output_aliases={0: 0},          # residual stream in place
        compiler_params=_cparams(("parallel", "arbitrary")),
        cost_estimate=cost,
    )(xt, ln_g, ln_b, w1, b1, w2, b2)
    return out.reshape(B, S, D)


# --------------------------------------------------------------------------
# Kernel 3: final LayerNorm (hoisted to v==0) + vocab projection,
# token-tiled M, lane-dense vocab tiles.
# --------------------------------------------------------------------------
def final_proj_kernel(x_ref, g_ref, b_ref, wp_ref, out_ref, h_ref):
    v = pl.program_id(1)

    @pl.when(v == 0)
    def _():
        xf = x_ref[...].astype(jnp.float32)                 # (tm, D)
        h_ref[...] = _layernorm(xf, g_ref[...], b_ref[...]).astype(jnp.bfloat16)

    out_ref[...] = jnp.dot(h_ref[...], wp_ref[...],
                           preferred_element_type=jnp.float32)       # (tm, tv)


def run_final_proj(x, ln_g, ln_b, w_proj):
    B, S, D = x.shape
    T = B * S
    V = w_proj.shape[1]
    xt = x.reshape(T, D)

    tm = _pick_tile(T, _TM_PREF, 8)
    tv = _pick_tile(V, _TV_PREF, 128)

    cost = pl.CostEstimate(flops=2 * T * D * V,
                           transcendentals=0,
                           bytes_accessed=T * D * 2 + D * V * 2
                                          + T * V * 4 + 2 * D * 4)

    out = pl.pallas_call(
        final_proj_kernel,
        out_shape=jax.ShapeDtypeStruct((T, V), jnp.float32),
        grid=(T // tm, V // tv),
        in_specs=[
            pl.BlockSpec((tm, D), lambda t, v: (t, 0)),
            pl.BlockSpec((1, D), lambda t, v: (0, 0)),
            pl.BlockSpec((1, D), lambda t, v: (0, 0)),
            pl.BlockSpec((D, tv), lambda t, v: (0, v)),
        ],
        out_specs=pl.BlockSpec((tm, tv), lambda t, v: (t, v)),
        scratch_shapes=[pltpu.VMEM((tm, D), jnp.bfloat16)],
        compiler_params=_cparams(("parallel", "arbitrary")),
        cost_estimate=cost,
    )(xt, ln_g, ln_b, w_proj)
    return out.reshape(B, S, V)


# --------------------------------------------------------------------------
# Forward pass
# --------------------------------------------------------------------------
@functools.partial(jax.jit, static_argnums=(2,))
def lairgpt_forward(input_ids, params, n_heads):
    B, S = input_ids.shape
    # Embedding + learned positional encoding (gather glue in plain JAX).
    x = params["tok_emb"][input_ids] + params["pos_emb"][:S][None, :, :]
    x = x.astype(jnp.bfloat16)                              # bf16 residual stream
    for lp in params["layers"]:
        x = run_attn_layer(x, lp["ln1_g"], lp["ln1_b"],
                           lp["wq"], lp["wk"], lp["wv"],
                           lp["bq"], lp["bk"], lp["bv"],
                           lp["wo"], lp["bo"], n_heads)
        x = run_mlp(x, lp["ln2_g"], lp["ln2_b"], lp["w1"], lp["b1"],
                    lp["w2"], lp["b2"])
    return run_final_proj(x, params["final_ln_g"], params["final_ln_b"],
                          params["w_proj"])


# --------------------------------------------------------------------------
# Deterministic parameter init (synthetic; shapes match LairGPT.__init__).
# Matmul weights stored bf16; LayerNorm params and biases kept f32.
# --------------------------------------------------------------------------
def init_params(key, d_model, n_heads, n_layers, vocab_size, max_seq_len):
    d_ff = 4 * d_model
    keys = iter(jax.random.split(key, 4 + 8 * n_layers))

    def w(shape, dtype=jnp.bfloat16):
        return (0.02 * jax.random.normal(next(keys), shape,
                                         dtype=jnp.float32)).astype(dtype)

    params = {
        "tok_emb": w((vocab_size, d_model), jnp.float32),
        "pos_emb": w((max_seq_len, d_model), jnp.float32),
        "final_ln_g": jnp.ones((1, d_model), jnp.float32),
        "final_ln_b": jnp.zeros((1, d_model), jnp.float32),
        "w_proj": w((d_model, vocab_size)),                 # add_bias=False
        "layers": [],
    }
    for _ in range(n_layers):
        params["layers"].append({
            "ln1_g": jnp.ones((1, d_model), jnp.float32),
            "ln1_b": jnp.zeros((1, d_model), jnp.float32),
            "wq": w((d_model, d_model)),
            "wk": w((d_model, d_model)),
            "wv": w((d_model, d_model)),
            "bq": jnp.zeros((1, d_model), jnp.float32),
            "bk": jnp.zeros((1, d_model), jnp.float32),
            "bv": jnp.zeros((1, d_model), jnp.float32),
            "wo": w((d_model, d_model)),
            "bo": jnp.zeros((1, d_model), jnp.float32),
            "ln2_g": jnp.ones((1, d_model), jnp.float32),
            "ln2_b": jnp.zeros((1, d_model), jnp.float32),
            "w1": w((d_model, d_ff)),
            "b1": jnp.zeros((1, d_ff), jnp.float32),
            "w2": w((d_ff, d_model)),
            "b2": jnp.zeros((1, d_model), jnp.float32),
        })
    return params


if __name__ == "__main__":
    # Small but TPU-aligned config: D and V are multiples of 128, S of 8.
    d_model, n_heads, n_layers, vocab_size = 128, 4, 2, 256
    max_seq_len = 64
    B, S = 2, 16

    key = jax.random.PRNGKey(0)
    k_params, k_ids = jax.random.split(key)
    params = init_params(k_params, d_model, n_heads, n_layers, vocab_size,
                         max_seq_len)
    input_ids = jax.random.randint(k_ids, (B, S), 0, vocab_size,
                                   dtype=jnp.int32)

    logits = lairgpt_forward(input_ids, params, n_heads)
    jax.block_until_ready(logits)

    assert logits.shape == (B, S, vocab_size), logits.shape
    assert logits.dtype == jnp.float32
    assert bool(jnp.all(jnp.isfinite(logits)))
    print("KERNEL_OK")
</pallas_src>

<mosaic_0001>
module attributes {stable_mosaic.version = 11 : i64} {
  func.func @attn_layer_kernel(%arg0: i32, %arg1: memref<1x16x128xbf16, #tpu.memory_space<vmem>>, %arg2: memref<1x128xf32, #tpu.memory_space<vmem>>, %arg3: memref<1x128xf32, #tpu.memory_space<vmem>>, %arg4: memref<128x128xbf16, #tpu.memory_space<vmem>>, %arg5: memref<128x128xbf16, #tpu.memory_space<vmem>>, %arg6: memref<128x128xbf16, #tpu.memory_space<vmem>>, %arg7: memref<1x128xf32, #tpu.memory_space<vmem>>, %arg8: memref<1x128xf32, #tpu.memory_space<vmem>>, %arg9: memref<1x128xf32, #tpu.memory_space<vmem>>, %arg10: memref<128x128xbf16, #tpu.memory_space<vmem>>, %arg11: memref<1x128xf32, #tpu.memory_space<vmem>>, %arg12: memref<1x16x128xbf16, #tpu.memory_space<vmem>>) attributes {dimension_semantics = [#tpu.dimension_semantics<parallel>], iteration_bounds = array<i64: 2>, scalar_prefetch = 0 : i64, scratch_operands = 0 : i64, tpu.core_type = #tpu.core_type<tc>, window_params = [{transform_indices = @transform_0, window_bounds = array<i64: 1, 16, 128>}, {pipeline_mode = #tpu.pipeline_mode<synchronous>, transform_indices = @transform_1, window_bounds = array<i64: 1, 128>}, {pipeline_mode = #tpu.pipeline_mode<synchronous>, transform_indices = @transform_2, window_bounds = array<i64: 1, 128>}, {pipeline_mode = #tpu.pipeline_mode<synchronous>, transform_indices = @transform_3, window_bounds = array<i64: 128, 128>}, {pipeline_mode = #tpu.pipeline_mode<synchronous>, transform_indices = @transform_4, window_bounds = array<i64: 128, 128>}, {pipeline_mode = #tpu.pipeline_mode<synchronous>, transform_indices = @transform_5, window_bounds = array<i64: 128, 128>}, {pipeline_mode = #tpu.pipeline_mode<synchronous>, transform_indices = @transform_6, window_bounds = array<i64: 1, 128>}, {pipeline_mode = #tpu.pipeline_mode<synchronous>, transform_indices = @transform_7, window_bounds = array<i64: 1, 128>}, {pipeline_mode = #tpu.pipeline_mode<synchronous>, transform_indices = @transform_8, window_bounds = array<i64: 1, 128>}, {pipeline_mode = #tpu.pipeline_mode<synchronous>, transform_indices = @transform_9, window_bounds = array<i64: 128, 128>}, {pipeline_mode = #tpu.pipeline_mode<synchronous>, transform_indices = @transform_10, window_bounds = array<i64: 1, 128>}, {transform_indices = @transform_11, window_bounds = array<i64: 1, 16, 128>}]} {
    %c0 = arith.constant 0 : index
    %c0_0 = arith.constant 0 : index
    %c0_1 = arith.constant 0 : index
    %0 = vector.load %arg1[%c0, %c0_0, %c0_1] : memref<1x16x128xbf16, #tpu.memory_space<vmem>>, vector<1x16x128xbf16>
    %1 = vector.shape_cast %0 : vector<1x16x128xbf16> to vector<16x128xbf16>
    %2 = arith.extf %1 : vector<16x128xbf16> to vector<16x128xf32>
    %c0_2 = arith.constant 0 : index
    %c0_3 = arith.constant 0 : index
    %3 = vector.load %arg2[%c0_2, %c0_3] : memref<1x128xf32, #tpu.memory_space<vmem>>, vector<1x128xf32>
    %c0_4 = arith.constant 0 : index
    %c0_5 = arith.constant 0 : index
    %4 = vector.load %arg3[%c0_4, %c0_5] : memref<1x128xf32, #tpu.memory_space<vmem>>, vector<1x128xf32>
    %cst = arith.constant dense<0.000000e+00> : vector<16xf32>
    %5 = vector.multi_reduction <add>, %2, %cst [1] : vector<16x128xf32> to vector<16xf32>
    %6 = vector.shape_cast %5 : vector<16xf32> to vector<16x1xf32>
    %cst_6 = arith.constant 1.280000e+02 : f32
    %7 = vector.broadcast %cst_6 : f32 to vector<16x1xf32>
    %8 = arith.divf %6, %7 : vector<16x1xf32>
    %9 = vector.broadcast %8 : vector<16x1xf32> to vector<16x128xf32>
    %10 = arith.subf %2, %9 : vector<16x128xf32>
    %11 = arith.mulf %10, %10 : vector<16x128xf32>
    %cst_7 = arith.constant dense<0.000000e+00> : vector<16xf32>
    %12 = vector.multi_reduction <add>, %11, %cst_7 [1] : vector<16x128xf32> to vector<16xf32>
    %13 = vector.shape_cast %12 : vector<16xf32> to vector<16x1xf32>
    %cst_8 = arith.constant 1.280000e+02 : f32
    %14 = vector.broadcast %cst_8 : f32 to vector<16x1xf32>
    %15 = arith.divf %13, %14 : vector<16x1xf32>
    %cst_9 = arith.constant 9.99999974E-6 : f32
    %16 = vector.broadcast %cst_9 : f32 to vector<16x1xf32>
    %17 = arith.addf %15, %16 : vector<16x1xf32>
    %18 = math.rsqrt %17 : vector<16x1xf32>
    %19 = vector.broadcast %18 : vector<16x1xf32> to vector<16x128xf32>
    %20 = arith.mulf %10, %19 : vector<16x128xf32>
    %21 = vector.broadcast %3 : vector<1x128xf32> to vector<16x128xf32>
    %22 = arith.mulf %20, %21 : vector<16x128xf32>
    %23 = vector.broadcast %4 : vector<1x128xf32> to vector<16x128xf32>
    %24 = arith.addf %22, %23 : vector<16x128xf32>
    %25 = arith.truncf %24 : vector<16x128xf32> to vector<16x128xbf16>
    %c0_10 = arith.constant 0 : index
    %c0_11 = arith.constant 0 : index
    %26 = vector.load %arg4[%c0_10, %c0_11] : memref<128x128xbf16, #tpu.memory_space<vmem>>, vector<128x128xbf16>
    %cst_12 = arith.constant dense<0.000000e+00> : vector<16x128xf32>
    %27 = tpu.matmul %25, %26, %cst_12 {dimension_numbers = #tpu.dot_dimension_numbers<[1], [0], [0], [1], [0, 0, 1, 1], [], []>} : vector<16x128xbf16>, vector<128x128xbf16>, vector<16x128xf32> -> vector<16x128xf32>
    %c0_13 = arith.constant 0 : index
    %c0_14 = arith.constant 0 : index
    %28 = vector.load %arg7[%c0_13, %c0_14] : memref<1x128xf32, #tpu.memory_space<vmem>>, vector<1x128xf32>
    %29 = vector.broadcast %28 : vector<1x128xf32> to vector<16x128xf32>
    %30 = arith.addf %27, %29 : vector<16x128xf32>
    %cst_15 = arith.constant 0.176776692 : f32
    %31 = vector.broadcast %cst_15 : f32 to vector<16x128xf32>
    %32 = arith.mulf %30, %31 : vector<16x128xf32>
    %33 = arith.truncf %32 : vector<16x128xf32> to vector<16x128xbf16>
    %c0_16 = arith.constant 0 : index
    %c0_17 = arith.constant 0 : index
    %34 = vector.load %arg5[%c0_16, %c0_17] : memref<128x128xbf16, #tpu.memory_space<vmem>>, vector<128x128xbf16>
    %cst_18 = arith.constant dense<0.000000e+00> : vector<16x128xf32>
    %35 = tpu.matmul %25, %34, %cst_18 {dimension_numbers = #tpu.dot_dimension_numbers<[1], [0], [0], [1], [0, 0, 1, 1], [], []>} : vector<16x128xbf16>, vector<128x128xbf16>, vector<16x128xf32> -> vector<16x128xf32>
    %c0_19 = arith.constant 0 : index
    %c0_20 = arith.constant 0 : index
    %36 = vector.load %arg8[%c0_19, %c0_20] : memref<1x128xf32, #tpu.memory_space<vmem>>, vector<1x128xf32>
    %37 = vector.broadcast %36 : vector<1x128xf32> to vector<16x128xf32>
    %38 = arith.addf %35, %37 : vector<16x128xf32>
    %39 = arith.truncf %38 : vector<16x128xf32> to vector<16x128xbf16>
    %c0_21 = arith.constant 0 : index
    %c0_22 = arith.constant 0 : index
    %40 = vector.load %arg6[%c0_21, %c0_22] : memref<128x128xbf16, #tpu.memory_space<vmem>>, vector<128x128xbf16>
    %cst_23 = arith.constant dense<0.000000e+00> : vector<16x128xf32>
    %41 = tpu.matmul %25, %40, %cst_23 {dimension_numbers = #tpu.dot_dimension_numbers<[1], [0], [0], [1], [0, 0, 1, 1], [], []>} : vector<16x128xbf16>, vector<128x128xbf16>, vector<16x128xf32> -> vector<16x128xf32>
    %c0_24 = arith.constant 0 : index
    %c0_25 = arith.constant 0 : index
    %42 = vector.load %arg9[%c0_24, %c0_25] : memref<1x128xf32, #tpu.memory_space<vmem>>, vector<1x128xf32>
    %43 = vector.broadcast %42 : vector<1x128xf32> to vector<16x128xf32>
    %44 = arith.addf %41, %43 : vector<16x128xf32>
    %45 = arith.truncf %44 : vector<16x128xf32> to vector<16x128xbf16>
    %46 = tpu.iota {dimensions = array<i32: 0>} : vector<16x16xi32>
    %47 = tpu.iota {dimensions = array<i32: 1>} : vector<16x16xi32>
    %48 = arith.cmpi sge, %46, %47 : vector<16x16xi32>
    %49 = vector.extract_strided_slice %33 {offsets = [0, 0], sizes = [16, 32], strides = [1, 1]} : vector<16x128xbf16> to vector<16x32xbf16>
    %50 = vector.extract_strided_slice %39 {offsets = [0, 0], sizes = [16, 32], strides = [1, 1]} : vector<16x128xbf16> to vector<16x32xbf16>
    %51 = vector.extract_strided_slice %45 {offsets = [0, 0], sizes = [16, 32], strides = [1, 1]} : vector<16x128xbf16> to vector<16x32xbf16>
    %cst_26 = arith.constant dense<0.000000e+00> : vector<16x16xf32>
    %52 = tpu.matmul %49, %50, %cst_26 {dimension_numbers = #tpu.dot_dimension_numbers<[1], [1], [0], [0], [0, 0, 1, 0], [], []>} : vector<16x32xbf16>, vector<16x32xbf16>, vector<16x16xf32> -> vector<16x16xf32>
    %cst_27 = arith.constant -1.000000e+30 : f32
    %53 = vector.broadcast %cst_27 : f32 to vector<16x16xf32>
    %54 = arith.select %48, %52, %53 : vector<16x16xi1>, vector<16x16xf32>
    %cst_28 = arith.constant dense<0xFF800000> : vector<16xf32>
    %55 = vector.multi_reduction <maximumf>, %54, %cst_28 [1] : vector<16x16xf32> to vector<16xf32>
    %56 = vector.shape_cast %55 : vector<16xf32> to vector<16x1xf32>
    %57 = vector.broadcast %56 : vector<16x1xf32> to vector<16x16xf32>
    %58 = arith.subf %54, %57 : vector<16x16xf32>
    %59 = math.exp %58 : vector<16x16xf32>
    %cst_29 = arith.constant dense<0.000000e+00> : vector<16xf32>
    %60 = vector.multi_reduction <add>, %59, %cst_29 [1] : vector<16x16xf32> to vector<16xf32>
    %61 = vector.shape_cast %60 : vector<16xf32> to vector<16x1xf32>
    %62 = tpu.reciprocal %61 {approx = true} : vector<16x1xf32> -> vector<16x1xf32>
    %63 = vector.broadcast %62 : vector<16x1xf32> to vector<16x16xf32>
    %64 = arith.mulf %59, %63 : vector<16x16xf32>
    %65 = arith.truncf %64 : vector<16x16xf32> to vector<16x16xbf16>
    %cst_30 = arith.constant dense<0.000000e+00> : vector<16x32xf32>
    %66 = tpu.matmul %65, %51, %cst_30 {dimension_numbers = #tpu.dot_dimension_numbers<[1], [0], [0], [1], [0, 0, 1, 1], [], []>} : vector<16x16xbf16>, vector<16x32xbf16>, vector<16x32xf32> -> vector<16x32xf32>
    %67 = vector.extract_strided_slice %33 {offsets = [0, 32], sizes = [16, 32], strides = [1, 1]} : vector<16x128xbf16> to vector<16x32xbf16>
    %68 = vector.extract_strided_slice %39 {offsets = [0, 32], sizes = [16, 32], strides = [1, 1]} : vector<16x128xbf16> to vector<16x32xbf16>
    %69 = vector.extract_strided_slice %45 {offsets = [0, 32], sizes = [16, 32], strides = [1, 1]} : vector<16x128xbf16> to vector<16x32xbf16>
    %cst_31 = arith.constant dense<0.000000e+00> : vector<16x16xf32>
    %70 = tpu.matmul %67, %68, %cst_31 {dimension_numbers = #tpu.dot_dimension_numbers<[1], [1], [0], [0], [0, 0, 1, 0], [], []>} : vector<16x32xbf16>, vector<16x32xbf16>, vector<16x16xf32> -> vector<16x16xf32>
    %cst_32 = arith.constant -1.000000e+30 : f32
    %71 = vector.broadcast %cst_32 : f32 to vector<16x16xf32>
    %72 = arith.select %48, %70, %71 : vector<16x16xi1>, vector<16x16xf32>
    %cst_33 = arith.constant dense<0xFF800000> : vector<16xf32>
    %73 = vector.multi_reduction <maximumf>, %72, %cst_33 [1] : vector<16x16xf32> to vector<16xf32>
    %74 = vector.shape_cast %73 : vector<16xf32> to vector<16x1xf32>
    %75 = vector.broadcast %74 : vector<16x1xf32> to vector<16x16xf32>
    %76 = arith.subf %72, %75 : vector<16x16xf32>
    %77 = math.exp %76 : vector<16x16xf32>
    %cst_34 = arith.constant dense<0.000000e+00> : vector<16xf32>
    %78 = vector.multi_reduction <add>, %77, %cst_34 [1] : vector<16x16xf32> to vector<16xf32>
    %79 = vector.shape_cast %78 : vector<16xf32> to vector<16x1xf32>
    %80 = tpu.reciprocal %79 {approx = true} : vector<16x1xf32> -> vector<16x1xf32>
    %81 = vector.broadcast %80 : vector<16x1xf32> to vector<16x16xf32>
    %82 = arith.mulf %77, %81 : vector<16x16xf32>
    %83 = arith.truncf %82 : vector<16x16xf32> to vector<16x16xbf16>
    %cst_35 = arith.constant dense<0.000000e+00> : vector<16x32xf32>
    %84 = tpu.matmul %83, %69, %cst_35 {dimension_numbers = #tpu.dot_dimension_numbers<[1], [0], [0], [1], [0, 0, 1, 1], [], []>} : vector<16x16xbf16>, vector<16x32xbf16>, vector<16x32xf32> -> vector<16x32xf32>
    %85 = vector.extract_strided_slice %33 {offsets = [0, 64], sizes = [16, 32], strides = [1, 1]} : vector<16x128xbf16> to vector<16x32xbf16>
    %86 = vector.extract_strided_slice %39 {offsets = [0, 64], sizes = [16, 32], strides = [1, 1]} : vector<16x128xbf16> to vector<16x32xbf16>
    %87 = vector.extract_strided_slice %45 {offsets = [0, 64], sizes = [16, 32], strides = [1, 1]} : vector<16x128xbf16> to vector<16x32xbf16>
    %cst_36 = arith.constant dense<0.000000e+00> : vector<16x16xf32>
    %88 = tpu.matmul %85, %86, %cst_36 {dimension_numbers = #tpu.dot_dimension_numbers<[1], [1], [0], [0], [0, 0, 1, 0], [], []>} : vector<16x32xbf16>, vector<16x32xbf16>, vector<16x16xf32> -> vector<16x16xf32>
    %cst_37 = arith.constant -1.000000e+30 : f32
    %89 = vector.broadcast %cst_37 : f32 to vector<16x16xf32>
    %90 = arith.select %48, %88, %89 : vector<16x16xi1>, vector<16x16xf32>
    %cst_38 = arith.constant dense<0xFF800000> : vector<16xf32>
    %91 = vector.multi_reduction <maximumf>, %90, %cst_38 [1] : vector<16x16xf32> to vector<16xf32>
    %92 = vector.shape_cast %91 : vector<16xf32> to vector<16x1xf32>
    %93 = vector.broadcast %92 : vector<16x1xf32> to vector<16x16xf32>
    %94 = arith.subf %90, %93 : vector<16x16xf32>
    %95 = math.exp %94 : vector<16x16xf32>
    %cst_39 = arith.constant dense<0.000000e+00> : vector<16xf32>
    %96 = vector.multi_reduction <add>, %95, %cst_39 [1] : vector<16x16xf32> to vector<16xf32>
    %97 = vector.shape_cast %96 : vector<16xf32> to vector<16x1xf32>
    %98 = tpu.reciprocal %97 {approx = true} : vector<16x1xf32> -> vector<16x1xf32>
    %99 = vector.broadcast %98 : vector<16x1xf32> to vector<16x16xf32>
    %100 = arith.mulf %95, %99 : vector<16x16xf32>
    %101 = arith.truncf %100 : vector<16x16xf32> to vector<16x16xbf16>
    %cst_40 = arith.constant dense<0.000000e+00> : vector<16x32xf32>
    %102 = tpu.matmul %101, %87, %cst_40 {dimension_numbers = #tpu.dot_dimension_numbers<[1], [0], [0], [1], [0, 0, 1, 1], [], []>} : vector<16x16xbf16>, vector<16x32xbf16>, vector<16x32xf32> -> vector<16x32xf32>
    %103 = vector.extract_strided_slice %33 {offsets = [0, 96], sizes = [16, 32], strides = [1, 1]} : vector<16x128xbf16> to vector<16x32xbf16>
    %104 = vector.extract_strided_slice %39 {offsets = [0, 96], sizes = [16, 32], strides = [1, 1]} : vector<16x128xbf16> to vector<16x32xbf16>
    %105 = vector.extract_strided_slice %45 {offsets = [0, 96], sizes = [16, 32], strides = [1, 1]} : vector<16x128xbf16> to vector<16x32xbf16>
    %cst_41 = arith.constant dense<0.000000e+00> : vector<16x16xf32>
    %106 = tpu.matmul %103, %104, %cst_41 {dimension_numbers = #tpu.dot_dimension_numbers<[1], [1], [0], [0], [0, 0, 1, 0], [], []>} : vector<16x32xbf16>, vector<16x32xbf16>, vector<16x16xf32> -> vector<16x16xf32>
    %cst_42 = arith.constant -1.000000e+30 : f32
    %107 = vector.broadcast %cst_42 : f32 to vector<16x16xf32>
    %108 = arith.select %48, %106, %107 : vector<16x16xi1>, vector<16x16xf32>
    %cst_43 = arith.constant dense<0xFF800000> : vector<16xf32>
    %109 = vector.multi_reduction <maximumf>, %108, %cst_43 [1] : vector<16x16xf32> to vector<16xf32>
    %110 = vector.shape_cast %109 : vector<16xf32> to vector<16x1xf32>
    %111 = vector.broadcast %110 : vector<16x1xf32> to vector<16x16xf32>
    %112 = arith.subf %108, %111 : vector<16x16xf32>
    %113 = math.exp %112 : vector<16x16xf32>
    %cst_44 = arith.constant dense<0.000000e+00> : vector<16xf32>
    %114 = vector.multi_reduction <add>, %113, %cst_44 [1] : vector<16x16xf32> to vector<16xf32>
    %115 = vector.shape_cast %114 : vector<16xf32> to vector<16x1xf32>
    %116 = tpu.reciprocal %115 {approx = true} : vector<16x1xf32> -> vector<16x1xf32>
    %117 = vector.broadcast %116 : vector<16x1xf32> to vector<16x16xf32>
    %118 = arith.mulf %113, %117 : vector<16x16xf32>
    %119 = arith.truncf %118 : vector<16x16xf32> to vector<16x16xbf16>
    %cst_45 = arith.constant dense<0.000000e+00> : vector<16x32xf32>
    %120 = tpu.matmul %119, %105, %cst_45 {dimension_numbers = #tpu.dot_dimension_numbers<[1], [0], [0], [1], [0, 0, 1, 1], [], []>} : vector<16x16xbf16>, vector<16x32xbf16>, vector<16x32xf32> -> vector<16x32xf32>
    %121 = tpu.concatenate %66, %84, %102, %120 in 1 : vector<16x32xf32>, vector<16x32xf32>, vector<16x32xf32>, vector<16x32xf32> -> vector<16x128xf32>
    %122 = arith.truncf %121 : vector<16x128xf32> to vector<16x128xbf16>
    %c0_46 = arith.constant 0 : index
    %c0_47 = arith.constant 0 : index
    %123 = vector.load %arg10[%c0_46, %c0_47] : memref<128x128xbf16, #tpu.memory_space<vmem>>, vector<128x128xbf16>
    %cst_48 = arith.constant dense<0.000000e+00> : vector<16x128xf32>
    %124 = tpu.matmul %122, %123, %cst_48 {dimension_numbers = #tpu.dot_dimension_numbers<[1], [0], [0], [1], [0, 0, 1, 1], [], []>} : vector<16x128xbf16>, vector<128x128xbf16>, vector<16x128xf32> -> vector<16x128xf32>
    %c0_49 = arith.constant 0 : index
    %c0_50 = arith.constant 0 : index
    %125 = vector.load %arg11[%c0_49, %c0_50] : memref<1x128xf32, #tpu.memory_space<vmem>>, vector<1x128xf32>
    %126 = vector.broadcast %125 : vector<1x128xf32> to vector<16x128xf32>
    %127 = arith.addf %124, %126 : vector<16x128xf32>
    %128 = arith.addf %2, %127 : vector<16x128xf32>
    %129 = arith.truncf %128 : vector<16x128xf32> to vector<16x128xbf16>
    %c0_51 = arith.constant 0 : index
    %c0_52 = arith.constant 0 : index
    %c0_53 = arith.constant 0 : index
    %130 = vector.load %arg12[%c0_51, %c0_52, %c0_53] : memref<1x16x128xbf16, #tpu.memory_space<vmem>>, vector<1x16x128xbf16>
    %131 = vector.shape_cast %130 : vector<1x16x128xbf16> to vector<16x128xbf16>
    %132 = vector.shape_cast %129 : vector<16x128xbf16> to vector<1x16x128xbf16>
    tpu.vector_store %arg12[%c0_51, %c0_52, %c0_53], %132 {strides = array<i32>} : memref<1x16x128xbf16, #tpu.memory_space<vmem>>, vector<1x16x128xbf16>,
    return
  }
  func.func @transform_0(%arg0: i32) -> (i32, i32, i32) {
    %c0_i32 = arith.constant 0 : i32
    %c0_i32_0 = arith.constant 0 : i32
    %c0_i32_1 = arith.constant 0 : i32
    return %arg0, %c0_i32, %c0_i32_0 : i32, i32, i32
  }
  func.func @transform_1(%arg0: i32) -> (i32, i32) {
    %c0_i32 = arith.constant 0 : i32
    %c0_i32_0 = arith.constant 0 : i32
    %c0_i32_1 = arith.constant 0 : i32
    return %c0_i32, %c0_i32_0 : i32, i32
  }
  func.func @transform_2(%arg0: i32) -> (i32, i32) {
    %c0_i32 = arith.constant 0 : i32
    %c0_i32_0 = arith.constant 0 : i32
    %c0_i32_1 = arith.constant 0 : i32
    return %c0_i32, %c0_i32_0 : i32, i32
  }
  func.func @transform_3(%arg0: i32) -> (i32, i32) {
    %c0_i32 = arith.constant 0 : i32
    %c0_i32_0 = arith.constant 0 : i32
    %c0_i32_1 = arith.constant 0 : i32
    return %c0_i32, %c0_i32_0 : i32, i32
  }
  func.func @transform_4(%arg0: i32) -> (i32, i32) {
    %c0_i32 = arith.constant 0 : i32
    %c0_i32_0 = arith.constant 0 : i32
    %c0_i32_1 = arith.constant 0 : i32
    return %c0_i32, %c0_i32_0 : i32, i32
  }
  func.func @transform_5(%arg0: i32) -> (i32, i32) {
    %c0_i32 = arith.constant 0 : i32
    %c0_i32_0 = arith.constant 0 : i32
    %c0_i32_1 = arith.constant 0 : i32
    return %c0_i32, %c0_i32_0 : i32, i32
  }
  func.func @transform_6(%arg0: i32) -> (i32, i32) {
    %c0_i32 = arith.constant 0 : i32
    %c0_i32_0 = arith.constant 0 : i32
    %c0_i32_1 = arith.constant 0 : i32
    return %c0_i32, %c0_i32_0 : i32, i32
  }
  func.func @transform_7(%arg0: i32) -> (i32, i32) {
    %c0_i32 = arith.constant 0 : i32
    %c0_i32_0 = arith.constant 0 : i32
    %c0_i32_1 = arith.constant 0 : i32
    return %c0_i32, %c0_i32_0 : i32, i32
  }
  func.func @transform_8(%arg0: i32) -> (i32, i32) {
    %c0_i32 = arith.constant 0 : i32
    %c0_i32_0 = arith.constant 0 : i32
    %c0_i32_1 = arith.constant 0 : i32
    return %c0_i32, %c0_i32_0 : i32, i32
  }
  func.func @transform_9(%arg0: i32) -> (i32, i32) {
    %c0_i32 = arith.constant 0 : i32
    %c0_i32_0 = arith.constant 0 : i32
    %c0_i32_1 = arith.constant 0 : i32
    return %c0_i32, %c0_i32_0 : i32, i32
  }
  func.func @transform_10(%arg0: i32) -> (i32, i32) {
    %c0_i32 = arith.constant 0 : i32
    %c0_i32_0 = arith.constant 0 : i32
    %c0_i32_1 = arith.constant 0 : i32
    return %c0_i32, %c0_i32_0 : i32, i32
  }
  func.func @transform_11(%arg0: i32) -> (i32, i32, i32) {
    %c0_i32 = arith.constant 0 : i32
    %c0_i32_0 = arith.constant 0 : i32
    %c0_i32_1 = arith.constant 0 : i32
    return %arg0, %c0_i32, %c0_i32_0 : i32, i32, i32
  }
}

module attributes {stable_mosaic.version = 11 : i64} {
  func.func @mlp_kernel(%arg0: i32, %arg1: i32, %arg2: memref<32x128xbf16, #tpu.memory_space<vmem>>, %arg3: memref<1x128xf32, #tpu.memory_space<vmem>>, %arg4: memref<1x128xf32, #tpu.memory_space<vmem>>, %arg5: memref<128x512xbf16, #tpu.memory_space<vmem>>, %arg6: memref<1x512xf32, #tpu.memory_space<vmem>>, %arg7: memref<512x128xbf16, #tpu.memory_space<vmem>>, %arg8: memref<1x128xf32, #tpu.memory_space<vmem>>, %arg9: memref<32x128xbf16, #tpu.memory_space<vmem>>, %arg10: memref<32x128xbf16, #tpu.memory_space<vmem>>, %arg11: memref<32x128xf32, #tpu.memory_space<vmem>>) attributes {dimension_semantics = [#tpu.dimension_semantics<parallel>, #tpu.dimension_semantics<arbitrary>], iteration_bounds = array<i64: 1, 1>, scalar_prefetch = 0 : i64, scratch_operands = 2 : i64, tpu.core_type = #tpu.core_type<tc>, window_params = [{transform_indices = @transform_0, window_bounds = array<i64: 32, 128>}, {pipeline_mode = #tpu.pipeline_mode<synchronous>, transform_indices = @transform_1, window_bounds = array<i64: 1, 128>}, {pipeline_mode = #tpu.pipeline_mode<synchronous>, transform_indices = @transform_2, window_bounds = array<i64: 1, 128>}, {transform_indices = @transform_3, window_bounds = array<i64: 128, 512>}, {transform_indices = @transform_4, window_bounds = array<i64: 1, 512>}, {transform_indices = @transform_5, window_bounds = array<i64: 512, 128>}, {pipeline_mode = #tpu.pipeline_mode<synchronous>, transform_indices = @transform_6, window_bounds = array<i64: 1, 128>}, {transform_indices = @transform_7, window_bounds = array<i64: 32, 128>}]} {
    %c0_i32 = arith.constant 0 : i32
    %0 = arith.cmpi eq, %arg1, %c0_i32 : i32
    %1 = arith.extui %0 : i1 to i32
    %c0_i32_0 = arith.constant 0 : i32
    %2 = arith.cmpi ne, %1, %c0_i32_0 : i32
    scf.if %2 {
      %c0_19 = arith.constant 0 : index
      %c0_20 = arith.constant 0 : index
      %31 = vector.load %arg2[%c0_19, %c0_20] : memref<32x128xbf16, #tpu.memory_space<vmem>>, vector<32x128xbf16>
      %32 = arith.extf %31 : vector<32x128xbf16> to vector<32x128xf32>
      %c0_21 = arith.constant 0 : index
      %c0_22 = arith.constant 0 : index
      %33 = vector.load %arg3[%c0_21, %c0_22] : memref<1x128xf32, #tpu.memory_space<vmem>>, vector<1x128xf32>
      %c0_23 = arith.constant 0 : index
      %c0_24 = arith.constant 0 : index
      %34 = vector.load %arg4[%c0_23, %c0_24] : memref<1x128xf32, #tpu.memory_space<vmem>>, vector<1x128xf32>
      %cst_25 = arith.constant dense<0.000000e+00> : vector<32xf32>
      %35 = vector.multi_reduction <add>, %32, %cst_25 [1] : vector<32x128xf32> to vector<32xf32>
      %36 = vector.shape_cast %35 : vector<32xf32> to vector<32x1xf32>
      %cst_26 = arith.constant 1.280000e+02 : f32
      %37 = vector.broadcast %cst_26 : f32 to vector<32x1xf32>
      %38 = arith.divf %36, %37 : vector<32x1xf32>
      %39 = vector.broadcast %38 : vector<32x1xf32> to vector<32x128xf32>
      %40 = arith.subf %32, %39 : vector<32x128xf32>
      %41 = arith.mulf %40, %40 : vector<32x128xf32>
      %cst_27 = arith.constant dense<0.000000e+00> : vector<32xf32>
      %42 = vector.multi_reduction <add>, %41, %cst_27 [1] : vector<32x128xf32> to vector<32xf32>
      %43 = vector.shape_cast %42 : vector<32xf32> to vector<32x1xf32>
      %cst_28 = arith.constant 1.280000e+02 : f32
      %44 = vector.broadcast %cst_28 : f32 to vector<32x1xf32>
      %45 = arith.divf %43, %44 : vector<32x1xf32>
      %cst_29 = arith.constant 9.99999974E-6 : f32
      %46 = vector.broadcast %cst_29 : f32 to vector<32x1xf32>
      %47 = arith.addf %45, %46 : vector<32x1xf32>
      %48 = math.rsqrt %47 : vector<32x1xf32>
      %49 = vector.broadcast %48 : vector<32x1xf32> to vector<32x128xf32>
      %50 = arith.mulf %40, %49 : vector<32x128xf32>
      %51 = vector.broadcast %33 : vector<1x128xf32> to vector<32x128xf32>
      %52 = arith.mulf %50, %51 : vector<32x128xf32>
      %53 = vector.broadcast %34 : vector<1x128xf32> to vector<32x128xf32>
      %54 = arith.addf %52, %53 : vector<32x128xf32>
      %55 = arith.truncf %54 : vector<32x128xf32> to vector<32x128xbf16>
      %c0_30 = arith.constant 0 : index
      %c0_31 = arith.constant 0 : index
      %56 = vector.load %arg10[%c0_30, %c0_31] : memref<32x128xbf16, #tpu.memory_space<vmem>>, vector<32x128xbf16>
      tpu.vector_store %arg10[%c0_30, %c0_31], %55 {strides = array<i32>} : memref<32x128xbf16, #tpu.memory_space<vmem>>, vector<32x128xbf16>,
      %c0_32 = arith.constant 0 : index
      %c0_33 = arith.constant 0 : index
      %57 = vector.load %arg11[%c0_32, %c0_33] : memref<32x128xf32, #tpu.memory_space<vmem>>, vector<32x128xf32>
      tpu.vector_store %arg11[%c0_32, %c0_33], %32 {strides = array<i32>} : memref<32x128xf32, #tpu.memory_space<vmem>>, vector<32x128xf32>,
    } else {
    }
    %c0 = arith.constant 0 : index
    %c0_1 = arith.constant 0 : index
    %3 = vector.load %arg10[%c0, %c0_1] : memref<32x128xbf16, #tpu.memory_space<vmem>>, vector<32x128xbf16>
    %c0_2 = arith.constant 0 : index
    %c0_3 = arith.constant 0 : index
    %4 = vector.load %arg5[%c0_2, %c0_3] : memref<128x512xbf16, #tpu.memory_space<vmem>>, vector<128x512xbf16>
    %cst = arith.constant dense<0.000000e+00> : vector<32x512xf32>
    %5 = tpu.matmul %3, %4, %cst {dimension_numbers = #tpu.dot_dimension_numbers<[1], [0], [0], [1], [0, 0, 1, 1], [], []>} : vector<32x128xbf16>, vector<128x512xbf16>, vector<32x512xf32> -> vector<32x512xf32>
    %c0_4 = arith.constant 0 : index
    %c0_5 = arith.constant 0 : index
    %6 = vector.load %arg6[%c0_4, %c0_5] : memref<1x512xf32, #tpu.memory_space<vmem>>, vector<1x512xf32>
    %7 = vector.broadcast %6 : vector<1x512xf32> to vector<32x512xf32>
    %8 = arith.addf %5, %7 : vector<32x512xf32>
    %9 = arith.mulf %8, %8 : vector<32x512xf32>
    %10 = arith.mulf %8, %9 : vector<32x512xf32>
    %cst_6 = arith.constant 4.471500e-02 : f32
    %11 = vector.broadcast %cst_6 : f32 to vector<32x512xf32>
    %12 = arith.mulf %11, %10 : vector<32x512xf32>
    %13 = arith.addf %8, %12 : vector<32x512xf32>
    %cst_7 = arith.constant 0.797884583 : f32
    %14 = vector.broadcast %cst_7 : f32 to vector<32x512xf32>
    %15 = arith.mulf %14, %13 : vector<32x512xf32>
    %16 = math.tanh %15 : vector<32x512xf32>
    %cst_8 = arith.constant 1.000000e+00 : f32
    %17 = vector.broadcast %cst_8 : f32 to vector<32x512xf32>
    %18 = arith.addf %17, %16 : vector<32x512xf32>
    %cst_9 = arith.constant 5.000000e-01 : f32
    %19 = vector.broadcast %cst_9 : f32 to vector<32x512xf32>
    %20 = arith.mulf %19, %18 : vector<32x512xf32>
    %21 = arith.mulf %8, %20 : vector<32x512xf32>
    %c0_10 = arith.constant 0 : index
    %c0_11 = arith.constant 0 : index
    %22 = vector.load %arg11[%c0_10, %c0_11] : memref<32x128xf32, #tpu.memory_space<vmem>>, vector<32x128xf32>
    %23 = arith.truncf %21 : vector<32x512xf32> to vector<32x512xbf16>
    %c0_12 = arith.constant 0 : index
    %c0_13 = arith.constant 0 : index
    %24 = vector.load %arg7[%c0_12, %c0_13] : memref<512x128xbf16, #tpu.memory_space<vmem>>, vector<512x128xbf16>
    %cst_14 = arith.constant dense<0.000000e+00> : vector<32x128xf32>
    %25 = tpu.matmul %23, %24, %cst_14 {dimension_numbers = #tpu.dot_dimension_numbers<[1], [0], [0], [1], [0, 0, 1, 1], [], []>} : vector<32x512xbf16>, vector<512x128xbf16>, vector<32x128xf32> -> vector<32x128xf32>
    %26 = arith.addf %22, %25 : vector<32x128xf32>
    %c0_15 = arith.constant 0 : index
    %c0_16 = arith.constant 0 : index
    %27 = vector.load %arg11[%c0_15, %c0_16] : memref<32x128xf32, #tpu.memory_space<vmem>>, vector<32x128xf32>
    tpu.vector_store %arg11[%c0_15, %c0_16], %26 {strides = array<i32>} : memref<32x128xf32, #tpu.memory_space<vmem>>, vector<32x128xf32>,
    %c0_i32_17 = arith.constant 0 : i32
    %28 = arith.cmpi eq, %arg1, %c0_i32_17 : i32
    %29 = arith.extui %28 : i1 to i32
    %c0_i32_18 = arith.constant 0 : i32
    %30 = arith.cmpi ne, %29, %c0_i32_18 : i32
    scf.if %30 {
      %c0_19 = arith.constant 0 : index
      %c0_20 = arith.constant 0 : index
      %31 = vector.load %arg11[%c0_19, %c0_20] : memref<32x128xf32, #tpu.memory_space<vmem>>, vector<32x128xf32>
      %c0_21 = arith.constant 0 : index
      %c0_22 = arith.constant 0 : index
      %32 = vector.load %arg8[%c0_21, %c0_22] : memref<1x128xf32, #tpu.memory_space<vmem>>, vector<1x128xf32>
      %33 = vector.broadcast %32 : vector<1x128xf32> to vector<32x128xf32>
      %34 = arith.addf %31, %33 : vector<32x128xf32>
      %35 = arith.truncf %34 : vector<32x128xf32> to vector<32x128xbf16>
      %c0_23 = arith.constant 0 : index
      %c0_24 = arith.constant 0 : index
      %36 = vector.load %arg9[%c0_23, %c0_24] : memref<32x128xbf16, #tpu.memory_space<vmem>>, vector<32x128xbf16>
      tpu.vector_store %arg9[%c0_23, %c0_24], %35 {strides = array<i32>} : memref<32x128xbf16, #tpu.memory_space<vmem>>, vector<32x128xbf16>,
    } else {
    }
    return
  }
  func.func @transform_0(%arg0: i32, %arg1: i32) -> (i32, i32) {
    %c0_i32 = arith.constant 0 : i32
    %c0_i32_0 = arith.constant 0 : i32
    return %arg0, %c0_i32 : i32, i32
  }
  func.func @transform_1(%arg0: i32, %arg1: i32) -> (i32, i32) {
    %c0_i32 = arith.constant 0 : i32
    %c0_i32_0 = arith.constant 0 : i32
    %c0_i32_1 = arith.constant 0 : i32
    return %c0_i32, %c0_i32_0 : i32, i32
  }
  func.func @transform_2(%arg0: i32, %arg1: i32) -> (i32, i32) {
    %c0_i32 = arith.constant 0 : i32
    %c0_i32_0 = arith.constant 0 : i32
    %c0_i32_1 = arith.constant 0 : i32
    return %c0_i32, %c0_i32_0 : i32, i32
  }
  func.func @transform_3(%arg0: i32, %arg1: i32) -> (i32, i32) {
    %c0_i32 = arith.constant 0 : i32
    %c0_i32_0 = arith.constant 0 : i32
    return %c0_i32, %arg1 : i32, i32
  }
  func.func @transform_4(%arg0: i32, %arg1: i32) -> (i32, i32) {
    %c0_i32 = arith.constant 0 : i32
    %c0_i32_0 = arith.constant 0 : i32
    return %c0_i32, %arg1 : i32, i32
  }
  func.func @transform_5(%arg0: i32, %arg1: i32) -> (i32, i32) {
    %c0_i32 = arith.constant 0 : i32
    %c0_i32_0 = arith.constant 0 : i32
    return %arg1, %c0_i32 : i32, i32
  }
  func.func @transform_6(%arg0: i32, %arg1: i32) -> (i32, i32) {
    %c0_i32 = arith.constant 0 : i32
    %c0_i32_0 = arith.constant 0 : i32
    %c0_i32_1 = arith.constant 0 : i32
    return %c0_i32, %c0_i32_0 : i32, i32
  }
  func.func @transform_7(%arg0: i32, %arg1: i32) -> (i32, i32) {
    %c0_i32 = arith.constant 0 : i32
    %c0_i32_0 = arith.constant 0 : i32
    return %arg0, %c0_i32 : i32, i32
  }
}

module attributes {stable_mosaic.version = 11 : i64} {
  func.func @attn_layer_kernel(%arg0: i32, %arg1: memref<1x16x128xbf16, #tpu.memory_space<vmem>>, %arg2: memref<1x128xf32, #tpu.memory_space<vmem>>, %arg3: memref<1x128xf32, #tpu.memory_space<vmem>>, %arg4: memref<128x128xbf16, #tpu.memory_space<vmem>>, %arg5: memref<128x128xbf16, #tpu.memory_space<vmem>>, %arg6: memref<128x128xbf16, #tpu.memory_space<vmem>>, %arg7: memref<1x128xf32, #tpu.memory_space<vmem>>, %arg8: memref<1x128xf32, #tpu.memory_space<vmem>>, %arg9: memref<1x128xf32, #tpu.memory_space<vmem>>, %arg10: memref<128x128xbf16, #tpu.memory_space<vmem>>, %arg11: memref<1x128xf32, #tpu.memory_space<vmem>>, %arg12: memref<1x16x128xbf16, #tpu.memory_space<vmem>>) attributes {dimension_semantics = [#tpu.dimension_semantics<parallel>], iteration_bounds = array<i64: 2>, scalar_prefetch = 0 : i64, scratch_operands = 0 : i64, tpu.core_type = #tpu.core_type<tc>, window_params = [{transform_indices = @transform_0, window_bounds = array<i64: 1, 16, 128>}, {pipeline_mode = #tpu.pipeline_mode<synchronous>, transform_indices = @transform_1, window_bounds = array<i64: 1, 128>}, {pipeline_mode = #tpu.pipeline_mode<synchronous>, transform_indices = @transform_2, window_bounds = array<i64: 1, 128>}, {pipeline_mode = #tpu.pipeline_mode<synchronous>, transform_indices = @transform_3, window_bounds = array<i64: 128, 128>}, {pipeline_mode = #tpu.pipeline_mode<synchronous>, transform_indices = @transform_4, window_bounds = array<i64: 128, 128>}, {pipeline_mode = #tpu.pipeline_mode<synchronous>, transform_indices = @transform_5, window_bounds = array<i64: 128, 128>}, {pipeline_mode = #tpu.pipeline_mode<synchronous>, transform_indices = @transform_6, window_bounds = array<i64: 1, 128>}, {pipeline_mode = #tpu.pipeline_mode<synchronous>, transform_indices = @transform_7, window_bounds = array<i64: 1, 128>}, {pipeline_mode = #tpu.pipeline_mode<synchronous>, transform_indices = @transform_8, window_bounds = array<i64: 1, 128>}, {pipeline_mode = #tpu.pipeline_mode<synchronous>, transform_indices = @transform_9, window_bounds = array<i64: 128, 128>}, {pipeline_mode = #tpu.pipeline_mode<synchronous>, transform_indices = @transform_10, window_bounds = array<i64: 1, 128>}, {transform_indices = @transform_11, window_bounds = array<i64: 1, 16, 128>}]} {
    %c0 = arith.constant 0 : index
    %c0_0 = arith.constant 0 : index
    %c0_1 = arith.constant 0 : index
    %0 = vector.load %arg1[%c0, %c0_0, %c0_1] : memref<1x16x128xbf16, #tpu.memory_space<vmem>>, vector<1x16x128xbf16>
    %1 = vector.shape_cast %0 : vector<1x16x128xbf16> to vector<16x128xbf16>
    %2 = arith.extf %1 : vector<16x128xbf16> to vector<16x128xf32>
    %c0_2 = arith.constant 0 : index
    %c0_3 = arith.constant 0 : index
    %3 = vector.load %arg2[%c0_2, %c0_3] : memref<1x128xf32, #tpu.memory_space<vmem>>, vector<1x128xf32>
    %c0_4 = arith.constant 0 : index
    %c0_5 = arith.constant 0 : index
    %4 = vector.load %arg3[%c0_4, %c0_5] : memref<1x128xf32, #tpu.memory_space<vmem>>, vector<1x128xf32>
    %cst = arith.constant dense<0.000000e+00> : vector<16xf32>
    %5 = vector.multi_reduction <add>, %2, %cst [1] : vector<16x128xf32> to vector<16xf32>
    %6 = vector.shape_cast %5 : vector<16xf32> to vector<16x1xf32>
    %cst_6 = arith.constant 1.280000e+02 : f32
    %7 = vector.broadcast %cst_6 : f32 to vector<16x1xf32>
    %8 = arith.divf %6, %7 : vector<16x1xf32>
    %9 = vector.broadcast %8 : vector<16x1xf32> to vector<16x128xf32>
    %10 = arith.subf %2, %9 : vector<16x128xf32>
    %11 = arith.mulf %10, %10 : vector<16x128xf32>
    %cst_7 = arith.constant dense<0.000000e+00> : vector<16xf32>
    %12 = vector.multi_reduction <add>, %11, %cst_7 [1] : vector<16x128xf32> to vector<16xf32>
    %13 = vector.shape_cast %12 : vector<16xf32> to vector<16x1xf32>
    %cst_8 = arith.constant 1.280000e+02 : f32
    %14 = vector.broadcast %cst_8 : f32 to vector<16x1xf32>
    %15 = arith.divf %13, %14 : vector<16x1xf32>
    %cst_9 = arith.constant 9.99999974E-6 : f32
    %16 = vector.broadcast %cst_9 : f32 to vector<16x1xf32>
    %17 = arith.addf %15, %16 : vector<16x1xf32>
    %18 = math.rsqrt %17 : vector<16x1xf32>
    %19 = vector.broadcast %18 : vector<16x1xf32> to vector<16x128xf32>
    %20 = arith.mulf %10, %19 : vector<16x128xf32>
    %21 = vector.broadcast %3 : vector<1x128xf32> to vector<16x128xf32>
    %22 = arith.mulf %20, %21 : vector<16x128xf32>
    %23 = vector.broadcast %4 : vector<1x128xf32> to vector<16x128xf32>
    %24 = arith.addf %22, %23 : vector<16x128xf32>
    %25 = arith.truncf %24 : vector<16x128xf32> to vector<16x128xbf16>
    %c0_10 = arith.constant 0 : index
    %c0_11 = arith.constant 0 : index
    %26 = vector.load %arg4[%c0_10, %c0_11] : memref<128x128xbf16, #tpu.memory_space<vmem>>, vector<128x128xbf16>
    %cst_12 = arith.constant dense<0.000000e+00> : vector<16x128xf32>
    %27 = tpu.matmul %25, %26, %cst_12 {dimension_numbers = #tpu.dot_dimension_numbers<[1], [0], [0], [1], [0, 0, 1, 1], [], []>} : vector<16x128xbf16>, vector<128x128xbf16>, vector<16x128xf32> -> vector<16x128xf32>
    %c0_13 = arith.constant 0 : index
    %c0_14 = arith.constant 0 : index
    %28 = vector.load %arg7[%c0_13, %c0_14] : memref<1x128xf32, #tpu.memory_space<vmem>>, vector<1x128xf32>
    %29 = vector.broadcast %28 : vector<1x128xf32> to vector<16x128xf32>
    %30 = arith.addf %27, %29 : vector<16x128xf32>
    %cst_15 = arith.constant 0.176776692 : f32
    %31 = vector.broadcast %cst_15 : f32 to vector<16x128xf32>
    %32 = arith.mulf %30, %31 : vector<16x128xf32>
    %33 = arith.truncf %32 : vector<16x128xf32> to vector<16x128xbf16>
    %c0_16 = arith.constant 0 : index
    %c0_17 = arith.constant 0 : index
    %34 = vector.load %arg5[%c0_16, %c0_17] : memref<128x128xbf16, #tpu.memory_space<vmem>>, vector<128x128xbf16>
    %cst_18 = arith.constant dense<0.000000e+00> : vector<16x128xf32>
    %35 = tpu.matmul %25, %34, %cst_18 {dimension_numbers = #tpu.dot_dimension_numbers<[1], [0], [0], [1], [0, 0, 1, 1], [], []>} : vector<16x128xbf16>, vector<128x128xbf16>, vector<16x128xf32> -> vector<16x128xf32>
    %c0_19 = arith.constant 0 : index
    %c0_20 = arith.constant 0 : index
    %36 = vector.load %arg8[%c0_19, %c0_20] : memref<1x128xf32, #tpu.memory_space<vmem>>, vector<1x128xf32>
    %37 = vector.broadcast %36 : vector<1x128xf32> to vector<16x128xf32>
    %38 = arith.addf %35, %37 : vector<16x128xf32>
    %39 = arith.truncf %38 : vector<16x128xf32> to vector<16x128xbf16>
    %c0_21 = arith.constant 0 : index
    %c0_22 = arith.constant 0 : index
    %40 = vector.load %arg6[%c0_21, %c0_22] : memref<128x128xbf16, #tpu.memory_space<vmem>>, vector<128x128xbf16>
    %cst_23 = arith.constant dense<0.000000e+00> : vector<16x128xf32>
    %41 = tpu.matmul %25, %40, %cst_23 {dimension_numbers = #tpu.dot_dimension_numbers<[1], [0], [0], [1], [0, 0, 1, 1], [], []>} : vector<16x128xbf16>, vector<128x128xbf16>, vector<16x128xf32> -> vector<16x128xf32>
    %c0_24 = arith.constant 0 : index
    %c0_25 = arith.constant 0 : index
    %42 = vector.load %arg9[%c0_24, %c0_25] : memref<1x128xf32, #tpu.memory_space<vmem>>, vector<1x128xf32>
    %43 = vector.broadcast %42 : vector<1x128xf32> to vector<16x128xf32>
    %44 = arith.addf %41, %43 : vector<16x128xf32>
    %45 = arith.truncf %44 : vector<16x128xf32> to vector<16x128xbf16>
    %46 = tpu.iota {dimensions = array<i32: 0>} : vector<16x16xi32>
    %47 = tpu.iota {dimensions = array<i32: 1>} : vector<16x16xi32>
    %48 = arith.cmpi sge, %46, %47 : vector<16x16xi32>
    %49 = vector.extract_strided_slice %33 {offsets = [0, 0], sizes = [16, 32], strides = [1, 1]} : vector<16x128xbf16> to vector<16x32xbf16>
    %50 = vector.extract_strided_slice %39 {offsets = [0, 0], sizes = [16, 32], strides = [1, 1]} : vector<16x128xbf16> to vector<16x32xbf16>
    %51 = vector.extract_strided_slice %45 {offsets = [0, 0], sizes = [16, 32], strides = [1, 1]} : vector<16x128xbf16> to vector<16x32xbf16>
    %cst_26 = arith.constant dense<0.000000e+00> : vector<16x16xf32>
    %52 = tpu.matmul %49, %50, %cst_26 {dimension_numbers = #tpu.dot_dimension_numbers<[1], [1], [0], [0], [0, 0, 1, 0], [], []>} : vector<16x32xbf16>, vector<16x32xbf16>, vector<16x16xf32> -> vector<16x16xf32>
    %cst_27 = arith.constant -1.000000e+30 : f32
    %53 = vector.broadcast %cst_27 : f32 to vector<16x16xf32>
    %54 = arith.select %48, %52, %53 : vector<16x16xi1>, vector<16x16xf32>
    %cst_28 = arith.constant dense<0xFF800000> : vector<16xf32>
    %55 = vector.multi_reduction <maximumf>, %54, %cst_28 [1] : vector<16x16xf32> to vector<16xf32>
    %56 = vector.shape_cast %55 : vector<16xf32> to vector<16x1xf32>
    %57 = vector.broadcast %56 : vector<16x1xf32> to vector<16x16xf32>
    %58 = arith.subf %54, %57 : vector<16x16xf32>
    %59 = math.exp %58 : vector<16x16xf32>
    %cst_29 = arith.constant dense<0.000000e+00> : vector<16xf32>
    %60 = vector.multi_reduction <add>, %59, %cst_29 [1] : vector<16x16xf32> to vector<16xf32>
    %61 = vector.shape_cast %60 : vector<16xf32> to vector<16x1xf32>
    %62 = tpu.reciprocal %61 {approx = true} : vector<16x1xf32> -> vector<16x1xf32>
    %63 = vector.broadcast %62 : vector<16x1xf32> to vector<16x16xf32>
    %64 = arith.mulf %59, %63 : vector<16x16xf32>
    %65 = arith.truncf %64 : vector<16x16xf32> to vector<16x16xbf16>
    %cst_30 = arith.constant dense<0.000000e+00> : vector<16x32xf32>
    %66 = tpu.matmul %65, %51, %cst_30 {dimension_numbers = #tpu.dot_dimension_numbers<[1], [0], [0], [1], [0, 0, 1, 1], [], []>} : vector<16x16xbf16>, vector<16x32xbf16>, vector<16x32xf32> -> vector<16x32xf32>
    %67 = vector.extract_strided_slice %33 {offsets = [0, 32], sizes = [16, 32], strides = [1, 1]} : vector<16x128xbf16> to vector<16x32xbf16>
    %68 = vector.extract_strided_slice %39 {offsets = [0, 32], sizes = [16, 32], strides = [1, 1]} : vector<16x128xbf16> to vector<16x32xbf16>
    %69 = vector.extract_strided_slice %45 {offsets = [0, 32], sizes = [16, 32], strides = [1, 1]} : vector<16x128xbf16> to vector<16x32xbf16>
    %cst_31 = arith.constant dense<0.000000e+00> : vector<16x16xf32>
    %70 = tpu.matmul %67, %68, %cst_31 {dimension_numbers = #tpu.dot_dimension_numbers<[1], [1], [0], [0], [0, 0, 1, 0], [], []>} : vector<16x32xbf16>, vector<16x32xbf16>, vector<16x16xf32> -> vector<16x16xf32>
    %cst_32 = arith.constant -1.000000e+30 : f32
    %71 = vector.broadcast %cst_32 : f32 to vector<16x16xf32>
    %72 = arith.select %48, %70, %71 : vector<16x16xi1>, vector<16x16xf32>
    %cst_33 = arith.constant dense<0xFF800000> : vector<16xf32>
    %73 = vector.multi_reduction <maximumf>, %72, %cst_33 [1] : vector<16x16xf32> to vector<16xf32>
    %74 = vector.shape_cast %73 : vector<16xf32> to vector<16x1xf32>
    %75 = vector.broadcast %74 : vector<16x1xf32> to vector<16x16xf32>
    %76 = arith.subf %72, %75 : vector<16x16xf32>
    %77 = math.exp %76 : vector<16x16xf32>
    %cst_34 = arith.constant dense<0.000000e+00> : vector<16xf32>
    %78 = vector.multi_reduction <add>, %77, %cst_34 [1] : vector<16x16xf32> to vector<16xf32>
    %79 = vector.shape_cast %78 : vector<16xf32> to vector<16x1xf32>
    %80 = tpu.reciprocal %79 {approx = true} : vector<16x1xf32> -> vector<16x1xf32>
    %81 = vector.broadcast %80 : vector<16x1xf32> to vector<16x16xf32>
    %82 = arith.mulf %77, %81 : vector<16x16xf32>
    %83 = arith.truncf %82 : vector<16x16xf32> to vector<16x16xbf16>
    %cst_35 = arith.constant dense<0.000000e+00> : vector<16x32xf32>
    %84 = tpu.matmul %83, %69, %cst_35 {dimension_numbers = #tpu.dot_dimension_numbers<[1], [0], [0], [1], [0, 0, 1, 1], [], []>} : vector<16x16xbf16>, vector<16x32xbf16>, vector<16x32xf32> -> vector<16x32xf32>
    %85 = vector.extract_strided_slice %33 {offsets = [0, 64], sizes = [16, 32], strides = [1, 1]} : vector<16x128xbf16> to vector<16x32xbf16>
    %86 = vector.extract_strided_slice %39 {offsets = [0, 64], sizes = [16, 32], strides = [1, 1]} : vector<16x128xbf16> to vector<16x32xbf16>
    %87 = vector.extract_strided_slice %45 {offsets = [0, 64], sizes = [16, 32], strides = [1, 1]} : vector<16x128xbf16> to vector<16x32xbf16>
    %cst_36 = arith.constant dense<0.000000e+00> : vector<16x16xf32>
    %88 = tpu.matmul %85, %86, %cst_36 {dimension_numbers = #tpu.dot_dimension_numbers<[1], [1], [0], [0], [0, 0, 1, 0], [], []>} : vector<16x32xbf16>, vector<16x32xbf16>, vector<16x16xf32> -> vector<16x16xf32>
    %cst_37 = arith.constant -1.000000e+30 : f32
    %89 = vector.broadcast %cst_37 : f32 to vector<16x16xf32>
    %90 = arith.select %48, %88, %89 : vector<16x16xi1>, vector<16x16xf32>
    %cst_38 = arith.constant dense<0xFF800000> : vector<16xf32>
    %91 = vector.multi_reduction <maximumf>, %90, %cst_38 [1] : vector<16x16xf32> to vector<16xf32>
    %92 = vector.shape_cast %91 : vector<16xf32> to vector<16x1xf32>
    %93 = vector.broadcast %92 : vector<16x1xf32> to vector<16x16xf32>
    %94 = arith.subf %90, %93 : vector<16x16xf32>
    %95 = math.exp %94 : vector<16x16xf32>
    %cst_39 = arith.constant dense<0.000000e+00> : vector<16xf32>
    %96 = vector.multi_reduction <add>, %95, %cst_39 [1] : vector<16x16xf32> to vector<16xf32>
    %97 = vector.shape_cast %96 : vector<16xf32> to vector<16x1xf32>
    %98 = tpu.reciprocal %97 {approx = true} : vector<16x1xf32> -> vector<16x1xf32>
    %99 = vector.broadcast %98 : vector<16x1xf32> to vector<16x16xf32>
    %100 = arith.mulf %95, %99 : vector<16x16xf32>
    %101 = arith.truncf %100 : vector<16x16xf32> to vector<16x16xbf16>
    %cst_40 = arith.constant dense<0.000000e+00> : vector<16x32xf32>
    %102 = tpu.matmul %101, %87, %cst_40 {dimension_numbers = #tpu.dot_dimension_numbers<[1], [0], [0], [1], [0, 0, 1, 1], [], []>} : vector<16x16xbf16>, vector<16x32xbf16>, vector<16x32xf32> -> vector<16x32xf32>
    %103 = vector.extract_strided_slice %33 {offsets = [0, 96], sizes = [16, 32], strides = [1, 1]} : vector<16x128xbf16> to vector<16x32xbf16>
    %104 = vector.extract_strided_slice %39 {offsets = [0, 96], sizes = [16, 32], strides = [1, 1]} : vector<16x128xbf16> to vector<16x32xbf16>
    %105 = vector.extract_strided_slice %45 {offsets = [0, 96], sizes = [16, 32], strides = [1, 1]} : vector<16x128xbf16> to vector<16x32xbf16>
    %cst_41 = arith.constant dense<0.000000e+00> : vector<16x16xf32>
    %106 = tpu.matmul %103, %104, %cst_41 {dimension_numbers = #tpu.dot_dimension_numbers<[1], [1], [0], [0], [0, 0, 1, 0], [], []>} : vector<16x32xbf16>, vector<16x32xbf16>, vector<16x16xf32> -> vector<16x16xf32>
    %cst_42 = arith.constant -1.000000e+30 : f32
    %107 = vector.broadcast %cst_42 : f32 to vector<16x16xf32>
    %108 = arith.select %48, %106, %107 : vector<16x16xi1>, vector<16x16xf32>
    %cst_43 = arith.constant dense<0xFF800000> : vector<16xf32>
    %109 = vector.multi_reduction <maximumf>, %108, %cst_43 [1] : vector<16x16xf32> to vector<16xf32>
    %110 = vector.shape_cast %109 : vector<16xf32> to vector<16x1xf32>
    %111 = vector.broadcast %110 : vector<16x1xf32> to vector<16x16xf32>
    %112 = arith.subf %108, %111 : vector<16x16xf32>
    %113 = math.exp %112 : vector<16x16xf32>
    %cst_44 = arith.constant dense<0.000000e+00> : vector<16xf32>
    %114 = vector.multi_reduction <add>, %113, %cst_44 [1] : vector<16x16xf32> to vector<16xf32>
    %115 = vector.shape_cast %114 : vector<16xf32> to vector<16x1xf32>
    %116 = tpu.reciprocal %115 {approx = true} : vector<16x1xf32> -> vector<16x1xf32>
    %117 = vector.broadcast %116 : vector<16x1xf32> to vector<16x16xf32>
    %118 = arith.mulf %113, %117 : vector<16x16xf32>
    %119 = arith.truncf %118 : vector<16x16xf32> to vector<16x16xbf16>
    %cst_45 = arith.constant dense<0.000000e+00> : vector<16x32xf32>
    %120 = tpu.matmul %119, %105, %cst_45 {dimension_numbers = #tpu.dot_dimension_numbers<[1], [0], [0], [1], [0, 0, 1, 1], [], []>} : vector<16x16xbf16>, vector<16x32xbf16>, vector<16x32xf32> -> vector<16x32xf32>
    %121 = tpu.concatenate %66, %84, %102, %120 in 1 : vector<16x32xf32>, vector<16x32xf32>, vector<16x32xf32>, vector<16x32xf32> -> vector<16x128xf32>
    %122 = arith.truncf %121 : vector<16x128xf32> to vector<16x128xbf16>
    %c0_46 = arith.constant 0 : index
    %c0_47 = arith.constant 0 : index
    %123 = vector.load %arg10[%c0_46, %c0_47] : memref<128x128xbf16, #tpu.memory_space<vmem>>, vector<128x128xbf16>
    %cst_48 = arith.constant dense<0.000000e+00> : vector<16x128xf32>
    %124 = tpu.matmul %122, %123, %cst_48 {dimension_numbers = #tpu.dot_dimension_numbers<[1], [0], [0], [1], [0, 0, 1, 1], [], []>} : vector<16x128xbf16>, vector<128x128xbf16>, vector<16x128xf32> -> vector<16x128xf32>
    %c0_49 = arith.constant 0 : index
    %c0_50 = arith.constant 0 : index
    %125 = vector.load %arg11[%c0_49, %c0_50] : memref<1x128xf32, #tpu.memory_space<vmem>>, vector<1x128xf32>
    %126 = vector.broadcast %125 : vector<1x128xf32> to vector<16x128xf32>
    %127 = arith.addf %124, %126 : vector<16x128xf32>
    %128 = arith.addf %2, %127 : vector<16x128xf32>
    %129 = arith.truncf %128 : vector<16x128xf32> to vector<16x128xbf16>
    %c0_51 = arith.constant 0 : index
    %c0_52 = arith.constant 0 : index
    %c0_53 = arith.constant 0 : index
    %130 = vector.load %arg12[%c0_51, %c0_52, %c0_53] : memref<1x16x128xbf16, #tpu.memory_space<vmem>>, vector<1x16x128xbf16>
    %131 = vector.shape_cast %130 : vector<1x16x128xbf16> to vector<16x128xbf16>
    %132 = vector.shape_cast %129 : vector<16x128xbf16> to vector<1x16x128xbf16>
    tpu.vector_store %arg12[%c0_51, %c0_52, %c0_53], %132 {strides = array<i32>} : memref<1x16x128xbf16, #tpu.memory_space<vmem>>, vector<1x16x128xbf16>,
    return
  }
  func.func @transform_0(%arg0: i32) -> (i32, i32, i32) {
    %c0_i32 = arith.constant 0 : i32
    %c0_i32_0 = arith.constant 0 : i32
    %c0_i32_1 = arith.constant 0 : i32
    return %arg0, %c0_i32, %c0_i32_0 : i32, i32, i32
  }
  func.func @transform_1(%arg0: i32) -> (i32, i32) {
    %c0_i32 = arith.constant 0 : i32
    %c0_i32_0 = arith.constant 0 : i32
    %c0_i32_1 = arith.constant 0 : i32
    return %c0_i32, %c0_i32_0 : i32, i32
  }
  func.func @transform_2(%arg0: i32) -> (i32, i32) {
    %c0_i32 = arith.constant 0 : i32
    %c0_i32_0 = arith.constant 0 : i32
    %c0_i32_1 = arith.constant 0 : i32
    return %c0_i32, %c0_i32_0 : i32, i32
  }
  func.func @transform_3(%arg0: i32) -> (i32, i32) {
    %c0_i32 = arith.constant 0 : i32
    %c0_i32_0 = arith.constant 0 : i32
    %c0_i32_1 = arith.constant 0 : i32
    return %c0_i32, %c0_i32_0 : i32, i32
  }
  func.func @transform_4(%arg0: i32) -> (i32, i32) {
    %c0_i32 = arith.constant 0 : i32
    %c0_i32_0 = arith.constant 0 : i32
    %c0_i32_1 = arith.constant 0 : i32
    return %c0_i32, %c0_i32_0 : i32, i32
  }
  func.func @transform_5(%arg0: i32) -> (i32, i32) {
    %c0_i32 = arith.constant 0 : i32
    %c0_i32_0 = arith.constant 0 : i32
    %c0_i32_1 = arith.constant 0 : i32
    return %c0_i32, %c0_i32_0 : i32, i32
  }
  func.func @transform_6(%arg0: i32) -> (i32, i32) {
    %c0_i32 = arith.constant 0 : i32
    %c0_i32_0 = arith.constant 0 : i32
    %c0_i32_1 = arith.constant 0 : i32
    return %c0_i32, %c0_i32_0 : i32, i32
  }
  func.func @transform_7(%arg0: i32) -> (i32, i32) {
    %c0_i32 = arith.constant 0 : i32
    %c0_i32_0 = arith.constant 0 : i32
    %c0_i32_1 = arith.constant 0 : i32
    return %c0_i32, %c0_i32_0 : i32, i32
  }
  func.func @transform_8(%arg0: i32) -> (i32, i32) {
    %c0_i32 = arith.constant 0 : i32
    %c0_i32_0 = arith.constant 0 : i32
    %c0_i32_1 = arith.constant 0 : i32
    return %c0_i32, %c0_i32_0 : i32, i32
  }
  func.func @transform_9(%arg0: i32) -> (i32, i32) {
    %c0_i32 = arith.constant 0 : i32
    %c0_i32_0 = arith.constant 0 : i32
    %c0_i32_1 = arith.constant 0 : i32
    return %c0_i32, %c0_i32_0 : i32, i32
  }
  func.func @transform_10(%arg0: i32) -> (i32, i32) {
    %c0_i32 = arith.constant 0 : i32
    %c0_i32_0 = arith.constant 0 : i32
    %c0_i32_1 = arith.constant 0 : i32
    return %c0_i32, %c0_i32_0 : i32, i32
  }
  func.func @transform_11(%arg0: i32) -> (i32, i32, i32) {
    %c0_i32 = arith.constant 0 : i32
    %c0_i32_0 = arith.constant 0 : i32
    %c0_i32_1 = arith.constant 0 : i32
    return %arg0, %c0_i32, %c0_i32_0 : i32, i32, i32
  }
}

module attributes {stable_mosaic.version = 11 : i64} {
  func.func @mlp_kernel(%arg0: i32, %arg1: i32, %arg2: memref<32x128xbf16, #tpu.memory_space<vmem>>, %arg3: memref<1x128xf32, #tpu.memory_space<vmem>>, %arg4: memref<1x128xf32, #tpu.memory_space<vmem>>, %arg5: memref<128x512xbf16, #tpu.memory_space<vmem>>, %arg6: memref<1x512xf32, #tpu.memory_space<vmem>>, %arg7: memref<512x128xbf16, #tpu.memory_space<vmem>>, %arg8: memref<1x128xf32, #tpu.memory_space<vmem>>, %arg9: memref<32x128xbf16, #tpu.memory_space<vmem>>, %arg10: memref<32x128xbf16, #tpu.memory_space<vmem>>, %arg11: memref<32x128xf32, #tpu.memory_space<vmem>>) attributes {dimension_semantics = [#tpu.dimension_semantics<parallel>, #tpu.dimension_semantics<arbitrary>], iteration_bounds = array<i64: 1, 1>, scalar_prefetch = 0 : i64, scratch_operands = 2 : i64, tpu.core_type = #tpu.core_type<tc>, window_params = [{transform_indices = @transform_0, window_bounds = array<i64: 32, 128>}, {pipeline_mode = #tpu.pipeline_mode<synchronous>, transform_indices = @transform_1, window_bounds = array<i64: 1, 128>}, {pipeline_mode = #tpu.pipeline_mode<synchronous>, transform_indices = @transform_2, window_bounds = array<i64: 1, 128>}, {transform_indices = @transform_3, window_bounds = array<i64: 128, 512>}, {transform_indices = @transform_4, window_bounds = array<i64: 1, 512>}, {transform_indices = @transform_5, window_bounds = array<i64: 512, 128>}, {pipeline_mode = #tpu.pipeline_mode<synchronous>, transform_indices = @transform_6, window_bounds = array<i64: 1, 128>}, {transform_indices = @transform_7, window_bounds = array<i64: 32, 128>}]} {
    %c0_i32 = arith.constant 0 : i32
    %0 = arith.cmpi eq, %arg1, %c0_i32 : i32
    %1 = arith.extui %0 : i1 to i32
    %c0_i32_0 = arith.constant 0 : i32
    %2 = arith.cmpi ne, %1, %c0_i32_0 : i32
    scf.if %2 {
      %c0_19 = arith.constant 0 : index
      %c0_20 = arith.constant 0 : index
      %31 = vector.load %arg2[%c0_19, %c0_20] : memref<32x128xbf16, #tpu.memory_space<vmem>>, vector<32x128xbf16>
      %32 = arith.extf %31 : vector<32x128xbf16> to vector<32x128xf32>
      %c0_21 = arith.constant 0 : index
      %c0_22 = arith.constant 0 : index
      %33 = vector.load %arg3[%c0_21, %c0_22] : memref<1x128xf32, #tpu.memory_space<vmem>>, vector<1x128xf32>
      %c0_23 = arith.constant 0 : index
      %c0_24 = arith.constant 0 : index
      %34 = vector.load %arg4[%c0_23, %c0_24] : memref<1x128xf32, #tpu.memory_space<vmem>>, vector<1x128xf32>
      %cst_25 = arith.constant dense<0.000000e+00> : vector<32xf32>
      %35 = vector.multi_reduction <add>, %32, %cst_25 [1] : vector<32x128xf32> to vector<32xf32>
      %36 = vector.shape_cast %35 : vector<32xf32> to vector<32x1xf32>
      %cst_26 = arith.constant 1.280000e+02 : f32
      %37 = vector.broadcast %cst_26 : f32 to vector<32x1xf32>
      %38 = arith.divf %36, %37 : vector<32x1xf32>
      %39 = vector.broadcast %38 : vector<32x1xf32> to vector<32x128xf32>
      %40 = arith.subf %32, %39 : vector<32x128xf32>
      %41 = arith.mulf %40, %40 : vector<32x128xf32>
      %cst_27 = arith.constant dense<0.000000e+00> : vector<32xf32>
      %42 = vector.multi_reduction <add>, %41, %cst_27 [1] : vector<32x128xf32> to vector<32xf32>
      %43 = vector.shape_cast %42 : vector<32xf32> to vector<32x1xf32>
      %cst_28 = arith.constant 1.280000e+02 : f32
      %44 = vector.broadcast %cst_28 : f32 to vector<32x1xf32>
      %45 = arith.divf %43, %44 : vector<32x1xf32>
      %cst_29 = arith.constant 9.99999974E-6 : f32
      %46 = vector.broadcast %cst_29 : f32 to vector<32x1xf32>
      %47 = arith.addf %45, %46 : vector<32x1xf32>
      %48 = math.rsqrt %47 : vector<32x1xf32>
      %49 = vector.broadcast %48 : vector<32x1xf32> to vector<32x128xf32>
      %50 = arith.mulf %40, %49 : vector<32x128xf32>
      %51 = vector.broadcast %33 : vector<1x128xf32> to vector<32x128xf32>
      %52 = arith.mulf %50, %51 : vector<32x128xf32>
      %53 = vector.broadcast %34 : vector<1x128xf32> to vector<32x128xf32>
      %54 = arith.addf %52, %53 : vector<32x128xf32>
      %55 = arith.truncf %54 : vector<32x128xf32> to vector<32x128xbf16>
      %c0_30 = arith.constant 0 : index
      %c0_31 = arith.constant 0 : index
      %56 = vector.load %arg10[%c0_30, %c0_31] : memref<32x128xbf16, #tpu.memory_space<vmem>>, vector<32x128xbf16>
      tpu.vector_store %arg10[%c0_30, %c0_31], %55 {strides = array<i32>} : memref<32x128xbf16, #tpu.memory_space<vmem>>, vector<32x128xbf16>,
      %c0_32 = arith.constant 0 : index
      %c0_33 = arith.constant 0 : index
      %57 = vector.load %arg11[%c0_32, %c0_33] : memref<32x128xf32, #tpu.memory_space<vmem>>, vector<32x128xf32>
      tpu.vector_store %arg11[%c0_32, %c0_33], %32 {strides = array<i32>} : memref<32x128xf32, #tpu.memory_space<vmem>>, vector<32x128xf32>,
    } else {
    }
    %c0 = arith.constant 0 : index
    %c0_1 = arith.constant 0 : index
    %3 = vector.load %arg10[%c0, %c0_1] : memref<32x128xbf16, #tpu.memory_space<vmem>>, vector<32x128xbf16>
    %c0_2 = arith.constant 0 : index
    %c0_3 = arith.constant 0 : index
    %4 = vector.load %arg5[%c0_2, %c0_3] : memref<128x512xbf16, #tpu.memory_space<vmem>>, vector<128x512xbf16>
    %cst = arith.constant dense<0.000000e+00> : vector<32x512xf32>
    %5 = tpu.matmul %3, %4, %cst {dimension_numbers = #tpu.dot_dimension_numbers<[1], [0], [0], [1], [0, 0, 1, 1], [], []>} : vector<32x128xbf16>, vector<128x512xbf16>, vector<32x512xf32> -> vector<32x512xf32>
    %c0_4 = arith.constant 0 : index
    %c0_5 = arith.constant 0 : index
    %6 = vector.load %arg6[%c0_4, %c0_5] : memref<1x512xf32, #tpu.memory_space<vmem>>, vector<1x512xf32>
    %7 = vector.broadcast %6 : vector<1x512xf32> to vector<32x512xf32>
    %8 = arith.addf %5, %7 : vector<32x512xf32>
    %9 = arith.mulf %8, %8 : vector<32x512xf32>
    %10 = arith.mulf %8, %9 : vector<32x512xf32>
    %cst_6 = arith.constant 4.471500e-02 : f32
    %11 = vector.broadcast %cst_6 : f32 to vector<32x512xf32>
    %12 = arith.mulf %11, %10 : vector<32x512xf32>
    %13 = arith.addf %8, %12 : vector<32x512xf32>
    %cst_7 = arith.constant 0.797884583 : f32
    %14 = vector.broadcast %cst_7 : f32 to vector<32x512xf32>
    %15 = arith.mulf %14, %13 : vector<32x512xf32>
    %16 = math.tanh %15 : vector<32x512xf32>
    %cst_8 = arith.constant 1.000000e+00 : f32
    %17 = vector.broadcast %cst_8 : f32 to vector<32x512xf32>
    %18 = arith.addf %17, %16 : vector<32x512xf32>
    %cst_9 = arith.constant 5.000000e-01 : f32
    %19 = vector.broadcast %cst_9 : f32 to vector<32x512xf32>
    %20 = arith.mulf %19, %18 : vector<32x512xf32>
    %21 = arith.mulf %8, %20 : vector<32x512xf32>
    %c0_10 = arith.constant 0 : index
    %c0_11 = arith.constant 0 : index
    %22 = vector.load %arg11[%c0_10, %c0_11] : memref<32x128xf32, #tpu.memory_space<vmem>>, vector<32x128xf32>
    %23 = arith.truncf %21 : vector<32x512xf32> to vector<32x512xbf16>
    %c0_12 = arith.constant 0 : index
    %c0_13 = arith.constant 0 : index
    %24 = vector.load %arg7[%c0_12, %c0_13] : memref<512x128xbf16, #tpu.memory_space<vmem>>, vector<512x128xbf16>
    %cst_14 = arith.constant dense<0.000000e+00> : vector<32x128xf32>
    %25 = tpu.matmul %23, %24, %cst_14 {dimension_numbers = #tpu.dot_dimension_numbers<[1], [0], [0], [1], [0, 0, 1, 1], [], []>} : vector<32x512xbf16>, vector<512x128xbf16>, vector<32x128xf32> -> vector<32x128xf32>
    %26 = arith.addf %22, %25 : vector<32x128xf32>
    %c0_15 = arith.constant 0 : index
    %c0_16 = arith.constant 0 : index
    %27 = vector.load %arg11[%c0_15, %c0_16] : memref<32x128xf32, #tpu.memory_space<vmem>>, vector<32x128xf32>
    tpu.vector_store %arg11[%c0_15, %c0_16], %26 {strides = array<i32>} : memref<32x128xf32, #tpu.memory_space<vmem>>, vector<32x128xf32>,
    %c0_i32_17 = arith.constant 0 : i32
    %28 = arith.cmpi eq, %arg1, %c0_i32_17 : i32
    %29 = arith.extui %28 : i1 to i32
    %c0_i32_18 = arith.constant 0 : i32
    %30 = arith.cmpi ne, %29, %c0_i32_18 : i32
    scf.if %30 {
      %c0_19 = arith.constant 0 : index
      %c0_20 = arith.constant 0 : index
      %31 = vector.load %arg11[%c0_19, %c0_20] : memref<32x128xf32, #tpu.memory_space<vmem>>, vector<32x128xf32>
      %c0_21 = arith.constant 0 : index
      %c0_22 = arith.constant 0 : index
      %32 = vector.load %arg8[%c0_21, %c0_22] : memref<1x128xf32, #tpu.memory_space<vmem>>, vector<1x128xf32>
      %33 = vector.broadcast %32 : vector<1x128xf32> to vector<32x128xf32>
      %34 = arith.addf %31, %33 : vector<32x128xf32>
      %35 = arith.truncf %34 : vector<32x128xf32> to vector<32x128xbf16>
      %c0_23 = arith.constant 0 : index
      %c0_24 = arith.constant 0 : index
      %36 = vector.load %arg9[%c0_23, %c0_24] : memref<32x128xbf16, #tpu.memory_space<vmem>>, vector<32x128xbf16>
      tpu.vector_store %arg9[%c0_23, %c0_24], %35 {strides = array<i32>} : memref<32x128xbf16, #tpu.memory_space<vmem>>, vector<32x128xbf16>,
    } else {
    }
    return
  }
  func.func @transform_0(%arg0: i32, %arg1: i32) -> (i32, i32) {
    %c0_i32 = arith.constant 0 : i32
    %c0_i32_0 = arith.constant 0 : i32
    return %arg0, %c0_i32 : i32, i32
  }
  func.func @transform_1(%arg0: i32, %arg1: i32) -> (i32, i32) {
    %c0_i32 = arith.constant 0 : i32
    %c0_i32_0 = arith.constant 0 : i32
    %c0_i32_1 = arith.constant 0 : i32
    return %c0_i32, %c0_i32_0 : i32, i32
  }
  func.func @transform_2(%arg0: i32, %arg1: i32) -> (i32, i32) {
    %c0_i32 = arith.constant 0 : i32
    %c0_i32_0 = arith.constant 0 : i32
    %c0_i32_1 = arith.constant 0 : i32
    return %c0_i32, %c0_i32_0 : i32, i32
  }
  func.func @transform_3(%arg0: i32, %arg1: i32) -> (i32, i32) {
    %c0_i32 = arith.constant 0 : i32
    %c0_i32_0 = arith.constant 0 : i32
    return %c0_i32, %arg1 : i32, i32
  }
  func.func @transform_4(%arg0: i32, %arg1: i32) -> (i32, i32) {
    %c0_i32 = arith.constant 0 : i32
    %c0_i32_0 = arith.constant 0 : i32
    return %c0_i32, %arg1 : i32, i32
  }
  func.func @transform_5(%arg0: i32, %arg1: i32) -> (i32, i32) {
    %c0_i32 = arith.constant 0 : i32
    %c0_i32_0 = arith.constant 0 : i32
    return %arg1, %c0_i32 : i32, i32
  }
  func.func @transform_6(%arg0: i32, %arg1: i32) -> (i32, i32) {
    %c0_i32 = arith.constant 0 : i32
    %c0_i32_0 = arith.constant 0 : i32
    %c0_i32_1 = arith.constant 0 : i32
    return %c0_i32, %c0_i32_0 : i32, i32
  }
  func.func @transform_7(%arg0: i32, %arg1: i32) -> (i32, i32) {
    %c0_i32 = arith.constant 0 : i32
    %c0_i32_0 = arith.constant 0 : i32
    return %arg0, %c0_i32 : i32, i32
  }
}

module attributes {stable_mosaic.version = 11 : i64} {
  func.func @final_proj_kernel(%arg0: i32, %arg1: i32, %arg2: memref<32x128xbf16, #tpu.memory_space<vmem>>, %arg3: memref<1x128xf32, #tpu.memory_space<vmem>>, %arg4: memref<1x128xf32, #tpu.memory_space<vmem>>, %arg5: memref<128x256xbf16, #tpu.memory_space<vmem>>, %arg6: memref<32x256xf32, #tpu.memory_space<vmem>>, %arg7: memref<32x128xbf16, #tpu.memory_space<vmem>>) attributes {dimension_semantics = [#tpu.dimension_semantics<parallel>, #tpu.dimension_semantics<arbitrary>], iteration_bounds = array<i64: 1, 1>, scalar_prefetch = 0 : i64, scratch_operands = 1 : i64, tpu.core_type = #tpu.core_type<tc>, window_params = [{transform_indices = @transform_0, window_bounds = array<i64: 32, 128>}, {pipeline_mode = #tpu.pipeline_mode<synchronous>, transform_indices = @transform_1, window_bounds = array<i64: 1, 128>}, {pipeline_mode = #tpu.pipeline_mode<synchronous>, transform_indices = @transform_2, window_bounds = array<i64: 1, 128>}, {transform_indices = @transform_3, window_bounds = array<i64: 128, 256>}, {transform_indices = @transform_4, window_bounds = array<i64: 32, 256>}]} {
    %c0_i32 = arith.constant 0 : i32
    %0 = arith.cmpi eq, %arg1, %c0_i32 : i32
    %1 = arith.extui %0 : i1 to i32
    %c0_i32_0 = arith.constant 0 : i32
    %2 = arith.cmpi ne, %1, %c0_i32_0 : i32
    scf.if %2 {
      %c0_6 = arith.constant 0 : index
      %c0_7 = arith.constant 0 : index
      %7 = vector.load %arg2[%c0_6, %c0_7] : memref<32x128xbf16, #tpu.memory_space<vmem>>, vector<32x128xbf16>
      %8 = arith.extf %7 : vector<32x128xbf16> to vector<32x128xf32>
      %c0_8 = arith.constant 0 : index
      %c0_9 = arith.constant 0 : index
      %9 = vector.load %arg3[%c0_8, %c0_9] : memref<1x128xf32, #tpu.memory_space<vmem>>, vector<1x128xf32>
      %c0_10 = arith.constant 0 : index
      %c0_11 = arith.constant 0 : index
      %10 = vector.load %arg4[%c0_10, %c0_11] : memref<1x128xf32, #tpu.memory_space<vmem>>, vector<1x128xf32>
      %cst_12 = arith.constant dense<0.000000e+00> : vector<32xf32>
      %11 = vector.multi_reduction <add>, %8, %cst_12 [1] : vector<32x128xf32> to vector<32xf32>
      %12 = vector.shape_cast %11 : vector<32xf32> to vector<32x1xf32>
      %cst_13 = arith.constant 1.280000e+02 : f32
      %13 = vector.broadcast %cst_13 : f32 to vector<32x1xf32>
      %14 = arith.divf %12, %13 : vector<32x1xf32>
      %15 = vector.broadcast %14 : vector<32x1xf32> to vector<32x128xf32>
      %16 = arith.subf %8, %15 : vector<32x128xf32>
      %17 = arith.mulf %16, %16 : vector<32x128xf32>
      %cst_14 = arith.constant dense<0.000000e+00> : vector<32xf32>
      %18 = vector.multi_reduction <add>, %17, %cst_14 [1] : vector<32x128xf32> to vector<32xf32>
      %19 = vector.shape_cast %18 : vector<32xf32> to vector<32x1xf32>
      %cst_15 = arith.constant 1.280000e+02 : f32
      %20 = vector.broadcast %cst_15 : f32 to vector<32x1xf32>
      %21 = arith.divf %19, %20 : vector<32x1xf32>
      %cst_16 = arith.constant 9.99999974E-6 : f32
      %22 = vector.broadcast %cst_16 : f32 to vector<32x1xf32>
      %23 = arith.addf %21, %22 : vector<32x1xf32>
      %24 = math.rsqrt %23 : vector<32x1xf32>
      %25 = vector.broadcast %24 : vector<32x1xf32> to vector<32x128xf32>
      %26 = arith.mulf %16, %25 : vector<32x128xf32>
      %27 = vector.broadcast %9 : vector<1x128xf32> to vector<32x128xf32>
      %28 = arith.mulf %26, %27 : vector<32x128xf32>
      %29 = vector.broadcast %10 : vector<1x128xf32> to vector<32x128xf32>
      %30 = arith.addf %28, %29 : vector<32x128xf32>
      %31 = arith.truncf %30 : vector<32x128xf32> to vector<32x128xbf16>
      %c0_17 = arith.constant 0 : index
      %c0_18 = arith.constant 0 : index
      %32 = vector.load %arg7[%c0_17, %c0_18] : memref<32x128xbf16, #tpu.memory_space<vmem>>, vector<32x128xbf16>
      tpu.vector_store %arg7[%c0_17, %c0_18], %31 {strides = array<i32>} : memref<32x128xbf16, #tpu.memory_space<vmem>>, vector<32x128xbf16>,
    } else {
    }
    %c0 = arith.constant 0 : index
    %c0_1 = arith.constant 0 : index
    %3 = vector.load %arg7[%c0, %c0_1] : memref<32x128xbf16, #tpu.memory_space<vmem>>, vector<32x128xbf16>
    %c0_2 = arith.constant 0 : index
    %c0_3 = arith.constant 0 : index
    %4 = vector.load %arg5[%c0_2, %c0_3] : memref<128x256xbf16, #tpu.memory_space<vmem>>, vector<128x256xbf16>
    %cst = arith.constant dense<0.000000e+00> : vector<32x256xf32>
    %5 = tpu.matmul %3, %4, %cst {dimension_numbers = #tpu.dot_dimension_numbers<[1], [0], [0], [1], [0, 0, 1, 1], [], []>} : vector<32x128xbf16>, vector<128x256xbf16>, vector<32x256xf32> -> vector<32x256xf32>
    %c0_4 = arith.constant 0 : index
    %c0_5 = arith.constant 0 : index
    %6 = vector.load %arg6[%c0_4, %c0_5] : memref<32x256xf32, #tpu.memory_space<vmem>>, vector<32x256xf32>
    tpu.vector_store %arg6[%c0_4, %c0_5], %5 {strides = array<i32>} : memref<32x256xf32, #tpu.memory_space<vmem>>, vector<32x256xf32>,
    return
  }
  func.func @transform_0(%arg0: i32, %arg1: i32) -> (i32, i32) {
    %c0_i32 = arith.constant 0 : i32
    %c0_i32_0 = arith.constant 0 : i32
    return %arg0, %c0_i32 : i32, i32
  }
  func.func @transform_1(%arg0: i32, %arg1: i32) -> (i32, i32) {
    %c0_i32 = arith.constant 0 : i32
    %c0_i32_0 = arith.constant 0 : i32
    %c0_i32_1 = arith.constant 0 : i32
    return %c0_i32, %c0_i32_0 : i32, i32
  }
  func.func @transform_2(%arg0: i32, %arg1: i32) -> (i32, i32) {
    %c0_i32 = arith.constant 0 : i32
    %c0_i32_0 = arith.constant 0 : i32
    %c0_i32_1 = arith.constant 0 : i32
    return %c0_i32, %c0_i32_0 : i32, i32
  }
  func.func @transform_3(%arg0: i32, %arg1: i32) -> (i32, i32) {
    %c0_i32 = arith.constant 0 : i32
    %c0_i32_0 = arith.constant 0 : i32
    return %c0_i32, %arg1 : i32, i32
  }
  func.func @transform_4(%arg0: i32, %arg1: i32) -> (i32, i32) {
    %c0_i32 = arith.constant 0 : i32
    return %arg0, %arg1 : i32, i32
  }
}

</mosaic_0001>

<llo_original>
// kernel: lairgpt_forward.6
$region0: #{lairgpt_forward.6}
  #allocation0 [shape = 'u32[]', space=smem, size = 0x4, offset = 0x4, fixed_abs, tag = 'smem constant byte address 0x4 - core index']
  #allocation1 [shape = 'u32[144,128]{1,0:T(1,128)}', space=vmem, size = 0x12000, scoped, tag = 'internal scratch']
  #allocation2 [shape = 'bf16[32,128]{1,0:T(16,128)(2,1)}', space=vmem, size = 0x2000, scoped, tag = 'scratch operand']
  #allocation3 [shape = 'f32[32,128]{1,0:T(8,128)}', space=vmem, size = 0x4000, scoped, tag = 'scratch operand']
  %s0 = inlined_call_operand.vmem [shape: bf16[32,128], index: 0, kind: input, shape index: {}, may-alias: {0,7}]
  %s1 = inlined_call_operand.vmem [shape: f32[1,128], index: 1, kind: input, shape index: {}]
  %s2 = inlined_call_operand.vmem [shape: f32[1,128], index: 2, kind: input, shape index: {}]
  %s3 = inlined_call_operand.vmem [shape: bf16[128,512], index: 3, kind: input, shape index: {}]
  %s4 = inlined_call_operand.vmem [shape: f32[1,512], index: 4, kind: input, shape index: {}]
  %s5 = inlined_call_operand.vmem [shape: bf16[512,128], index: 5, kind: input, shape index: {}]
  %s6 = inlined_call_operand.hbm [shape: f32[1,128], index: 6, kind: input, shape index: {}]
  %s7 = inlined_call_operand.vmem [shape: bf16[32,128], index: 7, kind: output, shape index: {}, may-alias: {0,7}]
  %s8 = sld [smem:[#allocation0]]
  $region50: #{lairgpt_forward.6} parent=0
    _
  %s10 = ssub.s32 1, %s8
  %s11 = scalar_select 0, %s10, %s8
  $region1: #{lairgpt_forward.6} parent=0
    #allocation4 [shape = 'u8[512]{0}', space=vmem, size = 0x400, scoped, tag = 'input window, operand 6, single buffered']
    #allocation5 [shape = 's32[1]{0}', space=sflag, size = 0x4, scoped, tag = 'scoped memory for lairgpt_forward.6']
    %12 = vsyncpa [#allocation5], 0
    // Predicated region
    $region2: #{lairgpt_forward.6} parent=1 // pred_check
      _
    $region3: #{lairgpt_forward.6} parent=1 // pred_check_branch
      %14 = sbr.rel (0) target = $region5
    $region4: #{lairgpt_forward.6} parent=1 // pred_region
      _
    $region5: #{lairgpt_forward.6} parent=1 // pred_fallthru
      _
    // Predicated region
    $region6: #{lairgpt_forward.6} parent=1 // pred_check
      _
    $region7: #{lairgpt_forward.6} parent=1 // pred_check_branch
      %16 = sbr.rel (0) target = $region9
    $region8: #{lairgpt_forward.6} parent=1 // pred_region
      _
    $region9: #{lairgpt_forward.6} parent=1 // pred_fallthru
      _
    // Predicated region
    $region10: #{lairgpt_forward.6} parent=1 // pred_check
      _
    $region11: #{lairgpt_forward.6} parent=1 // pred_check_branch
      %18 = sbr.rel (0) target = $region13
    $region12: #{lairgpt_forward.6} parent=1 // pred_region
      _
    $region13: #{lairgpt_forward.6} parent=1 // pred_fallthru
      _
    // Predicated region
    $region14: #{lairgpt_forward.6} parent=1 // pred_check
      _
    $region15: #{lairgpt_forward.6} parent=1 // pred_check_branch
      %20 = sbr.rel (0) target = $region17
    $region16: #{lairgpt_forward.6} parent=1 // pred_region
      _
    $region17: #{lairgpt_forward.6} parent=1 // pred_fallthru
      _
    // Predicated region
    $region18: #{lairgpt_forward.6} parent=1 // pred_check
      _
    $region19: #{lairgpt_forward.6} parent=1 // pred_check_branch
      %22 = sbr.rel (0) target = $region21
    $region20: #{lairgpt_forward.6} parent=1 // pred_region
      _
    $region21: #{lairgpt_forward.6} parent=1 // pred_fallthru
      _
    // Predicated region
    $region22: #{lairgpt_forward.6} parent=1 // pred_check
      _
    $region23: #{lairgpt_forward.6} parent=1 // pred_check_branch
      %24 = sbr.rel (0) target = $region25
    $region24: #{lairgpt_forward.6} parent=1 // pred_region
      _
    $region25: #{lairgpt_forward.6} parent=1 // pred_fallthru
      _
    // Predicated region
    $region26: #{lairgpt_forward.6} parent=1 // pred_check
      _
    $region27: #{lairgpt_forward.6} parent=1 // pred_check_branch
      %26 = sbr.rel (0) target = $region29
    $region28: #{lairgpt_forward.6} parent=1 // pred_region
      %s28 = ssub.s32 16, 16
      %29 = vsyncadd [#allocation5], %s28
      %s31 = sshll.u32 [#allocation4], 4
      %s32 = int_to_ptr.vmem [resolvable:$true] %s31
      %34 = dma.hbm_to_vmem [thread:$0]  %s6, 16, %s32, [#allocation5]
    $region29: #{lairgpt_forward.6} parent=1 // pred_fallthru
      _
    // Predicated region
    $region30: #{lairgpt_forward.6} parent=1 // pred_check
      _
    $region31: #{lairgpt_forward.6} parent=1 // pred_check_branch
      %36 = sbr.rel (0) target = $region33
    $region32: #{lairgpt_forward.6} parent=1 // pred_region
      %37 = dma.done [#allocation5], 16
    $region33: #{lairgpt_forward.6} parent=1 // pred_fallthru
      _
    %p39 = scmp.eq.s32.totalorder 0, 0
    // Predicated region
    $region34: #{lairgpt_forward.6} parent=1 // pred_check
      %p40 = pneg %p39
    $region35: #{lairgpt_forward.6} parent=1 // pred_check_branch
      %42 = sbr.rel (%p40) target = $region37
    $region36: #{lairgpt_forward.6} parent=1 // pred_region
      %v43 = vld [vmem:[%s0] sm:$0xf]
      %v44 = vld [vmem:[%s0 + $0x4] sm:$0xf]
      %v45 = vld [vmem:[%s0 + $0x8] sm:$0xf]
      %v46 = vld [vmem:[%s0 + $0xc] sm:$0xf]
      %v47 = vunpack.c.l.bf16 %v43
      %v48 = vunpack.c.l.bf16 %v44
      %v49 = vunpack.c.l.bf16 %v45
      %v50 = vunpack.c.l.bf16 %v46
      %v51 = vld [vmem:[%s1] sm:$0x1]
      %v52 = vld [vmem:[%s2] sm:$0x1]
      %53 = vadd.xlane.f32.xlu0 %v47
      %v54 = vpop.xlane.xlu0 %53
      %55 = vadd.xlane.f32.xlu0 %v48
      %v56 = vpop.xlane.xlu0 %55
      %57 = vadd.xlane.f32.xlu0 %v49
      %v58 = vpop.xlane.xlu0 %57
      %59 = vadd.xlane.f32.xlu0 %v50
      %v60 = vpop.xlane.xlu0 %59
      %v61 = vrcp.pop 128.0
      %v62 = vmul.f32 %v54, %v61
      %v63 = vmul.f32 %v56, %v61
      %v64 = vmul.f32 %v58, %v61
      %v65 = vmul.f32 %v60, %v61
      %v66 = vsub.f32 %v47, %v62
      %v67 = vsub.f32 %v48, %v63
      %v68 = vsub.f32 %v49, %v64
      %v69 = vsub.f32 %v50, %v65
      %v70 = vmul.f32 %v66, %v66
      %v71 = vmul.f32 %v67, %v67
      %v72 = vmul.f32 %v68, %v68
      %v73 = vmul.f32 %v69, %v69
      %74 = vadd.xlane.f32.xlu0 %v70
      %v75 = vpop.xlane.xlu0 %74
      %76 = vadd.xlane.f32.xlu0 %v71
      %v77 = vpop.xlane.xlu0 %76
      %78 = vadd.xlane.f32.xlu0 %v72
      %v79 = vpop.xlane.xlu0 %78
      %80 = vadd.xlane.f32.xlu0 %v73
      %v81 = vpop.xlane.xlu0 %80
      %v82 = vmul.f32 %v75, %v61
      %v83 = vmul.f32 %v77, %v61
      %v84 = vmul.f32 %v79, %v61
      %v85 = vmul.f32 %v81, %v61
      %v86 = vadd.f32 %v82, 1e-05
      %v87 = vadd.f32 %v83, 1e-05
      %v88 = vadd.f32 %v84, 1e-05
      %v89 = vadd.f32 %v85, 1e-05
      %v90 = vrsqrt.pop %v86
      %v91 = vrsqrt.pop %v87
      %v92 = vrsqrt.pop %v88
      %v93 = vrsqrt.pop %v89
      %v94 = vmul.f32 %v66, %v90
      %v95 = vmul.f32 %v67, %v91
      %v96 = vmul.f32 %v68, %v92
      %v97 = vmul.f32 %v69, %v93
      %v99 = vlaneseq
      %v100 = vshrl.u32 %v99, 7
      %v101 = vsub.s32 0, %v100
      %v102 = vrot.slane %v51, %v101
      %v104 = vmul.f32 %v94, %v102
      %v105 = vmul.f32 %v95, %v102
      %v106 = vmul.f32 %v96, %v102
      %v107 = vmul.f32 %v97, %v102
      %v109 = vlaneseq
      %v110 = vshrl.u32 %v109, 7
      %v111 = vsub.s32 0, %v110
      %v112 = vrot.slane %v52, %v111
      %v114 = vadd.f32 %v104, %v112
      %v115 = vadd.f32 %v105, %v112
      %v116 = vadd.f32 %v106, %v112
      %v117 = vadd.f32 %v107, %v112
      %v118 = vpack.c.bf16 %v115, %v114
      %v119 = vpack.c.bf16 %v117, %v116
      %120 = vst [vmem:[#allocation2] sm:$0xff] %v118
      %121 = vst [vmem:[#allocation2 + $0x8] sm:$0xff] %v119
      %122 = vst [vmem:[#allocation3] sm:$0xff] %v47
      %123 = vst [vmem:[#allocation3 + $0x8] sm:$0xff] %v48
      %124 = vst [vmem:[#allocation3 + $0x10] sm:$0xff] %v49
      %125 = vst [vmem:[#allocation3 + $0x18] sm:$0xff] %v50
    $region37: #{lairgpt_forward.6} parent=1 // pred_fallthru
      _
    %v126 = vld [vmem:[#allocation2] sm:$0xff]
    %v127 = vld [vmem:[#allocation2 + $0x8] sm:$0xff]
    %v128 = vld [vmem:[%s3] sm:$0xff]
    %v129 = vld [vmem:[%s3 + $0x8] sm:$0xff]
    %v130 = vld [vmem:[%s3 + $0x10] sm:$0xff]
    %v131 = vld [vmem:[%s3 + $0x18] sm:$0xff]
    %v132 = vld [vmem:[%s3 + $0x20] sm:$0xff]
    %v133 = vld [vmem:[%s3 + $0x28] sm:$0xff]
    %v134 = vld [vmem:[%s3 + $0x30] sm:$0xff]
    %v135 = vld [vmem:[%s3 + $0x38] sm:$0xff]
    %v136 = vld [vmem:[%s3 + $0x40] sm:$0xff]
    %v137 = vld [vmem:[%s3 + $0x48] sm:$0xff]
    %v138 = vld [vmem:[%s3 + $0x50] sm:$0xff]
    %v139 = vld [vmem:[%s3 + $0x58] sm:$0xff]
    %v140 = vld [vmem:[%s3 + $0x60] sm:$0xff]
    %v141 = vld [vmem:[%s3 + $0x68] sm:$0xff]
    %v142 = vld [vmem:[%s3 + $0x70] sm:$0xff]
    %v143 = vld [vmem:[%s3 + $0x78] sm:$0xff]
    %v144 = vld [vmem:[%s3 + $0x80] sm:$0xff]
    %v145 = vld [vmem:[%s3 + $0x88] sm:$0xff]
    %v146 = vld [vmem:[%s3 + $0x90] sm:$0xff]
    %v147 = vld [vmem:[%s3 + $0x98] sm:$0xff]
    %v148 = vld [vmem:[%s3 + $0xa0] sm:$0xff]
    %v149 = vld [vmem:[%s3 + $0xa8] sm:$0xff]
    %v150 = vld [vmem:[%s3 + $0xb0] sm:$0xff]
    %v151 = vld [vmem:[%s3 + $0xb8] sm:$0xff]
    %v152 = vld [vmem:[%s3 + $0xc0] sm:$0xff]
    %v153 = vld [vmem:[%s3 + $0xc8] sm:$0xff]
    %v154 = vld [vmem:[%s3 + $0xd0] sm:$0xff]
    %v155 = vld [vmem:[%s3 + $0xd8] sm:$0xff]
    %v156 = vld [vmem:[%s3 + $0xe0] sm:$0xff]
    %v157 = vld [vmem:[%s3 + $0xe8] sm:$0xff]
    %v158 = vld [vmem:[%s3 + $0xf0] sm:$0xff]
    %v159 = vld [vmem:[%s3 + $0xf8] sm:$0xff]
    %v160 = vld [vmem:[%s4] sm:$0xf]
    %v162 = vlaneseq
    %v163 = vshrl.u32 %v162, 7
    %v164 = vsub.s32 0, %v163
    %v165 = vrot.slane %v160, %v164
    %v166 = vlaneseq
    %v167 = vshrl.u32 %v166, 7
    %v168 = vsub.s32 1, %v167
    %v169 = vrot.slane %v160, %v168
    %v170 = vlaneseq
    %v171 = vshrl.u32 %v170, 7
    %v172 = vsub.s32 2, %v171
    %v173 = vrot.slane %v160, %v172
    %v174 = vlaneseq
    %v175 = vshrl.u32 %v174, 7
    %v176 = vsub.s32 3, %v175
    %v177 = vrot.slane %v160, %v176
    %v214 = vunpack.c.l.b16 %v128
    %v215 = vunpack.c.h.b16 %v128
    %v216 = vunpack.c.l.b16 %v129
    %v217 = vunpack.c.h.b16 %v129
    %v218 = vunpack.c.l.b16 %v130
    %v219 = vunpack.c.h.b16 %v130
    %v220 = vunpack.c.l.b16 %v131
    %v221 = vunpack.c.h.b16 %v131
    %v222 = vunpack.c.l.b16 %v132
    %v223 = vunpack.c.h.b16 %v132
    %v224 = vunpack.c.l.b16 %v133
    %v225 = vunpack.c.h.b16 %v133
    %v226 = vunpack.c.l.b16 %v134
    %v227 = vunpack.c.h.b16 %v134
    %v228 = vunpack.c.l.b16 %v135
    %v229 = vunpack.c.h.b16 %v135
    %v230 = vunpack.c.l.b16 %v136
    %v231 = vunpack.c.h.b16 %v136
    %v232 = vunpack.c.l.b16 %v137
    %v233 = vunpack.c.h.b16 %v137
    %v234 = vunpack.c.l.b16 %v138
    %v235 = vunpack.c.h.b16 %v138
    %v236 = vunpack.c.l.b16 %v139
    %v237 = vunpack.c.h.b16 %v139
    %v238 = vunpack.c.l.b16 %v140
    %v239 = vunpack.c.h.b16 %v140
    %v240 = vunpack.c.l.b16 %v141
    %v241 = vunpack.c.h.b16 %v141
    %v242 = vunpack.c.l.b16 %v142
    %v243 = vunpack.c.h.b16 %v142
    %v244 = vunpack.c.l.b16 %v143
    %v245 = vunpack.c.h.b16 %v143
    %v246 = vunpack.c.l.b16 %v144
    %v247 = vunpack.c.h.b16 %v144
    %v248 = vunpack.c.l.b16 %v145
    %v249 = vunpack.c.h.b16 %v145
    %v250 = vunpack.c.l.b16 %v146
    %v251 = vunpack.c.h.b16 %v146
    %v252 = vunpack.c.l.b16 %v147
    %v253 = vunpack.c.h.b16 %v147
    %v254 = vunpack.c.l.b16 %v148
    %v255 = vunpack.c.h.b16 %v148
    %v256 = vunpack.c.l.b16 %v149
    %v257 = vunpack.c.h.b16 %v149
    %v258 = vunpack.c.l.b16 %v150
    %v259 = vunpack.c.h.b16 %v150
    %v260 = vunpack.c.l.b16 %v151
    %v261 = vunpack.c.h.b16 %v151
    %v262 = vunpack.c.l.b16 %v152
    %v263 = vunpack.c.h.b16 %v152
    %v264 = vunpack.c.l.b16 %v153
    %v265 = vunpack.c.h.b16 %v153
    %v266 = vunpack.c.l.b16 %v154
    %v267 = vunpack.c.h.b16 %v154
    %v268 = vunpack.c.l.b16 %v155
    %v269 = vunpack.c.h.b16 %v155
    %v270 = vunpack.c.l.b16 %v156
    %v271 = vunpack.c.h.b16 %v156
    %v272 = vunpack.c.l.b16 %v157
    %v273 = vunpack.c.h.b16 %v157
    %v274 = vunpack.c.l.b16 %v158
    %v275 = vunpack.c.h.b16 %v158
    %v276 = vunpack.c.l.b16 %v159
    %v277 = vunpack.c.h.b16 %v159
    %v278 = vpack.c.b16 %v218, %v214
    %v279 = vpack.c.b16 %v219, %v215
    %v280 = vpack.c.b16 %v220, %v216
    %v281 = vpack.c.b16 %v221, %v217
    %v282 = vpack.c.b16 %v226, %v222
    %v283 = vpack.c.b16 %v227, %v223
    %v284 = vpack.c.b16 %v228, %v224
    %v285 = vpack.c.b16 %v229, %v225
    %v286 = vpack.c.b16 %v234, %v230
    %v287 = vpack.c.b16 %v235, %v231
    %v288 = vpack.c.b16 %v236, %v232
    %v289 = vpack.c.b16 %v237, %v233
    %v290 = vpack.c.b16 %v242, %v238
    %v291 = vpack.c.b16 %v243, %v239
    %v292 = vpack.c.b16 %v244, %v240
    %v293 = vpack.c.b16 %v245, %v241
    %v294 = vpack.c.b16 %v250, %v246
    %v295 = vpack.c.b16 %v251, %v247
    %v296 = vpack.c.b16 %v252, %v248
    %v297 = vpack.c.b16 %v253, %v249
    %v298 = vpack.c.b16 %v258, %v254
    %v299 = vpack.c.b16 %v259, %v255
    %v300 = vpack.c.b16 %v260, %v256
    %v301 = vpack.c.b16 %v261, %v257
    %v302 = vpack.c.b16 %v266, %v262
    %v303 = vpack.c.b16 %v267, %v263
    %v304 = vpack.c.b16 %v268, %v264
    %v305 = vpack.c.b16 %v269, %v265
    %v306 = vpack.c.b16 %v274, %v270
    %v307 = vpack.c.b16 %v275, %v271
    %v308 = vpack.c.b16 %v276, %v272
    %v309 = vpack.c.b16 %v277, %v273
    %342 = vmatprep.subr.bf16.mxu0 %v279
    %343 = vmatpush1.bf16.msra.mxu0 %v278
    %344 = vmatprep.subr.bf16.mxu0 %v283
    %345 = vmatpush1.bf16.msra.mxu0 %v282
    %346 = vmatprep.subr.bf16.mxu0 %v287
    %347 = vmatpush1.bf16.msra.mxu0 %v286
    %348 = vmatprep.subr.bf16.mxu0 %v291
    %349 = vmatpush1.bf16.msra.mxu0 %v290
    %350 = vmatprep.subr.bf16.mxu0 %v295
    %351 = vmatpush1.bf16.msra.mxu0 %v294
    %352 = vmatprep.subr.bf16.mxu0 %v299
    %353 = vmatpush1.bf16.msra.mxu0 %v298
    %354 = vmatprep.subr.bf16.mxu0 %v303
    %355 = vmatpush1.bf16.msra.mxu0 %v302
    %356 = vmatprep.subr.bf16.mxu0 %v307
    %357 = vmatpush1.bf16.msra.mxu0 %v306
    %358 = vmatprep.subr.bf16.mxu0 0
    %359 = vmatpush1.bf16.msra.mxu0 0
    %360 = vmatprep.subr.bf16.mxu0 0
    %361 = vmatpush1.bf16.msra.mxu0 0
    %362 = vmatprep.subr.bf16.mxu0 0
    %363 = vmatpush1.bf16.msra.mxu0 0
    %364 = vmatprep.subr.bf16.mxu0 0
    %365 = vmatpush1.bf16.msra.mxu0 0
    %366 = vmatprep.subr.bf16.mxu0 0
    %367 = vmatpush1.bf16.msra.mxu0 0
    %368 = vmatprep.subr.bf16.mxu0 0
    %369 = vmatpush1.bf16.msra.mxu0 0
    %370 = vmatprep.subr.bf16.mxu0 0
    %371 = vmatpush1.bf16.msra.mxu0 0
    %372 = vmatprep.subr.bf16.mxu0 0
    %373 = vmatpush1.bf16.msra.mxu0 0
    %374 = vmatprep.mubr.bf16.mxu0 0
    %375 = vmatmul.mubr.bf16.gmra.mrb[0].mxu0 %v126
    %v376 = vpop.f32.mrb[0].mxu0
    %v377 = vadd.f32 %v165, %v376
    %v378 = vpop.f32.mrb[0].mxu0
    %v379 = vadd.f32 %v169, %v378
    %v380 = vpop.f32.mrb[0].mxu0
    %v381 = vadd.f32 %v165, %v380
    %v382 = vpop.f32.mrb[0].mxu0
    %v383 = vadd.f32 %v169, %v382
    %384 = vmatprep.mubr.bf16.mxu0 0
    %385 = vmatmul.mubr.bf16.gmra.mrb[0].mxu0 %v127
    %v386 = vpop.f32.mrb[0].mxu0
    %v387 = vadd.f32 %v165, %v386
    %v388 = vpop.f32.mrb[0].mxu0
    %v389 = vadd.f32 %v169, %v388
    %v390 = vpop.f32.mrb[0].mxu0
    %v391 = vadd.f32 %v165, %v390
    %v392 = vpop.f32.mrb[0].mxu0
    %v393 = vadd.f32 %v169, %v392
    %394 = vdwg.mxu0
    %395 = vmatprep.subr.bf16.mxu0 %v281
    %396 = vmatpush1.bf16.msra.mxu0 %v280
    %397 = vmatprep.subr.bf16.mxu0 %v285
    %398 = vmatpush1.bf16.msra.mxu0 %v284
    %399 = vmatprep.subr.bf16.mxu0 %v289
    %400 = vmatpush1.bf16.msra.mxu0 %v288
    %401 = vmatprep.subr.bf16.mxu0 %v293
    %402 = vmatpush1.bf16.msra.mxu0 %v292
    %403 = vmatprep.subr.bf16.mxu0 %v297
    %404 = vmatpush1.bf16.msra.mxu0 %v296
    %405 = vmatprep.subr.bf16.mxu0 %v301
    %406 = vmatpush1.bf16.msra.mxu0 %v300
    %407 = vmatprep.subr.bf16.mxu0 %v305
    %408 = vmatpush1.bf16.msra.mxu0 %v304
    %409 = vmatprep.subr.bf16.mxu0 %v309
    %410 = vmatpush1.bf16.msra.mxu0 %v308
    %411 = vmatprep.subr.bf16.mxu0 0
    %412 = vmatpush1.bf16.msra.mxu0 0
    %413 = vmatprep.subr.bf16.mxu0 0
    %414 = vmatpush1.bf16.msra.mxu0 0
    %415 = vmatprep.subr.bf16.mxu0 0
    %416 = vmatpush1.bf16.msra.mxu0 0
    %417 = vmatprep.subr.bf16.mxu0 0
    %418 = vmatpush1.bf16.msra.mxu0 0
    %419 = vmatprep.subr.bf16.mxu0 0
    %420 = vmatpush1.bf16.msra.mxu0 0
    %421 = vmatprep.subr.bf16.mxu0 0
    %422 = vmatpush1.bf16.msra.mxu0 0
    %423 = vmatprep.subr.bf16.mxu0 0
    %424 = vmatpush1.bf16.msra.mxu0 0
    %425 = vmatprep.subr.bf16.mxu0 0
    %426 = vmatpush1.bf16.msra.mxu0 0
    %427 = vmatprep.mubr.bf16.mxu0 0
    %428 = vmatmul.mubr.bf16.gmra.mrb[0].mxu0 %v126
    %v429 = vpop.f32.mrb[0].mxu0
    %v430 = vadd.f32 %v173, %v429
    %v431 = vpop.f32.mrb[0].mxu0
    %v432 = vadd.f32 %v177, %v431
    %v433 = vpop.f32.mrb[0].mxu0
    %v434 = vadd.f32 %v173, %v433
    %v435 = vpop.f32.mrb[0].mxu0
    %v436 = vadd.f32 %v177, %v435
    %437 = vmatprep.mubr.bf16.mxu0 0
    %438 = vmatmul.mubr.bf16.gmra.mrb[0].mxu0 %v127
    %v439 = vpop.f32.mrb[0].mxu0
    %v440 = vadd.f32 %v173, %v439
    %v441 = vpop.f32.mrb[0].mxu0
    %v442 = vadd.f32 %v177, %v441
    %v443 = vpop.f32.mrb[0].mxu0
    %v444 = vadd.f32 %v173, %v443
    %v445 = vpop.f32.mrb[0].mxu0
    %v446 = vadd.f32 %v177, %v445
    %447 = vdwg.mxu0
    %v448 = vmul.f32 %v377, %v377
    %v449 = vmul.f32 %v379, %v379
    %v450 = vmul.f32 %v430, %v430
    %v451 = vmul.f32 %v432, %v432
    %v452 = vmul.f32 %v381, %v381
    %v453 = vmul.f32 %v383, %v383
    %v454 = vmul.f32 %v434, %v434
    %v455 = vmul.f32 %v436, %v436
    %v456 = vmul.f32 %v387, %v387
    %v457 = vmul.f32 %v389, %v389
    %v458 = vmul.f32 %v440, %v440
    %v459 = vmul.f32 %v442, %v442
    %v460 = vmul.f32 %v391, %v391
    %v461 = vmul.f32 %v393, %v393
    %v462 = vmul.f32 %v444, %v444
    %v463 = vmul.f32 %v446, %v446
    %v464 = vmul.f32 %v377, %v448
    %v465 = vmul.f32 %v379, %v449
    %v466 = vmul.f32 %v430, %v450
    %v467 = vmul.f32 %v432, %v451
    %v468 = vmul.f32 %v381, %v452
    %v469 = vmul.f32 %v383, %v453
    %v470 = vmul.f32 %v434, %v454
    %v471 = vmul.f32 %v436, %v455
    %v472 = vmul.f32 %v387, %v456
    %v473 = vmul.f32 %v389, %v457
    %v474 = vmul.f32 %v440, %v458
    %v475 = vmul.f32 %v442, %v459
    %v476 = vmul.f32 %v391, %v460
    %v477 = vmul.f32 %v393, %v461
    %v478 = vmul.f32 %v444, %v462
    %v479 = vmul.f32 %v446, %v463
    %v480 = vmul.f32 %v464, 0.044715
    %v481 = vmul.f32 %v465, 0.044715
    %v482 = vmul.f32 %v466, 0.044715
    %v483 = vmul.f32 %v467, 0.044715
    %v484 = vmul.f32 %v468, 0.044715
    %v485 = vmul.f32 %v469, 0.044715
    %v486 = vmul.f32 %v470, 0.044715
    %v487 = vmul.f32 %v471, 0.044715
    %v488 = vmul.f32 %v472, 0.044715
    %v489 = vmul.f32 %v473, 0.044715
    %v490 = vmul.f32 %v474, 0.044715
    %v491 = vmul.f32 %v475, 0.044715
    %v492 = vmul.f32 %v476, 0.044715
    %v493 = vmul.f32 %v477, 0.044715
    %v494 = vmul.f32 %v478, 0.044715
    %v495 = vmul.f32 %v479, 0.044715
    %v496 = vadd.f32 %v377, %v480
    %v497 = vadd.f32 %v379, %v481
    %v498 = vadd.f32 %v430, %v482
    %v499 = vadd.f32 %v432, %v483
    %v500 = vadd.f32 %v381, %v484
    %v501 = vadd.f32 %v383, %v485
    %v502 = vadd.f32 %v434, %v486
    %v503 = vadd.f32 %v436, %v487
    %v504 = vadd.f32 %v387, %v488
    %v505 = vadd.f32 %v389, %v489
    %v506 = vadd.f32 %v440, %v490
    %v507 = vadd.f32 %v442, %v491
    %v508 = vadd.f32 %v391, %v492
    %v509 = vadd.f32 %v393, %v493
    %v510 = vadd.f32 %v444, %v494
    %v511 = vadd.f32 %v446, %v495
    %v512 = vmul.f32 %v496, 0.7978846
    %v513 = vmul.f32 %v497, 0.7978846
    %v514 = vmul.f32 %v498, 0.7978846
    %v515 = vmul.f32 %v499, 0.7978846
    %v516 = vmul.f32 %v500, 0.7978846
    %v517 = vmul.f32 %v501, 0.7978846
    %v518 = vmul.f32 %v502, 0.7978846
    %v519 = vmul.f32 %v503, 0.7978846
    %v520 = vmul.f32 %v504, 0.7978846
    %v521 = vmul.f32 %v505, 0.7978846
    %v522 = vmul.f32 %v506, 0.7978846
    %v523 = vmul.f32 %v507, 0.7978846
    %v524 = vmul.f32 %v508, 0.7978846
    %v525 = vmul.f32 %v509, 0.7978846
    %v526 = vmul.f32 %v510, 0.7978846
    %v527 = vmul.f32 %v511, 0.7978846
    %v528 = vtanh.pop %v512
    %v529 = vtanh.pop %v513
    %v530 = vtanh.pop %v514
    %v531 = vtanh.pop %v515
    %v532 = vtanh.pop %v516
    %v533 = vtanh.pop %v517
    %v534 = vtanh.pop %v518
    %v535 = vtanh.pop %v519
    %v536 = vtanh.pop %v520
    %v537 = vtanh.pop %v521
    %v538 = vtanh.pop %v522
    %v539 = vtanh.pop %v523
    %v540 = vtanh.pop %v524
    %v541 = vtanh.pop %v525
    %v542 = vtanh.pop %v526
    %v543 = vtanh.pop %v527
    %v544 = vadd.f32 %v528, 1.0
    %v545 = vadd.f32 %v529, 1.0
    %v546 = vadd.f32 %v530, 1.0
    %v547 = vadd.f32 %v531, 1.0
    %v548 = vadd.f32 %v532, 1.0
    %v549 = vadd.f32 %v533, 1.0
    %v550 = vadd.f32 %v534, 1.0
    %v551 = vadd.f32 %v535, 1.0
    %v552 = vadd.f32 %v536, 1.0
    %v553 = vadd.f32 %v537, 1.0
    %v554 = vadd.f32 %v538, 1.0
    %v555 = vadd.f32 %v539, 1.0
    %v556 = vadd.f32 %v540, 1.0
    %v557 = vadd.f32 %v541, 1.0
    %v558 = vadd.f32 %v542, 1.0
    %v559 = vadd.f32 %v543, 1.0
    %v560 = vmul.f32 %v544, 0.5
    %v561 = vmul.f32 %v545, 0.5
    %v562 = vmul.f32 %v546, 0.5
    %v563 = vmul.f32 %v547, 0.5
    %v564 = vmul.f32 %v548, 0.5
    %v565 = vmul.f32 %v549, 0.5
    %v566 = vmul.f32 %v550, 0.5
    %v567 = vmul.f32 %v551, 0.5
    %v568 = vmul.f32 %v552, 0.5
    %v569 = vmul.f32 %v553, 0.5
    %v570 = vmul.f32 %v554, 0.5
    %v571 = vmul.f32 %v555, 0.5
    %v572 = vmul.f32 %v556, 0.5
    %v573 = vmul.f32 %v557, 0.5
    %v574 = vmul.f32 %v558, 0.5
    %v575 = vmul.f32 %v559, 0.5
    %v576 = vmul.f32 %v377, %v560
    %v577 = vmul.f32 %v379, %v561
    %v578 = vmul.f32 %v430, %v562
    %v579 = vmul.f32 %v432, %v563
    %v580 = vmul.f32 %v381, %v564
    %v581 = vmul.f32 %v383, %v565
    %v582 = vmul.f32 %v434, %v566
    %v583 = vmul.f32 %v436, %v567
    %v584 = vmul.f32 %v387, %v568
    %v585 = vmul.f32 %v389, %v569
    %v586 = vmul.f32 %v440, %v570
    %v587 = vmul.f32 %v442, %v571
    %v588 = vmul.f32 %v391, %v572
    %v589 = vmul.f32 %v393, %v573
    %v590 = vmul.f32 %v444, %v574
    %v591 = vmul.f32 %v446, %v575
    %v592 = vld [vmem:[#allocation3] sm:$0xff]
    %v593 = vld [vmem:[#allocation3 + $0x8] sm:$0xff]
    %v594 = vld [vmem:[#allocation3 + $0x10] sm:$0xff]
    %v595 = vld [vmem:[#allocation3 + $0x18] sm:$0xff]
    %v596 = vpack.c.bf16 %v580, %v576
    %v597 = vpack.c.bf16 %v581, %v577
    %v598 = vpack.c.bf16 %v582, %v578
    %v599 = vpack.c.bf16 %v583, %v579
    %v600 = vpack.c.bf16 %v588, %v584
    %v601 = vpack.c.bf16 %v589, %v585
    %v602 = vpack.c.bf16 %v590, %v586
    %v603 = vpack.c.bf16 %v591, %v587
    %v604 = vld [vmem:[%s5] sm:$0xf]
    %v605 = vld [vmem:[%s5 + $0x4] sm:$0xf]
    %v606 = vld [vmem:[%s5 + $0x8] sm:$0xf]
    %v607 = vld [vmem:[%s5 + $0xc] sm:$0xf]
    %v608 = vld [vmem:[%s5 + $0x10] sm:$0xf]
    %v609 = vld [vmem:[%s5 + $0x14] sm:$0xf]
    %v610 = vld [vmem:[%s5 + $0x18] sm:$0xf]
    %v611 = vld [vmem:[%s5 + $0x1c] sm:$0xf]
    %v612 = vld [vmem:[%s5 + $0x20] sm:$0xf]
    %v613 = vld [vmem:[%s5 + $0x24] sm:$0xf]
    %v614 = vld [vmem:[%s5 + $0x28] sm:$0xf]
    %v615 = vld [vmem:[%s5 + $0x2c] sm:$0xf]
    %v616 = vld [vmem:[%s5 + $0x30] sm:$0xf]
    %v617 = vld [vmem:[%s5 + $0x34] sm:$0xf]
    %v618 = vld [vmem:[%s5 + $0x38] sm:$0xf]
    %v619 = vld [vmem:[%s5 + $0x3c] sm:$0xf]
    %v620 = vld [vmem:[%s5 + $0x40] sm:$0xf]
    %v621 = vld [vmem:[%s5 + $0x44] sm:$0xf]
    %v622 = vld [vmem:[%s5 + $0x48] sm:$0xf]
    %v623 = vld [vmem:[%s5 + $0x4c] sm:$0xf]
    %v624 = vld [vmem:[%s5 + $0x50] sm:$0xf]
    %v625 = vld [vmem:[%s5 + $0x54] sm:$0xf]
    %v626 = vld [vmem:[%s5 + $0x58] sm:$0xf]
    %v627 = vld [vmem:[%s5 + $0x5c] sm:$0xf]
    %v628 = vld [vmem:[%s5 + $0x60] sm:$0xf]
    %v629 = vld [vmem:[%s5 + $0x64] sm:$0xf]
    %v630 = vld [vmem:[%s5 + $0x68] sm:$0xf]
    %v631 = vld [vmem:[%s5 + $0x6c] sm:$0xf]
    %v632 = vld [vmem:[%s5 + $0x70] sm:$0xf]
    %v633 = vld [vmem:[%s5 + $0x74] sm:$0xf]
    %v634 = vld [vmem:[%s5 + $0x78] sm:$0xf]
    %v635 = vld [vmem:[%s5 + $0x7c] sm:$0xf]
    %v636 = vld [vmem:[%s5 + $0x80] sm:$0xf]
    %v637 = vld [vmem:[%s5 + $0x84] sm:$0xf]
    %v638 = vld [vmem:[%s5 + $0x88] sm:$0xf]
    %v639 = vld [vmem:[%s5 + $0x8c] sm:$0xf]
    %v640 = vld [vmem:[%s5 + $0x90] sm:$0xf]
    %v641 = vld [vmem:[%s5 + $0x94] sm:$0xf]
    %v642 = vld [vmem:[%s5 + $0x98] sm:$0xf]
    %v643 = vld [vmem:[%s5 + $0x9c] sm:$0xf]
    %v644 = vld [vmem:[%s5 + $0xa0] sm:$0xf]
    %v645 = vld [vmem:[%s5 + $0xa4] sm:$0xf]
    %v646 = vld [vmem:[%s5 + $0xa8] sm:$0xf]
    %v647 = vld [vmem:[%s5 + $0xac] sm:$0xf]
    %v648 = vld [vmem:[%s5 + $0xb0] sm:$0xf]
    %v649 = vld [vmem:[%s5 + $0xb4] sm:$0xf]
    %v650 = vld [vmem:[%s5 + $0xb8] sm:$0xf]
    %v651 = vld [vmem:[%s5 + $0xbc] sm:$0xf]
    %v652 = vld [vmem:[%s5 + $0xc0] sm:$0xf]
    %v653 = vld [vmem:[%s5 + $0xc4] sm:$0xf]
    %v654 = vld [vmem:[%s5 + $0xc8] sm:$0xf]
    %v655 = vld [vmem:[%s5 + $0xcc] sm:$0xf]
    %v656 = vld [vmem:[%s5 + $0xd0] sm:$0xf]
    %v657 = vld [vmem:[%s5 + $0xd4] sm:$0xf]
    %v658 = vld [vmem:[%s5 + $0xd8] sm:$0xf]
    %v659 = vld [vmem:[%s5 + $0xdc] sm:$0xf]
    %v660 = vld [vmem:[%s5 + $0xe0] sm:$0xf]
    %v661 = vld [vmem:[%s5 + $0xe4] sm:$0xf]
    %v662 = vld [vmem:[%s5 + $0xe8] sm:$0xf]
    %v663 = vld [vmem:[%s5 + $0xec] sm:$0xf]
    %v664 = vld [vmem:[%s5 + $0xf0] sm:$0xf]
    %v665 = vld [vmem:[%s5 + $0xf4] sm:$0xf]
    %v666 = vld [vmem:[%s5 + $0xf8] sm:$0xf]
    %v667 = vld [vmem:[%s5 + $0xfc] sm:$0xf]
    %v732 = vunpack.c.l.b16 %v604
    %v733 = vunpack.c.l.b16 %v605
    %v734 = vunpack.c.l.b16 %v606
    %v735 = vunpack.c.l.b16 %v607
    %v736 = vunpack.c.l.b16 %v608
    %v737 = vunpack.c.l.b16 %v609
    %v738 = vunpack.c.l.b16 %v610
    %v739 = vunpack.c.l.b16 %v611
    %v740 = vunpack.c.l.b16 %v612
    %v741 = vunpack.c.l.b16 %v613
    %v742 = vunpack.c.l.b16 %v614
    %v743 = vunpack.c.l.b16 %v615
    %v744 = vunpack.c.l.b16 %v616
    %v745 = vunpack.c.l.b16 %v617
    %v746 = vunpack.c.l.b16 %v618
    %v747 = vunpack.c.l.b16 %v619
    %v748 = vunpack.c.l.b16 %v620
    %v749 = vunpack.c.l.b16 %v621
    %v750 = vunpack.c.l.b16 %v622
    %v751 = vunpack.c.l.b16 %v623
    %v752 = vunpack.c.l.b16 %v624
    %v753 = vunpack.c.l.b16 %v625
    %v754 = vunpack.c.l.b16 %v626
    %v755 = vunpack.c.l.b16 %v627
    %v756 = vunpack.c.l.b16 %v628
    %v757 = vunpack.c.l.b16 %v629
    %v758 = vunpack.c.l.b16 %v630
    %v759 = vunpack.c.l.b16 %v631
    %v760 = vunpack.c.l.b16 %v632
    %v761 = vunpack.c.l.b16 %v633
    %v762 = vunpack.c.l.b16 %v634
    %v763 = vunpack.c.l.b16 %v635
    %v764 = vunpack.c.l.b16 %v636
    %v765 = vunpack.c.l.b16 %v637
    %v766 = vunpack.c.l.b16 %v638
    %v767 = vunpack.c.l.b16 %v639
    %v768 = vunpack.c.l.b16 %v640
    %v769 = vunpack.c.l.b16 %v641
    %v770 = vunpack.c.l.b16 %v642
    %v771 = vunpack.c.l.b16 %v643
    %v772 = vunpack.c.l.b16 %v644
    %v773 = vunpack.c.l.b16 %v645
    %v774 = vunpack.c.l.b16 %v646
    %v775 = vunpack.c.l.b16 %v647
    %v776 = vunpack.c.l.b16 %v648
    %v777 = vunpack.c.l.b16 %v649
    %v778 = vunpack.c.l.b16 %v650
    %v779 = vunpack.c.l.b16 %v651
    %v780 = vunpack.c.l.b16 %v652
    %v781 = vunpack.c.l.b16 %v653
    %v782 = vunpack.c.l.b16 %v654
    %v783 = vunpack.c.l.b16 %v655
    %v784 = vunpack.c.l.b16 %v656
    %v785 = vunpack.c.l.b16 %v657
    %v786 = vunpack.c.l.b16 %v658
    %v787 = vunpack.c.l.b16 %v659
    %v788 = vunpack.c.l.b16 %v660
    %v789 = vunpack.c.l.b16 %v661
    %v790 = vunpack.c.l.b16 %v662
    %v791 = vunpack.c.l.b16 %v663
    %v792 = vunpack.c.l.b16 %v664
    %v793 = vunpack.c.l.b16 %v665
    %v794 = vunpack.c.l.b16 %v666
    %v795 = vunpack.c.l.b16 %v667
    %v796 = vpack.c.b16 %v733, %v732
    %v797 = vpack.c.b16 %v735, %v734
    %v798 = vpack.c.b16 %v737, %v736
    %v799 = vpack.c.b16 %v739, %v738
    %v800 = vpack.c.b16 %v741, %v740
    %v801 = vpack.c.b16 %v743, %v742
    %v802 = vpack.c.b16 %v745, %v744
    %v803 = vpack.c.b16 %v747, %v746
    %v804 = vpack.c.b16 %v749, %v748
    %v805 = vpack.c.b16 %v751, %v750
    %v806 = vpack.c.b16 %v753, %v752
    %v807 = vpack.c.b16 %v755, %v754
    %v808 = vpack.c.b16 %v757, %v756
    %v809 = vpack.c.b16 %v759, %v758
    %v810 = vpack.c.b16 %v761, %v760
    %v811 = vpack.c.b16 %v763, %v762
    %v812 = vpack.c.b16 %v765, %v764
    %v813 = vpack.c.b16 %v767, %v766
    %v814 = vpack.c.b16 %v769, %v768
    %v815 = vpack.c.b16 %v771, %v770
    %v816 = vpack.c.b16 %v773, %v772
    %v817 = vpack.c.b16 %v775, %v774
    %v818 = vpack.c.b16 %v777, %v776
    %v819 = vpack.c.b16 %v779, %v778
    %v820 = vpack.c.b16 %v781, %v780
    %v821 = vpack.c.b16 %v783, %v782
    %v822 = vpack.c.b16 %v785, %v784
    %v823 = vpack.c.b16 %v787, %v786
    %v824 = vpack.c.b16 %v789, %v788
    %v825 = vpack.c.b16 %v791, %v790
    %v826 = vpack.c.b16 %v793, %v792
    %v827 = vpack.c.b16 %v795, %v794
    %860 = vmatprep.subr.bf16.mxu0 0
    %861 = vmatpush1.bf16.msra.mxu0 %v796
    %862 = vmatprep.subr.bf16.mxu0 0
    %863 = vmatpush1.bf16.msra.mxu0 %v797
    %864 = vmatprep.subr.bf16.mxu0 0
    %865 = vmatpush1.bf16.msra.mxu0 %v798
    %866 = vmatprep.subr.bf16.mxu0 0
    %867 = vmatpush1.bf16.msra.mxu0 %v799
    %868 = vmatprep.subr.bf16.mxu0 0
    %869 = vmatpush1.bf16.msra.mxu0 %v800
    %870 = vmatprep.subr.bf16.mxu0 0
    %871 = vmatpush1.bf16.msra.mxu0 %v801
    %872 = vmatprep.subr.bf16.mxu0 0
    %873 = vmatpush1.bf16.msra.mxu0 %v802
    %874 = vmatprep.subr.bf16.mxu0 0
    %875 = vmatpush1.bf16.msra.mxu0 %v803
    %876 = vmatprep.subr.bf16.mxu0 0
    %877 = vmatpush1.bf16.msra.mxu0 %v804
    %878 = vmatprep.subr.bf16.mxu0 0
    %879 = vmatpush1.bf16.msra.mxu0 %v805
    %880 = vmatprep.subr.bf16.mxu0 0
    %881 = vmatpush1.bf16.msra.mxu0 %v806
    %882 = vmatprep.subr.bf16.mxu0 0
    %883 = vmatpush1.bf16.msra.mxu0 %v807
    %884 = vmatprep.subr.bf16.mxu0 0
    %885 = vmatpush1.bf16.msra.mxu0 %v808
    %886 = vmatprep.subr.bf16.mxu0 0
    %887 = vmatpush1.bf16.msra.mxu0 %v809
    %888 = vmatprep.subr.bf16.mxu0 0
    %889 = vmatpush1.bf16.msra.mxu0 %v810
    %890 = vmatprep.subr.bf16.mxu0 0
    %891 = vmatpush1.bf16.msra.mxu0 %v811
    %892 = vmatprep.mubr.bf16.mxu0 %v597
    %893 = vmatmul.mubr.bf16.gmra.mrb[0].mxu0 %v596
    %v894 = vpop.f32.mrb[0].mxu0
    %v895 = vadd.f32 0.0, %v894
    %v896 = vpop.f32.mrb[0].mxu0
    %v897 = vpop.f32.mrb[0].mxu0
    %v898 = vadd.f32 0.0, %v897
    %v899 = vpop.f32.mrb[0].mxu0
    %900 = vmatprep.mubr.bf16.mxu0 %v601
    %901 = vmatmul.mubr.bf16.gmra.mrb[0].mxu0 %v600
    %v902 = vpop.f32.mrb[0].mxu0
    %v903 = vadd.f32 0.0, %v902
    %v904 = vpop.f32.mrb[0].mxu0
    %v905 = vpop.f32.mrb[0].mxu0
    %v906 = vadd.f32 0.0, %v905
    %v907 = vpop.f32.mrb[0].mxu0
    %908 = vdwg.mxu0
    %909 = vmatprep.subr.bf16.mxu0 0
    %910 = vmatpush1.bf16.msra.mxu0 %v812
    %911 = vmatprep.subr.bf16.mxu0 0
    %912 = vmatpush1.bf16.msra.mxu0 %v813
    %913 = vmatprep.subr.bf16.mxu0 0
    %914 = vmatpush1.bf16.msra.mxu0 %v814
    %915 = vmatprep.subr.bf16.mxu0 0
    %916 = vmatpush1.bf16.msra.mxu0 %v815
    %917 = vmatprep.subr.bf16.mxu0 0
    %918 = vmatpush1.bf16.msra.mxu0 %v816
    %919 = vmatprep.subr.bf16.mxu0 0
    %920 = vmatpush1.bf16.msra.mxu0 %v817
    %921 = vmatprep.subr.bf16.mxu0 0
    %922 = vmatpush1.bf16.msra.mxu0 %v818
    %923 = vmatprep.subr.bf16.mxu0 0
    %924 = vmatpush1.bf16.msra.mxu0 %v819
    %925 = vmatprep.subr.bf16.mxu0 0
    %926 = vmatpush1.bf16.msra.mxu0 %v820
    %927 = vmatprep.subr.bf16.mxu0 0
    %928 = vmatpush1.bf16.msra.mxu0 %v821
    %929 = vmatprep.subr.bf16.mxu0 0
    %930 = vmatpush1.bf16.msra.mxu0 %v822
    %931 = vmatprep.subr.bf16.mxu0 0
    %932 = vmatpush1.bf16.msra.mxu0 %v823
    %933 = vmatprep.subr.bf16.mxu0 0
    %934 = vmatpush1.bf16.msra.mxu0 %v824
    %935 = vmatprep.subr.bf16.mxu0 0
    %936 = vmatpush1.bf16.msra.mxu0 %v825
    %937 = vmatprep.subr.bf16.mxu0 0
    %938 = vmatpush1.bf16.msra.mxu0 %v826
    %939 = vmatprep.subr.bf16.mxu0 0
    %940 = vmatpush1.bf16.msra.mxu0 %v827
    %941 = vmatprep.mubr.bf16.mxu0 %v599
    %942 = vmatmul.mubr.bf16.gmra.mrb[0].mxu0 %v598
    %v943 = vpop.f32.mrb[0].mxu0
    %v944 = vadd.f32 %v895, %v943
    %v945 = vpop.f32.mrb[0].mxu0
    %v946 = vpop.f32.mrb[0].mxu0
    %v947 = vadd.f32 %v898, %v946
    %v948 = vpop.f32.mrb[0].mxu0
    %949 = vmatprep.mubr.bf16.mxu0 %v603
    %950 = vmatmul.mubr.bf16.gmra.mrb[0].mxu0 %v602
    %v951 = vpop.f32.mrb[0].mxu0
    %v952 = vadd.f32 %v903, %v951
    %v953 = vpop.f32.mrb[0].mxu0
    %v954 = vpop.f32.mrb[0].mxu0
    %v955 = vadd.f32 %v906, %v954
    %v956 = vpop.f32.mrb[0].mxu0
    %957 = vdwg.mxu0
    %v958 = vadd.f32 %v592, %v944
    %v959 = vadd.f32 %v593, %v947
    %v960 = vadd.f32 %v594, %v952
    %v961 = vadd.f32 %v595, %v955
    %962 = vst [vmem:[#allocation3] sm:$0xff] %v958
    %963 = vst [vmem:[#allocation3 + $0x8] sm:$0xff] %v959
    %964 = vst [vmem:[#allocation3 + $0x10] sm:$0xff] %v960
    %965 = vst [vmem:[#allocation3 + $0x18] sm:$0xff] %v961
    // Predicated region
    $region38: #{lairgpt_forward.6} parent=1 // pred_check
      %p966 = pneg %p39
    $region39: #{lairgpt_forward.6} parent=1 // pred_check_branch
      %968 = sbr.rel (%p966) target = $region41
    $region40: #{lairgpt_forward.6} parent=1 // pred_region
      %v969 = vld [vmem:[#allocation3] sm:$0xff]
      %v970 = vld [vmem:[#allocation3 + $0x8] sm:$0xff]
      %v971 = vld [vmem:[#allocation3 + $0x10] sm:$0xff]
      %v972 = vld [vmem:[#allocation3 + $0x18] sm:$0xff]
      %v973 = vld [vmem:[#allocation4] sm:$0x1]
      %v975 = vlaneseq
      %v976 = vshrl.u32 %v975, 7
      %v977 = vsub.s32 0, %v976
      %v978 = vrot.slane %v973, %v977
      %v980 = vadd.f32 %v969, %v978
      %v981 = vadd.f32 %v970, %v978
      %v982 = vadd.f32 %v971, %v978
      %v983 = vadd.f32 %v972, %v978
      %v984 = vpack.c.bf16 %v981, %v980
      %v985 = vpack.c.bf16 %v983, %v982
      %v988 = vunpack.c.l.b16 %v984
      %v989 = vunpack.c.h.b16 %v984
      %v990 = vunpack.c.l.b16 %v985
      %v991 = vunpack.c.h.b16 %v985
      %v992 = vpack.c.b16 %v988, %v988
      %v993 = vpack.c.b16 %v989, %v989
      %v994 = vpack.c.b16 %v990, %v990
      %v995 = vpack.c.b16 %v991, %v991
      %1000 = vst [vmem:[%s7] sm:$0xf] %v992
      %1001 = vst [vmem:[%s7 + $0x4] sm:$0xf] %v993
      %1002 = vst [vmem:[%s7 + $0x8] sm:$0xf] %v994
      %1003 = vst [vmem:[%s7 + $0xc] sm:$0xf] %v995
    $region41: #{lairgpt_forward.6} parent=1 // pred_fallthru
      _
    // Predicated region
    $region42: #{lairgpt_forward.6} parent=1 // pred_check
      _
    $region43: #{lairgpt_forward.6} parent=1 // pred_check_branch
      %1005 = sbr.rel (0) target = $region45
    $region44: #{lairgpt_forward.6} parent=1 // pred_region
      _
    $region45: #{lairgpt_forward.6} parent=1 // pred_fallthru
      _
    // Predicated region
    $region46: #{lairgpt_forward.6} parent=1 // pred_check
      _
    $region47: #{lairgpt_forward.6} parent=1 // pred_check_branch
      %1007 = sbr.rel (0) target = $region49
    $region48: #{lairgpt_forward.6} parent=1 // pred_region
      _
    $region49: #{lairgpt_forward.6} parent=1 // pred_fallthru
      _
    %1008 = vsyncpa [#allocation5], 1

// kernel: lairgpt_forward.7
$region0: #{lairgpt_forward.7}
  #allocation0 [shape = 'u32[]', space=smem, size = 0x4, offset = 0x4, fixed_abs, tag = 'smem constant byte address 0x4 - core index']
  #allocation1 [shape = 'u32[144,128]{1,0:T(1,128)}', space=vmem, size = 0x12000, scoped, tag = 'internal scratch']
  %s0 = inlined_call_operand.vmem [shape: bf16[2,16,128], index: 0, kind: input, shape index: {}, may-alias: {0,11}]
  %s1 = inlined_call_operand.vmem [shape: f32[1,128], index: 1, kind: input, shape index: {}]
  %s2 = inlined_call_operand.vmem [shape: f32[1,128], index: 2, kind: input, shape index: {}]
  %s3 = inlined_call_operand.vmem [shape: bf16[128,128], index: 3, kind: input, shape index: {}]
  %s4 = inlined_call_operand.vmem [shape: bf16[128,128], index: 4, kind: input, shape index: {}]
  %s5 = inlined_call_operand.vmem [shape: bf16[128,128], index: 5, kind: input, shape index: {}]
  %s6 = inlined_call_operand.vmem [shape: f32[1,128], index: 6, kind: input, shape index: {}]
  %s7 = inlined_call_operand.vmem [shape: f32[1,128], index: 7, kind: input, shape index: {}]
  %s8 = inlined_call_operand.vmem [shape: f32[1,128], index: 8, kind: input, shape index: {}]
  %s9 = inlined_call_operand.vmem [shape: bf16[128,128], index: 9, kind: input, shape index: {}]
  %s10 = inlined_call_operand.vmem [shape: f32[1,128], index: 10, kind: input, shape index: {}]
  %s11 = inlined_call_operand.vmem [shape: bf16[2,16,128], index: 11, kind: output, shape index: {}, may-alias: {0,11}]
  %s12 = sld [smem:[#allocation0]]
  $region77: #{lairgpt_forward.7} parent=0
    _
  %s14 = ssub.s32 1, %s12
  %s15 = scalar_select 0, %s14, %s12
  loop: start=0, step=1, limit=4
  $region2: #{lairgpt_forward.7} parent=0 // loop_pre_header
    _
  $region3: #{lairgpt_forward.7} parent=0 // loop_header
    %s17 = sphi 0, %s21
    %p18 = scmp.ge.s32.totalorder %s17, 4
    %s27 = sphi 0, %s29
    %s30 = sphi 0, %s27
    %s31 = sphi 0, %s30
    %s47 = sphi 0, %s31
    %s51 = sphi 0, %s51
    %s53 = sphi 0, %s51
    %s54 = sphi 0, %s53
    %s68 = sphi 0, %s54
    %s72 = sphi 0, %s72
    %s74 = sphi 0, %s72
    %s75 = sphi 0, %s74
    %s89 = sphi 0, %s75
    %s93 = sphi 0, %s93
    %s95 = sphi 0, %s93
    %s96 = sphi 0, %s95
    %s110 = sphi 0, %s96
    %s114 = sphi 0, %s114
    %s116 = sphi 0, %s114
    %s117 = sphi 0, %s116
    %s131 = sphi 0, %s117
    %s135 = sphi 0, %s135
    %s137 = sphi 0, %s135
    %s138 = sphi 0, %s137
    %s152 = sphi 0, %s138
    %s156 = sphi 0, %s156
    %s158 = sphi 0, %s156
    %s159 = sphi 0, %s158
    %s173 = sphi 0, %s159
    %s177 = sphi 0, %s177
    %s179 = sphi 0, %s177
    %s180 = sphi 0, %s179
    %s194 = sphi 0, %s180
    %s198 = sphi 0, %s198
    %s200 = sphi 0, %s198
    %s201 = sphi 0, %s200
    %s215 = sphi 0, %s201
    %s219 = sphi 0, %s219
    %s221 = sphi 0, %s219
    %s222 = sphi 0, %s221
    %s236 = sphi 0, %s222
    %s240 = sphi 0, %s240
    %s242 = sphi 0, %s240
    %s243 = sphi 0, %s242
    %s257 = sphi 0, %s243
    %s263 = sphi 0, %s265
    %s266 = sphi 0, %s263
    %s267 = sphi 0, %s266
    %s283 = sphi 0, %s267
  $region4: #{lairgpt_forward.7} parent=0 // loop_header_branch
    %20 = sbr.rel (%p18) target = $region8
  $region5: #{lairgpt_forward.7} parent=0 // loop_body
    %s22 = ssub.s32 %s17, 1
    %s23 = ssub.s32 %s17, 2
    %s24 = sadd.s32 %s17, 1
    %s25 = ssub.s32 %s17, %s24
    %p26 = scmp.eq.s32.totalorder %s25, 0
    %s28 = sadd.s32 %s27, 1
    %s29 = scalar_select %p26, %s27, %s28
    %p32 = pneg %p26
    %p33 = scmp.eq.s32.totalorder %s17, 1
    %p34 = por %p32, %p33
    %p35 = scmp.ne.s32.totalorder %s27, %s30
    %p36 = scmp.eq.s32.totalorder %s17, 0
    %p37 = por %p35, %p36
    %p38 = scmp.ne.s32.totalorder %s27, %s30
    %p39 = scmp.eq.s32.totalorder %s22, 1
    %p40 = por %p38, %p39
    %p41 = scmp.ne.s32.totalorder %s30, %s31
    %p42 = scmp.eq.s32.totalorder %s22, 0
    %p43 = por %p41, %p42
    %p44 = scmp.ne.s32.totalorder %s30, %s31
    %p45 = scmp.eq.s32.totalorder %s23, 1
    %p46 = por %p44, %p45
    %p48 = scmp.ne.s32.totalorder %s31, %s47
    %p49 = scmp.eq.s32.totalorder %s23, 0
    %p50 = por %p48, %p49
    %s52 = sadd.s32 %s51, 1
    %p55 = scmp.eq.s32.totalorder %s17, 1
    %p56 = scmp.ne.s32.totalorder %s51, %s53
    %p57 = scmp.eq.s32.totalorder %s17, 0
    %p58 = por %p56, %p57
    %p59 = scmp.ne.s32.totalorder %s51, %s53
    %p60 = scmp.eq.s32.totalorder %s22, 1
    %p61 = por %p59, %p60
    %p62 = scmp.ne.s32.totalorder %s53, %s54
    %p63 = scmp.eq.s32.totalorder %s22, 0
    %p64 = por %p62, %p63
    %p65 = scmp.ne.s32.totalorder %s53, %s54
    %p66 = scmp.eq.s32.totalorder %s23, 1
    %p67 = por %p65, %p66
    %p69 = scmp.ne.s32.totalorder %s54, %s68
    %p70 = scmp.eq.s32.totalorder %s23, 0
    %p71 = por %p69, %p70
    %s73 = sadd.s32 %s72, 1
    %p76 = scmp.eq.s32.totalorder %s17, 1
    %p77 = scmp.ne.s32.totalorder %s72, %s74
    %p78 = scmp.eq.s32.totalorder %s17, 0
    %p79 = por %p77, %p78
    %p80 = scmp.ne.s32.totalorder %s72, %s74
    %p81 = scmp.eq.s32.totalorder %s22, 1
    %p82 = por %p80, %p81
    %p83 = scmp.ne.s32.totalorder %s74, %s75
    %p84 = scmp.eq.s32.totalorder %s22, 0
    %p85 = por %p83, %p84
    %p86 = scmp.ne.s32.totalorder %s74, %s75
    %p87 = scmp.eq.s32.totalorder %s23, 1
    %p88 = por %p86, %p87
    %p90 = scmp.ne.s32.totalorder %s75, %s89
    %p91 = scmp.eq.s32.totalorder %s23, 0
    %p92 = por %p90, %p91
    %s94 = sadd.s32 %s93, 1
    %p97 = scmp.eq.s32.totalorder %s17, 1
    %p98 = scmp.ne.s32.totalorder %s93, %s95
    %p99 = scmp.eq.s32.totalorder %s17, 0
    %p100 = por %p98, %p99
    %p101 = scmp.ne.s32.totalorder %s93, %s95
    %p102 = scmp.eq.s32.totalorder %s22, 1
    %p103 = por %p101, %p102
    %p104 = scmp.ne.s32.totalorder %s95, %s96
    %p105 = scmp.eq.s32.totalorder %s22, 0
    %p106 = por %p104, %p105
    %p107 = scmp.ne.s32.totalorder %s95, %s96
    %p108 = scmp.eq.s32.totalorder %s23, 1
    %p109 = por %p107, %p108
    %p111 = scmp.ne.s32.totalorder %s96, %s110
    %p112 = scmp.eq.s32.totalorder %s23, 0
    %p113 = por %p111, %p112
    %s115 = sadd.s32 %s114, 1
    %p118 = scmp.eq.s32.totalorder %s17, 1
    %p119 = scmp.ne.s32.totalorder %s114, %s116
    %p120 = scmp.eq.s32.totalorder %s17, 0
    %p121 = por %p119, %p120
    %p122 = scmp.ne.s32.totalorder %s114, %s116
    %p123 = scmp.eq.s32.totalorder %s22, 1
    %p124 = por %p122, %p123
    %p125 = scmp.ne.s32.totalorder %s116, %s117
    %p126 = scmp.eq.s32.totalorder %s22, 0
    %p127 = por %p125, %p126
    %p128 = scmp.ne.s32.totalorder %s116, %s117
    %p129 = scmp.eq.s32.totalorder %s23, 1
    %p130 = por %p128, %p129
    %p132 = scmp.ne.s32.totalorder %s117, %s131
    %p133 = scmp.eq.s32.totalorder %s23, 0
    %p134 = por %p132, %p133
    %s136 = sadd.s32 %s135, 1
    %p139 = scmp.eq.s32.totalorder %s17, 1
    %p140 = scmp.ne.s32.totalorder %s135, %s137
    %p141 = scmp.eq.s32.totalorder %s17, 0
    %p142 = por %p140, %p141
    %p143 = scmp.ne.s32.totalorder %s135, %s137
    %p144 = scmp.eq.s32.totalorder %s22, 1
    %p145 = por %p143, %p144
    %p146 = scmp.ne.s32.totalorder %s137, %s138
    %p147 = scmp.eq.s32.totalorder %s22, 0
    %p148 = por %p146, %p147
    %p149 = scmp.ne.s32.totalorder %s137, %s138
    %p150 = scmp.eq.s32.totalorder %s23, 1
    %p151 = por %p149, %p150
    %p153 = scmp.ne.s32.totalorder %s138, %s152
    %p154 = scmp.eq.s32.totalorder %s23, 0
    %p155 = por %p153, %p154
    %s157 = sadd.s32 %s156, 1
    %p160 = scmp.eq.s32.totalorder %s17, 1
    %p161 = scmp.ne.s32.totalorder %s156, %s158
    %p162 = scmp.eq.s32.totalorder %s17, 0
    %p163 = por %p161, %p162
    %p164 = scmp.ne.s32.totalorder %s156, %s158
    %p165 = scmp.eq.s32.totalorder %s22, 1
    %p166 = por %p164, %p165
    %p167 = scmp.ne.s32.totalorder %s158, %s159
    %p168 = scmp.eq.s32.totalorder %s22, 0
    %p169 = por %p167, %p168
    %p170 = scmp.ne.s32.totalorder %s158, %s159
    %p171 = scmp.eq.s32.totalorder %s23, 1
    %p172 = por %p170, %p171
    %p174 = scmp.ne.s32.totalorder %s159, %s173
    %p175 = scmp.eq.s32.totalorder %s23, 0
    %p176 = por %p174, %p175
    %s178 = sadd.s32 %s177, 1
    %p181 = scmp.eq.s32.totalorder %s17, 1
    %p182 = scmp.ne.s32.totalorder %s177, %s179
    %p183 = scmp.eq.s32.totalorder %s17, 0
    %p184 = por %p182, %p183
    %p185 = scmp.ne.s32.totalorder %s177, %s179
    %p186 = scmp.eq.s32.totalorder %s22, 1
    %p187 = por %p185, %p186
    %p188 = scmp.ne.s32.totalorder %s179, %s180
    %p189 = scmp.eq.s32.totalorder %s22, 0
    %p190 = por %p188, %p189
    %p191 = scmp.ne.s32.totalorder %s179, %s180
    %p192 = scmp.eq.s32.totalorder %s23, 1
    %p193 = por %p191, %p192
    %p195 = scmp.ne.s32.totalorder %s180, %s194
    %p196 = scmp.eq.s32.totalorder %s23, 0
    %p197 = por %p195, %p196
    %s199 = sadd.s32 %s198, 1
    %p202 = scmp.eq.s32.totalorder %s17, 1
    %p203 = scmp.ne.s32.totalorder %s198, %s200
    %p204 = scmp.eq.s32.totalorder %s17, 0
    %p205 = por %p203, %p204
    %p206 = scmp.ne.s32.totalorder %s198, %s200
    %p207 = scmp.eq.s32.totalorder %s22, 1
    %p208 = por %p206, %p207
    %p209 = scmp.ne.s32.totalorder %s200, %s201
    %p210 = scmp.eq.s32.totalorder %s22, 0
    %p211 = por %p209, %p210
    %p212 = scmp.ne.s32.totalorder %s200, %s201
    %p213 = scmp.eq.s32.totalorder %s23, 1
    %p214 = por %p212, %p213
    %p216 = scmp.ne.s32.totalorder %s201, %s215
    %p217 = scmp.eq.s32.totalorder %s23, 0
    %p218 = por %p216, %p217
    %s220 = sadd.s32 %s219, 1
    %p223 = scmp.eq.s32.totalorder %s17, 1
    %p224 = scmp.ne.s32.totalorder %s219, %s221
    %p225 = scmp.eq.s32.totalorder %s17, 0
    %p226 = por %p224, %p225
    %p227 = scmp.ne.s32.totalorder %s219, %s221
    %p228 = scmp.eq.s32.totalorder %s22, 1
    %p229 = por %p227, %p228
    %p230 = scmp.ne.s32.totalorder %s221, %s222
    %p231 = scmp.eq.s32.totalorder %s22, 0
    %p232 = por %p230, %p231
    %p233 = scmp.ne.s32.totalorder %s221, %s222
    %p234 = scmp.eq.s32.totalorder %s23, 1
    %p235 = por %p233, %p234
    %p237 = scmp.ne.s32.totalorder %s222, %s236
    %p238 = scmp.eq.s32.totalorder %s23, 0
    %p239 = por %p237, %p238
    %s241 = sadd.s32 %s240, 1
    %p244 = scmp.eq.s32.totalorder %s17, 1
    %p245 = scmp.ne.s32.totalorder %s240, %s242
    %p246 = scmp.eq.s32.totalorder %s17, 0
    %p247 = por %p245, %p246
    %p248 = scmp.ne.s32.totalorder %s240, %s242
    %p249 = scmp.eq.s32.totalorder %s22, 1
    %p250 = por %p248, %p249
    %p251 = scmp.ne.s32.totalorder %s242, %s243
    %p252 = scmp.eq.s32.totalorder %s22, 0
    %p253 = por %p251, %p252
    %p254 = scmp.ne.s32.totalorder %s242, %s243
    %p255 = scmp.eq.s32.totalorder %s23, 1
    %p256 = por %p254, %p255
    %p258 = scmp.ne.s32.totalorder %s243, %s257
    %p259 = scmp.eq.s32.totalorder %s23, 0
    %p260 = por %p258, %p259
    %s261 = ssub.s32 %s17, %s24
    %p262 = scmp.eq.s32.totalorder %s261, 0
    %s264 = sadd.s32 %s263, 1
    %s265 = scalar_select %p262, %s263, %s264
    %p268 = pneg %p262
    %p269 = scmp.eq.s32.totalorder %s17, 1
    %p270 = por %p268, %p269
    %p271 = scmp.ne.s32.totalorder %s263, %s266
    %p272 = scmp.eq.s32.totalorder %s17, 0
    %p273 = por %p271, %p272
    %p274 = scmp.ne.s32.totalorder %s263, %s266
    %p275 = scmp.eq.s32.totalorder %s22, 1
    %p276 = por %p274, %p275
    %p277 = scmp.ne.s32.totalorder %s266, %s267
    %p278 = scmp.eq.s32.totalorder %s22, 0
    %p279 = por %p277, %p278
    %p280 = scmp.ne.s32.totalorder %s266, %s267
    %p281 = scmp.eq.s32.totalorder %s23, 1
    %p282 = por %p280, %p281
    %p284 = scmp.ne.s32.totalorder %s267, %s283
    %p285 = scmp.eq.s32.totalorder %s23, 0
    %p286 = por %p284, %p285
    %p287 = scmp.le.s32.totalorder 1, %s17
    %p288 = scmp.lt.s32.totalorder %s17, 3
    %p289 = pnand %p287, %p288
    %p290 = pneg %p289
    // Predicated region
    $region9: #{lairgpt_forward.7} parent=5 // pred_check
      _
    $region10: #{lairgpt_forward.7} parent=5 // pred_check_branch
      %292 = sbr.rel (%p289) target = $region12
    $region11: #{lairgpt_forward.7} parent=5 // pred_region
      %s293 = ssub.s32 %s17, 1
      // Predicated region
      $region13: #{lairgpt_forward.7} parent=11 // pred_check
        %p294 = pneg %p64
      $region14: #{lairgpt_forward.7} parent=11 // pred_check_branch
        %296 = sbr.rel (%p294) target = $region16
      $region15: #{lairgpt_forward.7} parent=11 // pred_region
        _
      $region16: #{lairgpt_forward.7} parent=11 // pred_fallthru
        _
      // Predicated region
      $region17: #{lairgpt_forward.7} parent=11 // pred_check
        %p297 = pneg %p85
      $region18: #{lairgpt_forward.7} parent=11 // pred_check_branch
        %299 = sbr.rel (%p297) target = $region20
      $region19: #{lairgpt_forward.7} parent=11 // pred_region
        _
      $region20: #{lairgpt_forward.7} parent=11 // pred_fallthru
        _
      // Predicated region
      $region21: #{lairgpt_forward.7} parent=11 // pred_check
        %p300 = pneg %p106
      $region22: #{lairgpt_forward.7} parent=11 // pred_check_branch
        %302 = sbr.rel (%p300) target = $region24
      $region23: #{lairgpt_forward.7} parent=11 // pred_region
        _
      $region24: #{lairgpt_forward.7} parent=11 // pred_fallthru
        _
      // Predicated region
      $region25: #{lairgpt_forward.7} parent=11 // pred_check
        %p303 = pneg %p127
      $region26: #{lairgpt_forward.7} parent=11 // pred_check_branch
        %305 = sbr.rel (%p303) target = $region28
      $region27: #{lairgpt_forward.7} parent=11 // pred_region
        _
      $region28: #{lairgpt_forward.7} parent=11 // pred_fallthru
        _
      // Predicated region
      $region29: #{lairgpt_forward.7} parent=11 // pred_check
        %p306 = pneg %p148
      $region30: #{lairgpt_forward.7} parent=11 // pred_check_branch
        %308 = sbr.rel (%p306) target = $region32
      $region31: #{lairgpt_forward.7} parent=11 // pred_region
        _
      $region32: #{lairgpt_forward.7} parent=11 // pred_fallthru
        _
      // Predicated region
      $region33: #{lairgpt_forward.7} parent=11 // pred_check
        %p309 = pneg %p169
      $region34: #{lairgpt_forward.7} parent=11 // pred_check_branch
        %311 = sbr.rel (%p309) target = $region36
      $region35: #{lairgpt_forward.7} parent=11 // pred_region
        _
      $region36: #{lairgpt_forward.7} parent=11 // pred_fallthru
        _
      // Predicated region
      $region37: #{lairgpt_forward.7} parent=11 // pred_check
        %p312 = pneg %p190
      $region38: #{lairgpt_forward.7} parent=11 // pred_check_branch
        %314 = sbr.rel (%p312) target = $region40
      $region39: #{lairgpt_forward.7} parent=11 // pred_region
        _
      $region40: #{lairgpt_forward.7} parent=11 // pred_fallthru
        _
      // Predicated region
      $region41: #{lairgpt_forward.7} parent=11 // pred_check
        %p315 = pneg %p211
      $region42: #{lairgpt_forward.7} parent=11 // pred_check_branch
        %317 = sbr.rel (%p315) target = $region44
      $region43: #{lairgpt_forward.7} parent=11 // pred_region
        _
      $region44: #{lairgpt_forward.7} parent=11 // pred_fallthru
        _
      // Predicated region
      $region45: #{lairgpt_forward.7} parent=11 // pred_check
        %p318 = pneg %p232
      $region46: #{lairgpt_forward.7} parent=11 // pred_check_branch
        %320 = sbr.rel (%p318) target = $region48
      $region47: #{lairgpt_forward.7} parent=11 // pred_region
        _
      $region48: #{lairgpt_forward.7} parent=11 // pred_fallthru
        _
      // Predicated region
      $region49: #{lairgpt_forward.7} parent=11 // pred_check
        %p321 = pneg %p253
      $region50: #{lairgpt_forward.7} parent=11 // pred_check_branch
        %323 = sbr.rel (%p321) target = $region52
      $region51: #{lairgpt_forward.7} parent=11 // pred_region
        _
      $region52: #{lairgpt_forward.7} parent=11 // pred_fallthru
        _
    $region12: #{lairgpt_forward.7} parent=5 // pred_fallthru
      _
    %p324 = scmp.lt.s32.totalorder %s17, 2
    // Predicated region
    $region53: #{lairgpt_forward.7} parent=5 // pred_check
      %p325 = pneg %p324
    $region54: #{lairgpt_forward.7} parent=5 // pred_check_branch
      %327 = sbr.rel (%p325) target = $region56
    $region55: #{lairgpt_forward.7} parent=5 // pred_region
      // Predicated region
      $region57: #{lairgpt_forward.7} parent=55 // pred_check
        %p328 = pneg %p37
      $region58: #{lairgpt_forward.7} parent=55 // pred_check_branch
        %330 = sbr.rel (%p328) target = $region60
      $region59: #{lairgpt_forward.7} parent=55 // pred_region
        %p331 = scmp.lt.s32.totalorder %s17, 1
        %s332 = scalar_select %p331, %s17, 1
        %s333 = smul.addr %s332, 2
        %s334 = smul.addr %s333, 4
        %s335 = scalar_lea.vmem %s0, %s334
      $region60: #{lairgpt_forward.7} parent=55 // pred_fallthru
        _
    $region56: #{lairgpt_forward.7} parent=5 // pred_fallthru
      _
    %p336 = scmp.le.s32.totalorder 1, %s17
    %p337 = scmp.lt.s32.totalorder %s17, 3
    %p338 = pnand %p336, %p337
    %p339 = pneg %p338
    // Predicated region
    $region61: #{lairgpt_forward.7} parent=5 // pred_check
      _
    $region62: #{lairgpt_forward.7} parent=5 // pred_check_branch
      %341 = sbr.rel (%p338) target = $region64
    $region63: #{lairgpt_forward.7} parent=5 // pred_region
      %s342 = ssub.s32 %s17, 1
      %p343 = scmp.lt.s32.totalorder %s22, 1
      %s344 = scalar_select %p343, %s22, 1
      %s345 = smul.addr %s344, 2
      %s346 = smul.addr %s345, 4
      %s347 = scalar_lea.vmem %s0, %s346
      %p348 = pneg %p43
      %p349 = pneg %p40
      %p350 = pneg %p64
      %p351 = pneg %p61
      %p352 = pneg %p85
      %p353 = pneg %p82
      %p354 = pneg %p106
      %p355 = pneg %p103
      %p356 = pneg %p127
      %p357 = pneg %p124
      %p358 = pneg %p148
      %p359 = pneg %p145
      %p360 = pneg %p169
      %p361 = pneg %p166
      %p362 = pneg %p190
      %p363 = pneg %p187
      %p364 = pneg %p211
      %p365 = pneg %p208
      %p366 = pneg %p232
      %p367 = pneg %p229
      %p368 = pneg %p253
      %p369 = pneg %p250
      %p370 = pneg %p279
      %p371 = pneg %p276
      %p372 = scmp.lt.s32.totalorder %s22, 1
      %s373 = scalar_select %p372, %s22, 1
      %s374 = smul.addr %s373, 2
      %s375 = smul.addr %s374, 4
      %s376 = scalar_lea.vmem %s11, %s375
      %p377 = scmp.lt.s32.totalorder %s22, 1
      %s378 = scalar_select %p377, %s22, 1
      %s379 = smul.addr %s378, 2
      %s380 = smul.addr %s379, 4
      %s381 = scalar_lea.vmem %s0, %s380
      %p382 = scmp.lt.s32.totalorder %s22, 1
      %s383 = scalar_select %p382, %s22, 1
      %s384 = smul.addr %s383, 2
      %s385 = smul.addr %s384, 4
      %s386 = scalar_lea.vmem %s11, %s385
      %v388 = vld [vmem:[%s381] sm:$0xf]
      %v389 = vld [vmem:[%s381 + $0x4] sm:$0xf]
      %v390 = vunpack.c.l.bf16 %v388
      %v391 = vunpack.c.l.bf16 %v389
      %v392 = vld [vmem:[%s1] sm:$0x1]
      %v393 = vld [vmem:[%s2] sm:$0x1]
      %394 = vadd.xlane.f32.xlu0 %v390
      %v395 = vpop.xlane.xlu0 %394
      %396 = vadd.xlane.f32.xlu0 %v391
      %v397 = vpop.xlane.xlu0 %396
      %v398 = vrcp.pop 128.0
      %v399 = vmul.f32 %v395, %v398
      %v400 = vmul.f32 %v397, %v398
      %v401 = vsub.f32 %v390, %v399
      %v402 = vsub.f32 %v391, %v400
      %v403 = vmul.f32 %v401, %v401
      %v404 = vmul.f32 %v402, %v402
      %405 = vadd.xlane.f32.xlu0 %v403
      %v406 = vpop.xlane.xlu0 %405
      %407 = vadd.xlane.f32.xlu0 %v404
      %v408 = vpop.xlane.xlu0 %407
      %v409 = vmul.f32 %v406, %v398
      %v410 = vmul.f32 %v408, %v398
      %v411 = vadd.f32 %v409, 1e-05
      %v412 = vadd.f32 %v410, 1e-05
      %v413 = vrsqrt.pop %v411
      %v414 = vrsqrt.pop %v412
      %v415 = vmul.f32 %v401, %v413
      %v416 = vmul.f32 %v402, %v414
      %v418 = vlaneseq
      %v419 = vshrl.u32 %v418, 7
      %v420 = vsub.s32 0, %v419
      %v421 = vrot.slane %v392, %v420
      %v423 = vmul.f32 %v415, %v421
      %v424 = vmul.f32 %v416, %v421
      %v426 = vlaneseq
      %v427 = vshrl.u32 %v426, 7
      %v428 = vsub.s32 0, %v427
      %v429 = vrot.slane %v393, %v428
      %v431 = vadd.f32 %v423, %v429
      %v432 = vadd.f32 %v424, %v429
      %v433 = vpack.c.bf16 %v432, %v431
      %v434 = vld [vmem:[%s3] sm:$0xf]
      %v435 = vld [vmem:[%s3 + $0x4] sm:$0xf]
      %v436 = vld [vmem:[%s3 + $0x8] sm:$0xf]
      %v437 = vld [vmem:[%s3 + $0xc] sm:$0xf]
      %v438 = vld [vmem:[%s3 + $0x10] sm:$0xf]
      %v439 = vld [vmem:[%s3 + $0x14] sm:$0xf]
      %v440 = vld [vmem:[%s3 + $0x18] sm:$0xf]
      %v441 = vld [vmem:[%s3 + $0x1c] sm:$0xf]
      %v442 = vld [vmem:[%s3 + $0x20] sm:$0xf]
      %v443 = vld [vmem:[%s3 + $0x24] sm:$0xf]
      %v444 = vld [vmem:[%s3 + $0x28] sm:$0xf]
      %v445 = vld [vmem:[%s3 + $0x2c] sm:$0xf]
      %v446 = vld [vmem:[%s3 + $0x30] sm:$0xf]
      %v447 = vld [vmem:[%s3 + $0x34] sm:$0xf]
      %v448 = vld [vmem:[%s3 + $0x38] sm:$0xf]
      %v449 = vld [vmem:[%s3 + $0x3c] sm:$0xf]
      %v450 = vld [vmem:[%s6] sm:$0x1]
      %v452 = vlaneseq
      %v453 = vshrl.u32 %v452, 7
      %v454 = vsub.s32 0, %v453
      %v455 = vrot.slane %v450, %v454
      %v473 = vunpack.c.l.b16 %v434
      %v474 = vunpack.c.l.b16 %v435
      %v475 = vunpack.c.l.b16 %v436
      %v476 = vunpack.c.l.b16 %v437
      %v477 = vunpack.c.l.b16 %v438
      %v478 = vunpack.c.l.b16 %v439
      %v479 = vunpack.c.l.b16 %v440
      %v480 = vunpack.c.l.b16 %v441
      %v481 = vunpack.c.l.b16 %v442
      %v482 = vunpack.c.l.b16 %v443
      %v483 = vunpack.c.l.b16 %v444
      %v484 = vunpack.c.l.b16 %v445
      %v485 = vunpack.c.l.b16 %v446
      %v486 = vunpack.c.l.b16 %v447
      %v487 = vunpack.c.l.b16 %v448
      %v488 = vunpack.c.l.b16 %v449
      %v489 = vpack.c.b16 %v474, %v473
      %v490 = vpack.c.b16 %v476, %v475
      %v491 = vpack.c.b16 %v478, %v477
      %v492 = vpack.c.b16 %v480, %v479
      %v493 = vpack.c.b16 %v482, %v481
      %v494 = vpack.c.b16 %v484, %v483
      %v495 = vpack.c.b16 %v486, %v485
      %v496 = vpack.c.b16 %v488, %v487
      %505 = vmatprep.subr.bf16.mxu0 0
      %506 = vmatpush1.bf16.msra.mxu0 %v489
      %507 = vmatprep.subr.bf16.mxu0 0
      %508 = vmatpush1.bf16.msra.mxu0 %v490
      %509 = vmatprep.subr.bf16.mxu0 0
      %510 = vmatpush1.bf16.msra.mxu0 %v491
      %511 = vmatprep.subr.bf16.mxu0 0
      %512 = vmatpush1.bf16.msra.mxu0 %v492
      %513 = vmatprep.subr.bf16.mxu0 0
      %514 = vmatpush1.bf16.msra.mxu0 %v493
      %515 = vmatprep.subr.bf16.mxu0 0
      %516 = vmatpush1.bf16.msra.mxu0 %v494
      %517 = vmatprep.subr.bf16.mxu0 0
      %518 = vmatpush1.bf16.msra.mxu0 %v495
      %519 = vmatprep.subr.bf16.mxu0 0
      %520 = vmatpush1.bf16.msra.mxu0 %v496
      %521 = vmatprep.subr.bf16.mxu0 0
      %522 = vmatpush1.bf16.msra.mxu0 0
      %523 = vmatprep.subr.bf16.mxu0 0
      %524 = vmatpush1.bf16.msra.mxu0 0
      %525 = vmatprep.subr.bf16.mxu0 0
      %526 = vmatpush1.bf16.msra.mxu0 0
      %527 = vmatprep.subr.bf16.mxu0 0
      %528 = vmatpush1.bf16.msra.mxu0 0
      %529 = vmatprep.subr.bf16.mxu0 0
      %530 = vmatpush1.bf16.msra.mxu0 0
      %531 = vmatprep.subr.bf16.mxu0 0
      %532 = vmatpush1.bf16.msra.mxu0 0
      %533 = vmatprep.subr.bf16.mxu0 0
      %534 = vmatpush1.bf16.msra.mxu0 0
      %535 = vmatprep.subr.bf16.mxu0 0
      %536 = vmatpush1.bf16.msra.mxu0 0
      %537 = vmatprep.mubr.bf16.mxu0 0
      %538 = vmatmul.mubr.bf16.gmra.mrb[0].mxu0 %v433
      %v539 = vpop.f32.mrb[0].mxu0
      %v540 = vadd.f32 %v455, %v539
      %v541 = vpop.f32.mrb[0].mxu0
      %v542 = vpop.f32.mrb[0].mxu0
      %v543 = vadd.f32 %v455, %v542
      %v544 = vpop.f32.mrb[0].mxu0
      %545 = vdwg.mxu0
      %v546 = vmul.f32 %v540, 0.17677669
      %v547 = vmul.f32 %v543, 0.17677669
      %v548 = vpack.c.bf16 %v547, %v546
      %v549 = vld [vmem:[%s4] sm:$0xf]
      %v550 = vld [vmem:[%s4 + $0x4] sm:$0xf]
      %v551 = vld [vmem:[%s4 + $0x8] sm:$0xf]
      %v552 = vld [vmem:[%s4 + $0xc] sm:$0xf]
      %v553 = vld [vmem:[%s4 + $0x10] sm:$0xf]
      %v554 = vld [vmem:[%s4 + $0x14] sm:$0xf]
      %v555 = vld [vmem:[%s4 + $0x18] sm:$0xf]
      %v556 = vld [vmem:[%s4 + $0x1c] sm:$0xf]
      %v557 = vld [vmem:[%s4 + $0x20] sm:$0xf]
      %v558 = vld [vmem:[%s4 + $0x24] sm:$0xf]
      %v559 = vld [vmem:[%s4 + $0x28] sm:$0xf]
      %v560 = vld [vmem:[%s4 + $0x2c] sm:$0xf]
      %v561 = vld [vmem:[%s4 + $0x30] sm:$0xf]
      %v562 = vld [vmem:[%s4 + $0x34] sm:$0xf]
      %v563 = vld [vmem:[%s4 + $0x38] sm:$0xf]
      %v564 = vld [vmem:[%s4 + $0x3c] sm:$0xf]
      %v565 = vld [vmem:[%s7] sm:$0x1]
      %v567 = vlaneseq
      %v568 = vshrl.u32 %v567, 7
      %v569 = vsub.s32 0, %v568
      %v570 = vrot.slane %v565, %v569
      %v588 = vunpack.c.l.b16 %v549
      %v589 = vunpack.c.l.b16 %v550
      %v590 = vunpack.c.l.b16 %v551
      %v591 = vunpack.c.l.b16 %v552
      %v592 = vunpack.c.l.b16 %v553
      %v593 = vunpack.c.l.b16 %v554
      %v594 = vunpack.c.l.b16 %v555
      %v595 = vunpack.c.l.b16 %v556
      %v596 = vunpack.c.l.b16 %v557
      %v597 = vunpack.c.l.b16 %v558
      %v598 = vunpack.c.l.b16 %v559
      %v599 = vunpack.c.l.b16 %v560
      %v600 = vunpack.c.l.b16 %v561
      %v601 = vunpack.c.l.b16 %v562
      %v602 = vunpack.c.l.b16 %v563
      %v603 = vunpack.c.l.b16 %v564
      %v604 = vpack.c.b16 %v589, %v588
      %v605 = vpack.c.b16 %v591, %v590
      %v606 = vpack.c.b16 %v593, %v592
      %v607 = vpack.c.b16 %v595, %v594
      %v608 = vpack.c.b16 %v597, %v596
      %v609 = vpack.c.b16 %v599, %v598
      %v610 = vpack.c.b16 %v601, %v600
      %v611 = vpack.c.b16 %v603, %v602
      %620 = vmatprep.subr.bf16.mxu0 0
      %621 = vmatpush1.bf16.msra.mxu0 %v604
      %622 = vmatprep.subr.bf16.mxu0 0
      %623 = vmatpush1.bf16.msra.mxu0 %v605
      %624 = vmatprep.subr.bf16.mxu0 0
      %625 = vmatpush1.bf16.msra.mxu0 %v606
      %626 = vmatprep.subr.bf16.mxu0 0
      %627 = vmatpush1.bf16.msra.mxu0 %v607
      %628 = vmatprep.subr.bf16.mxu0 0
      %629 = vmatpush1.bf16.msra.mxu0 %v608
      %630 = vmatprep.subr.bf16.mxu0 0
      %631 = vmatpush1.bf16.msra.mxu0 %v609
      %632 = vmatprep.subr.bf16.mxu0 0
      %633 = vmatpush1.bf16.msra.mxu0 %v610
      %634 = vmatprep.subr.bf16.mxu0 0
      %635 = vmatpush1.bf16.msra.mxu0 %v611
      %636 = vmatprep.subr.bf16.mxu0 0
      %637 = vmatpush1.bf16.msra.mxu0 0
      %638 = vmatprep.subr.bf16.mxu0 0
      %639 = vmatpush1.bf16.msra.mxu0 0
      %640 = vmatprep.subr.bf16.mxu0 0
      %641 = vmatpush1.bf16.msra.mxu0 0
      %642 = vmatprep.subr.bf16.mxu0 0
      %643 = vmatpush1.bf16.msra.mxu0 0
      %644 = vmatprep.subr.bf16.mxu0 0
      %645 = vmatpush1.bf16.msra.mxu0 0
      %646 = vmatprep.subr.bf16.mxu0 0
      %647 = vmatpush1.bf16.msra.mxu0 0
      %648 = vmatprep.subr.bf16.mxu0 0
      %649 = vmatpush1.bf16.msra.mxu0 0
      %650 = vmatprep.subr.bf16.mxu0 0
      %651 = vmatpush1.bf16.msra.mxu0 0
      %652 = vmatprep.mubr.bf16.mxu0 0
      %653 = vmatmul.mubr.bf16.gmra.mrb[0].mxu0 %v433
      %v654 = vpop.f32.mrb[0].mxu0
      %v655 = vadd.f32 %v570, %v654
      %v656 = vpop.f32.mrb[0].mxu0
      %v657 = vpop.f32.mrb[0].mxu0
      %v658 = vadd.f32 %v570, %v657
      %v659 = vpop.f32.mrb[0].mxu0
      %660 = vdwg.mxu0
      %v661 = vpack.c.bf16 %v658, %v655
      %v662 = vld [vmem:[%s5] sm:$0xf]
      %v663 = vld [vmem:[%s5 + $0x4] sm:$0xf]
      %v664 = vld [vmem:[%s5 + $0x8] sm:$0xf]
      %v665 = vld [vmem:[%s5 + $0xc] sm:$0xf]
      %v666 = vld [vmem:[%s5 + $0x10] sm:$0xf]
      %v667 = vld [vmem:[%s5 + $0x14] sm:$0xf]
      %v668 = vld [vmem:[%s5 + $0x18] sm:$0xf]
      %v669 = vld [vmem:[%s5 + $0x1c] sm:$0xf]
      %v670 = vld [vmem:[%s5 + $0x20] sm:$0xf]
      %v671 = vld [vmem:[%s5 + $0x24] sm:$0xf]
      %v672 = vld [vmem:[%s5 + $0x28] sm:$0xf]
      %v673 = vld [vmem:[%s5 + $0x2c] sm:$0xf]
      %v674 = vld [vmem:[%s5 + $0x30] sm:$0xf]
      %v675 = vld [vmem:[%s5 + $0x34] sm:$0xf]
      %v676 = vld [vmem:[%s5 + $0x38] sm:$0xf]
      %v677 = vld [vmem:[%s5 + $0x3c] sm:$0xf]
      %v678 = vld [vmem:[%s8] sm:$0x1]
      %v680 = vlaneseq
      %v681 = vshrl.u32 %v680, 7
      %v682 = vsub.s32 0, %v681
      %v683 = vrot.slane %v678, %v682
      %v701 = vunpack.c.l.b16 %v662
      %v702 = vunpack.c.l.b16 %v663
      %v703 = vunpack.c.l.b16 %v664
      %v704 = vunpack.c.l.b16 %v665
      %v705 = vunpack.c.l.b16 %v666
      %v706 = vunpack.c.l.b16 %v667
      %v707 = vunpack.c.l.b16 %v668
      %v708 = vunpack.c.l.b16 %v669
      %v709 = vunpack.c.l.b16 %v670
      %v710 = vunpack.c.l.b16 %v671
      %v711 = vunpack.c.l.b16 %v672
      %v712 = vunpack.c.l.b16 %v673
      %v713 = vunpack.c.l.b16 %v674
      %v714 = vunpack.c.l.b16 %v675
      %v715 = vunpack.c.l.b16 %v676
      %v716 = vunpack.c.l.b16 %v677
      %v717 = vpack.c.b16 %v702, %v701
      %v718 = vpack.c.b16 %v704, %v703
      %v719 = vpack.c.b16 %v706, %v705
      %v720 = vpack.c.b16 %v708, %v707
      %v721 = vpack.c.b16 %v710, %v709
      %v722 = vpack.c.b16 %v712, %v711
      %v723 = vpack.c.b16 %v714, %v713
      %v724 = vpack.c.b16 %v716, %v715
      %733 = vmatprep.subr.bf16.mxu0 0
      %734 = vmatpush1.bf16.msra.mxu0 %v717
      %735 = vmatprep.subr.bf16.mxu0 0
      %736 = vmatpush1.bf16.msra.mxu0 %v718
      %737 = vmatprep.subr.bf16.mxu0 0
      %738 = vmatpush1.bf16.msra.mxu0 %v719
      %739 = vmatprep.subr.bf16.mxu0 0
      %740 = vmatpush1.bf16.msra.mxu0 %v720
      %741 = vmatprep.subr.bf16.mxu0 0
      %742 = vmatpush1.bf16.msra.mxu0 %v721
      %743 = vmatprep.subr.bf16.mxu0 0
      %744 = vmatpush1.bf16.msra.mxu0 %v722
      %745 = vmatprep.subr.bf16.mxu0 0
      %746 = vmatpush1.bf16.msra.mxu0 %v723
      %747 = vmatprep.subr.bf16.mxu0 0
      %748 = vmatpush1.bf16.msra.mxu0 %v724
      %749 = vmatprep.subr.bf16.mxu0 0
      %750 = vmatpush1.bf16.msra.mxu0 0
      %751 = vmatprep.subr.bf16.mxu0 0
      %752 = vmatpush1.bf16.msra.mxu0 0
      %753 = vmatprep.subr.bf16.mxu0 0
      %754 = vmatpush1.bf16.msra.mxu0 0
      %755 = vmatprep.subr.bf16.mxu0 0
      %756 = vmatpush1.bf16.msra.mxu0 0
      %757 = vmatprep.subr.bf16.mxu0 0
      %758 = vmatpush1.bf16.msra.mxu0 0
      %759 = vmatprep.subr.bf16.mxu0 0
      %760 = vmatpush1.bf16.msra.mxu0 0
      %761 = vmatprep.subr.bf16.mxu0 0
      %762 = vmatpush1.bf16.msra.mxu0 0
      %763 = vmatprep.subr.bf16.mxu0 0
      %764 = vmatpush1.bf16.msra.mxu0 0
      %765 = vmatprep.mubr.bf16.mxu0 0
      %766 = vmatmul.mubr.bf16.gmra.mrb[0].mxu0 %v433
      %v767 = vpop.f32.mrb[0].mxu0
      %v768 = vadd.f32 %v683, %v767
      %v769 = vpop.f32.mrb[0].mxu0
      %v770 = vpop.f32.mrb[0].mxu0
      %v771 = vadd.f32 %v683, %v770
      %v772 = vpop.f32.mrb[0].mxu0
      %773 = vdwg.mxu0
      %v774 = vpack.c.bf16 %v771, %v768
      %v775 = vlaneseq
      %v776 = vshrl.u32 %v775, 7
      %v777 = vadd.s32 %v776, 8
      %v778 = vlaneseq
      %v779 = vand.u32 %v778, 127
      %vm780 = vcmp.ge.s32.totalorder %v776, %v779
      %vm781 = vcmp.ge.s32.totalorder %v777, %v779
      %vm782 = vcmask 261120
      %v784 = vsel %vm782, %v548, 0
      %v787 = vsel %vm782, %v661, 0
      %789 = vmatprep.subr.bf16.mxu0 0
      %790 = vmatpush1.bf16.xpose.msra.mxu0 %v787
      %791 = vmatprep.subr.bf16.mxu0 0
      %792 = vmatpush1.bf16.xpose.msra.mxu0 0
      %793 = vmatprep.subr.bf16.mxu0 0
      %794 = vmatpush1.bf16.xpose.msra.mxu0 0
      %795 = vmatprep.subr.bf16.mxu0 0
      %796 = vmatpush1.bf16.xpose.msra.mxu0 0
      %797 = vmatprep.subr.bf16.mxu0 0
      %798 = vmatpush1.bf16.xpose.msra.mxu0 0
      %799 = vmatprep.subr.bf16.mxu0 0
      %800 = vmatpush1.bf16.xpose.msra.mxu0 0
      %801 = vmatprep.subr.bf16.mxu0 0
      %802 = vmatpush1.bf16.xpose.msra.mxu0 0
      %803 = vmatprep.subr.bf16.mxu0 0
      %804 = vmatpush1.bf16.xpose.msra.mxu0 0
      %805 = vmatprep.subr.bf16.mxu0 0
      %806 = vmatpush1.bf16.xpose.msra.mxu0 0
      %807 = vmatprep.subr.bf16.mxu0 0
      %808 = vmatpush1.bf16.xpose.msra.mxu0 0
      %809 = vmatprep.subr.bf16.mxu0 0
      %810 = vmatpush1.bf16.xpose.msra.mxu0 0
      %811 = vmatprep.subr.bf16.mxu0 0
      %812 = vmatpush1.bf16.xpose.msra.mxu0 0
      %813 = vmatprep.subr.bf16.mxu0 0
      %814 = vmatpush1.bf16.xpose.msra.mxu0 0
      %815 = vmatprep.subr.bf16.mxu0 0
      %816 = vmatpush1.bf16.xpose.msra.mxu0 0
      %817 = vmatprep.subr.bf16.mxu0 0
      %818 = vmatpush1.bf16.xpose.msra.mxu0 0
      %819 = vmatprep.subr.bf16.mxu0 0
      %820 = vmatpush1.bf16.xpose.msra.mxu0 0
      %821 = vmatprep.mubr.bf16.mxu0 0
      %822 = vmatmul.mubr.bf16.gmra.mrb[0].mxu0 %v784
      %v823 = vpop.f32.mrb[0].mxu0
      %v824 = vadd.f32 0.0, %v823
      %v825 = vpop.f32.mrb[0].mxu0
      %v826 = vpop.f32.mrb[0].mxu0
      %v827 = vadd.f32 0.0, %v826
      %v828 = vpop.f32.mrb[0].mxu0
      %829 = vdwg.mxu0
      %v830 = vsel %vm780, %v824, -1e+30
      %v831 = vsel %vm781, %v827, -1e+30
      %vm832 = vcmask 130048
      %v833 = vsel %vm832, %v830, -inf
      %834 = vmax.xlane.f32.xlu0 %v833
      %v835 = vpop.xlane.xlu0 %834
      %v836 = vsel %vm832, %v831, -inf
      %837 = vmax.xlane.f32.xlu0 %v836
      %v838 = vpop.xlane.xlu0 %837
      %v839 = vsub.f32 %v830, %v835
      %v840 = vsub.f32 %v831, %v838
      %v841 = vmul.f32 %v839, 1.442695
      %v842 = vpow.pop %v841
      %v843 = vmul.f32 %v840, 1.442695
      %v844 = vpow.pop %v843
      %v845 = vsel %vm832, %v842, 0.0
      %846 = vadd.xlane.f32.xlu0 %v845
      %v847 = vpop.xlane.xlu0 %846
      %v848 = vsel %vm832, %v844, 0.0
      %849 = vadd.xlane.f32.xlu0 %v848
      %v850 = vpop.xlane.xlu0 %849
      %v851 = vrcp.pop %v847
      %v852 = vrcp.pop %v850
      %v853 = vmul.f32 %v842, %v851
      %v854 = vmul.f32 %v844, %v852
      %v855 = vpack.c.bf16 %v854, %v853
      %v857 = vsel %vm832, %v855, 0
      %859 = vmatprep.subr.bf16.mxu0 0
      %860 = vmatpush1.bf16.msra.mxu0 %v774
      %861 = vmatprep.subr.bf16.mxu0 0
      %862 = vmatpush1.bf16.msra.mxu0 0
      %863 = vmatprep.subr.bf16.mxu0 0
      %864 = vmatpush1.bf16.msra.mxu0 0
      %865 = vmatprep.subr.bf16.mxu0 0
      %866 = vmatpush1.bf16.msra.mxu0 0
      %867 = vmatprep.subr.bf16.mxu0 0
      %868 = vmatpush1.bf16.msra.mxu0 0
      %869 = vmatprep.subr.bf16.mxu0 0
      %870 = vmatpush1.bf16.msra.mxu0 0
      %871 = vmatprep.subr.bf16.mxu0 0
      %872 = vmatpush1.bf16.msra.mxu0 0
      %873 = vmatprep.subr.bf16.mxu0 0
      %874 = vmatpush1.bf16.msra.mxu0 0
      %875 = vmatprep.subr.bf16.mxu0 0
      %876 = vmatpush1.bf16.msra.mxu0 0
      %877 = vmatprep.subr.bf16.mxu0 0
      %878 = vmatpush1.bf16.msra.mxu0 0
      %879 = vmatprep.subr.bf16.mxu0 0
      %880 = vmatpush1.bf16.msra.mxu0 0
      %881 = vmatprep.subr.bf16.mxu0 0
      %882 = vmatpush1.bf16.msra.mxu0 0
      %883 = vmatprep.subr.bf16.mxu0 0
      %884 = vmatpush1.bf16.msra.mxu0 0
      %885 = vmatprep.subr.bf16.mxu0 0
      %886 = vmatpush1.bf16.msra.mxu0 0
      %887 = vmatprep.subr.bf16.mxu0 0
      %888 = vmatpush1.bf16.msra.mxu0 0
      %889 = vmatprep.subr.bf16.mxu0 0
      %890 = vmatpush1.bf16.msra.mxu0 0
      %891 = vmatprep.mubr.bf16.mxu0 0
      %892 = vmatmul.mubr.bf16.gmra.mrb[0].mxu0 %v857
      %v893 = vpop.f32.mrb[0].mxu0
      %v894 = vadd.f32 0.0, %v893
      %v895 = vpop.f32.mrb[0].mxu0
      %v896 = vpop.f32.mrb[0].mxu0
      %v897 = vadd.f32 0.0, %v896
      %v898 = vpop.f32.mrb[0].mxu0
      %899 = vdwg.mxu0
      %901 = vrot.lane.b32.xlu0 %v548, 96
      %v902 = vpop.permute.xlu0 %901
      %904 = vrot.lane.b32.xlu0 %v661, 96
      %v905 = vpop.permute.xlu0 %904
      %v907 = vsel %vm782, %v902, 0
      %v910 = vsel %vm782, %v905, 0
      %912 = vmatprep.subr.bf16.mxu0 0
      %913 = vmatpush1.bf16.xpose.msra.mxu0 %v910
      %914 = vmatprep.subr.bf16.mxu0 0
      %915 = vmatpush1.bf16.xpose.msra.mxu0 0
      %916 = vmatprep.subr.bf16.mxu0 0
      %917 = vmatpush1.bf16.xpose.msra.mxu0 0
      %918 = vmatprep.subr.bf16.mxu0 0
      %919 = vmatpush1.bf16.xpose.msra.mxu0 0
      %920 = vmatprep.subr.bf16.mxu0 0
      %921 = vmatpush1.bf16.xpose.msra.mxu0 0
      %922 = vmatprep.subr.bf16.mxu0 0
      %923 = vmatpush1.bf16.xpose.msra.mxu0 0
      %924 = vmatprep.subr.bf16.mxu0 0
      %925 = vmatpush1.bf16.xpose.msra.mxu0 0
      %926 = vmatprep.subr.bf16.mxu0 0
      %927 = vmatpush1.bf16.xpose.msra.mxu0 0
      %928 = vmatprep.subr.bf16.mxu0 0
      %929 = vmatpush1.bf16.xpose.msra.mxu0 0
      %930 = vmatprep.subr.bf16.mxu0 0
      %931 = vmatpush1.bf16.xpose.msra.mxu0 0
      %932 = vmatprep.subr.bf16.mxu0 0
      %933 = vmatpush1.bf16.xpose.msra.mxu0 0
      %934 = vmatprep.subr.bf16.mxu0 0
      %935 = vmatpush1.bf16.xpose.msra.mxu0 0
      %936 = vmatprep.subr.bf16.mxu0 0
      %937 = vmatpush1.bf16.xpose.msra.mxu0 0
      %938 = vmatprep.subr.bf16.mxu0 0
      %939 = vmatpush1.bf16.xpose.msra.mxu0 0
      %940 = vmatprep.subr.bf16.mxu0 0
      %941 = vmatpush1.bf16.xpose.msra.mxu0 0
      %942 = vmatprep.subr.bf16.mxu0 0
      %943 = vmatpush1.bf16.xpose.msra.mxu0 0
      %944 = vmatprep.mubr.bf16.mxu0 0
      %945 = vmatmul.mubr.bf16.gmra.mrb[0].mxu0 %v907
      %v946 = vpop.f32.mrb[0].mxu0
      %v947 = vadd.f32 0.0, %v946
      %v948 = vpop.f32.mrb[0].mxu0
      %v949 = vpop.f32.mrb[0].mxu0
      %v950 = vadd.f32 0.0, %v949
      %v951 = vpop.f32.mrb[0].mxu0
      %952 = vdwg.mxu0
      %v953 = vsel %vm780, %v947, -1e+30
      %v954 = vsel %vm781, %v950, -1e+30
      %v955 = vsel %vm832, %v953, -inf
      %956 = vmax.xlane.f32.xlu0 %v955
      %v957 = vpop.xlane.xlu0 %956
      %v958 = vsel %vm832, %v954, -inf
      %959 = vmax.xlane.f32.xlu0 %v958
      %v960 = vpop.xlane.xlu0 %959
      %v961 = vsub.f32 %v953, %v957
      %v962 = vsub.f32 %v954, %v960
      %v963 = vmul.f32 %v961, 1.442695
      %v964 = vpow.pop %v963
      %v965 = vmul.f32 %v962, 1.442695
      %v966 = vpow.pop %v965
      %v967 = vsel %vm832, %v964, 0.0
      %968 = vadd.xlane.f32.xlu0 %v967
      %v969 = vpop.xlane.xlu0 %968
      %v970 = vsel %vm832, %v966, 0.0
      %971 = vadd.xlane.f32.xlu0 %v970
      %v972 = vpop.xlane.xlu0 %971
      %v973 = vrcp.pop %v969
      %v974 = vrcp.pop %v972
      %v975 = vmul.f32 %v964, %v973
      %v976 = vmul.f32 %v966, %v974
      %v977 = vpack.c.bf16 %v976, %v975
      %979 = vrot.lane.b32.xlu0 %v774, 96
      %v980 = vpop.permute.xlu0 %979
      %v983 = vsel %vm832, %v977, 0
      %985 = vmatprep.subr.bf16.mxu0 0
      %986 = vmatpush1.bf16.msra.mxu0 %v980
      %987 = vmatprep.subr.bf16.mxu0 0
      %988 = vmatpush1.bf16.msra.mxu0 0
      %989 = vmatprep.subr.bf16.mxu0 0
      %990 = vmatpush1.bf16.msra.mxu0 0
      %991 = vmatprep.subr.bf16.mxu0 0
      %992 = vmatpush1.bf16.msra.mxu0 0
      %993 = vmatprep.subr.bf16.mxu0 0
      %994 = vmatpush1.bf16.msra.mxu0 0
      %995 = vmatprep.subr.bf16.mxu0 0
      %996 = vmatpush1.bf16.msra.mxu0 0
      %997 = vmatprep.subr.bf16.mxu0 0
      %998 = vmatpush1.bf16.msra.mxu0 0
      %999 = vmatprep.subr.bf16.mxu0 0
      %1000 = vmatpush1.bf16.msra.mxu0 0
      %1001 = vmatprep.subr.bf16.mxu0 0
      %1002 = vmatpush1.bf16.msra.mxu0 0
      %1003 = vmatprep.subr.bf16.mxu0 0
      %1004 = vmatpush1.bf16.msra.mxu0 0
      %1005 = vmatprep.subr.bf16.mxu0 0
      %1006 = vmatpush1.bf16.msra.mxu0 0
      %1007 = vmatprep.subr.bf16.mxu0 0
      %1008 = vmatpush1.bf16.msra.mxu0 0
      %1009 = vmatprep.subr.bf16.mxu0 0
      %1010 = vmatpush1.bf16.msra.mxu0 0
      %1011 = vmatprep.subr.bf16.mxu0 0
      %1012 = vmatpush1.bf16.msra.mxu0 0
      %1013 = vmatprep.subr.bf16.mxu0 0
      %1014 = vmatpush1.bf16.msra.mxu0 0
      %1015 = vmatprep.subr.bf16.mxu0 0
      %1016 = vmatpush1.bf16.msra.mxu0 0
      %1017 = vmatprep.mubr.bf16.mxu0 0
      %1018 = vmatmul.mubr.bf16.gmra.mrb[0].mxu0 %v983
      %v1019 = vpop.f32.mrb[0].mxu0
      %v1020 = vadd.f32 0.0, %v1019
      %v1021 = vpop.f32.mrb[0].mxu0
      %v1022 = vpop.f32.mrb[0].mxu0
      %v1023 = vadd.f32 0.0, %v1022
      %v1024 = vpop.f32.mrb[0].mxu0
      %1025 = vdwg.mxu0
      %1026 = vrot.lane.b32.xlu0 %v548, 64
      %v1027 = vpop.permute.xlu0 %1026
      %1028 = vrot.lane.b32.xlu0 %v661, 64
      %v1029 = vpop.permute.xlu0 %1028
      %v1031 = vsel %vm782, %v1027, 0
      %v1034 = vsel %vm782, %v1029, 0
      %1036 = vmatprep.subr.bf16.mxu0 0
      %1037 = vmatpush1.bf16.xpose.msra.mxu0 %v1034
      %1038 = vmatprep.subr.bf16.mxu0 0
      %1039 = vmatpush1.bf16.xpose.msra.mxu0 0
      %1040 = vmatprep.subr.bf16.mxu0 0
      %1041 = vmatpush1.bf16.xpose.msra.mxu0 0
      %1042 = vmatprep.subr.bf16.mxu0 0
      %1043 = vmatpush1.bf16.xpose.msra.mxu0 0
      %1044 = vmatprep.subr.bf16.mxu0 0
      %1045 = vmatpush1.bf16.xpose.msra.mxu0 0
      %1046 = vmatprep.subr.bf16.mxu0 0
      %1047 = vmatpush1.bf16.xpose.msra.mxu0 0
      %1048 = vmatprep.subr.bf16.mxu0 0
      %1049 = vmatpush1.bf16.xpose.msra.mxu0 0
      %1050 = vmatprep.subr.bf16.mxu0 0
      %1051 = vmatpush1.bf16.xpose.msra.mxu0 0
      %1052 = vmatprep.subr.bf16.mxu0 0
      %1053 = vmatpush1.bf16.xpose.msra.mxu0 0
      %1054 = vmatprep.subr.bf16.mxu0 0
      %1055 = vmatpush1.bf16.xpose.msra.mxu0 0
      %1056 = vmatprep.subr.bf16.mxu0 0
      %1057 = vmatpush1.bf16.xpose.msra.mxu0 0
      %1058 = vmatprep.subr.bf16.mxu0 0
      %1059 = vmatpush1.bf16.xpose.msra.mxu0 0
      %1060 = vmatprep.subr.bf16.mxu0 0
      %1061 = vmatpush1.bf16.xpose.msra.mxu0 0
      %1062 = vmatprep.subr.bf16.mxu0 0
      %1063 = vmatpush1.bf16.xpose.msra.mxu0 0
      %1064 = vmatprep.subr.bf16.mxu0 0
      %1065 = vmatpush1.bf16.xpose.msra.mxu0 0
      %1066 = vmatprep.subr.bf16.mxu0 0
      %1067 = vmatpush1.bf16.xpose.msra.mxu0 0
      %1068 = vmatprep.mubr.bf16.mxu0 0
      %1069 = vmatmul.mubr.bf16.gmra.mrb[0].mxu0 %v1031
      %v1070 = vpop.f32.mrb[0].mxu0
      %v1071 = vadd.f32 0.0, %v1070
      %v1072 = vpop.f32.mrb[0].mxu0
      %v1073 = vpop.f32.mrb[0].mxu0
      %v1074 = vadd.f32 0.0, %v1073
      %v1075 = vpop.f32.mrb[0].mxu0
      %1076 = vdwg.mxu0
      %v1077 = vsel %vm780, %v1071, -1e+30
      %v1078 = vsel %vm781, %v1074, -1e+30
      %v1079 = vsel %vm832, %v1077, -inf
      %1080 = vmax.xlane.f32.xlu0 %v1079
      %v1081 = vpop.xlane.xlu0 %1080
      %v1082 = vsel %vm832, %v1078, -inf
      %1083 = vmax.xlane.f32.xlu0 %v1082
      %v1084 = vpop.xlane.xlu0 %1083
      %v1085 = vsub.f32 %v1077, %v1081
      %v1086 = vsub.f32 %v1078, %v1084
      %v1087 = vmul.f32 %v1085, 1.442695
      %v1088 = vpow.pop %v1087
      %v1089 = vmul.f32 %v1086, 1.442695
      %v1090 = vpow.pop %v1089
      %v1091 = vsel %vm832, %v1088, 0.0
      %1092 = vadd.xlane.f32.xlu0 %v1091
      %v1093 = vpop.xlane.xlu0 %1092
      %v1094 = vsel %vm832, %v1090, 0.0
      %1095 = vadd.xlane.f32.xlu0 %v1094
      %v1096 = vpop.xlane.xlu0 %1095
      %v1097 = vrcp.pop %v1093
      %v1098 = vrcp.pop %v1096
      %v1099 = vmul.f32 %v1088, %v1097
      %v1100 = vmul.f32 %v1090, %v1098
      %v1101 = vpack.c.bf16 %v1100, %v1099
      %1102 = vrot.lane.b32.xlu0 %v774, 64
      %v1103 = vpop.permute.xlu0 %1102
      %v1106 = vsel %vm832, %v1101, 0
      %1108 = vmatprep.subr.bf16.mxu0 0
      %1109 = vmatpush1.bf16.msra.mxu0 %v1103
      %1110 = vmatprep.subr.bf16.mxu0 0
      %1111 = vmatpush1.bf16.msra.mxu0 0
      %1112 = vmatprep.subr.bf16.mxu0 0
      %1113 = vmatpush1.bf16.msra.mxu0 0
      %1114 = vmatprep.subr.bf16.mxu0 0
      %1115 = vmatpush1.bf16.msra.mxu0 0
      %1116 = vmatprep.subr.bf16.mxu0 0
      %1117 = vmatpush1.bf16.msra.mxu0 0
      %1118 = vmatprep.subr.bf16.mxu0 0
      %1119 = vmatpush1.bf16.msra.mxu0 0
      %1120 = vmatprep.subr.bf16.mxu0 0
      %1121 = vmatpush1.bf16.msra.mxu0 0
      %1122 = vmatprep.subr.bf16.mxu0 0
      %1123 = vmatpush1.bf16.msra.mxu0 0
      %1124 = vmatprep.subr.bf16.mxu0 0
      %1125 = vmatpush1.bf16.msra.mxu0 0
      %1126 = vmatprep.subr.bf16.mxu0 0
      %1127 = vmatpush1.bf16.msra.mxu0 0
      %1128 = vmatprep.subr.bf16.mxu0 0
      %1129 = vmatpush1.bf16.msra.mxu0 0
      %1130 = vmatprep.subr.bf16.mxu0 0
      %1131 = vmatpush1.bf16.msra.mxu0 0
      %1132 = vmatprep.subr.bf16.mxu0 0
      %1133 = vmatpush1.bf16.msra.mxu0 0
      %1134 = vmatprep.subr.bf16.mxu0 0
      %1135 = vmatpush1.bf16.msra.mxu0 0
      %1136 = vmatprep.subr.bf16.mxu0 0
      %1137 = vmatpush1.bf16.msra.mxu0 0
      %1138 = vmatprep.subr.bf16.mxu0 0
      %1139 = vmatpush1.bf16.msra.mxu0 0
      %1140 = vmatprep.mubr.bf16.mxu0 0
      %1141 = vmatmul.mubr.bf16.gmra.mrb[0].mxu0 %v1106
      %v1142 = vpop.f32.mrb[0].mxu0
      %v1143 = vadd.f32 0.0, %v1142
      %v1144 = vpop.f32.mrb[0].mxu0
      %v1145 = vpop.f32.mrb[0].mxu0
      %v1146 = vadd.f32 0.0, %v1145
      %v1147 = vpop.f32.mrb[0].mxu0
      %1148 = vdwg.mxu0
      %1149 = vrot.lane.b32.xlu0 %v548, 32
      %v1150 = vpop.permute.xlu0 %1149
      %1151 = vrot.lane.b32.xlu0 %v661, 32
      %v1152 = vpop.permute.xlu0 %1151
      %v1154 = vsel %vm782, %v1150, 0
      %v1157 = vsel %vm782, %v1152, 0
      %1159 = vmatprep.subr.bf16.mxu0 0
      %1160 = vmatpush1.bf16.xpose.msra.mxu0 %v1157
      %1161 = vmatprep.subr.bf16.mxu0 0
      %1162 = vmatpush1.bf16.xpose.msra.mxu0 0
      %1163 = vmatprep.subr.bf16.mxu0 0
      %1164 = vmatpush1.bf16.xpose.msra.mxu0 0
      %1165 = vmatprep.subr.bf16.mxu0 0
      %1166 = vmatpush1.bf16.xpose.msra.mxu0 0
      %1167 = vmatprep.subr.bf16.mxu0 0
      %1168 = vmatpush1.bf16.xpose.msra.mxu0 0
      %1169 = vmatprep.subr.bf16.mxu0 0
      %1170 = vmatpush1.bf16.xpose.msra.mxu0 0
      %1171 = vmatprep.subr.bf16.mxu0 0
      %1172 = vmatpush1.bf16.xpose.msra.mxu0 0
      %1173 = vmatprep.subr.bf16.mxu0 0
      %1174 = vmatpush1.bf16.xpose.msra.mxu0 0
      %1175 = vmatprep.subr.bf16.mxu0 0
      %1176 = vmatpush1.bf16.xpose.msra.mxu0 0
      %1177 = vmatprep.subr.bf16.mxu0 0
      %1178 = vmatpush1.bf16.xpose.msra.mxu0 0
      %1179 = vmatprep.subr.bf16.mxu0 0
      %1180 = vmatpush1.bf16.xpose.msra.mxu0 0
      %1181 = vmatprep.subr.bf16.mxu0 0
      %1182 = vmatpush1.bf16.xpose.msra.mxu0 0
      %1183 = vmatprep.subr.bf16.mxu0 0
      %1184 = vmatpush1.bf16.xpose.msra.mxu0 0
      %1185 = vmatprep.subr.bf16.mxu0 0
      %1186 = vmatpush1.bf16.xpose.msra.mxu0 0
      %1187 = vmatprep.subr.bf16.mxu0 0
      %1188 = vmatpush1.bf16.xpose.msra.mxu0 0
      %1189 = vmatprep.subr.bf16.mxu0 0
      %1190 = vmatpush1.bf16.xpose.msra.mxu0 0
      %1191 = vmatprep.mubr.bf16.mxu0 0
      %1192 = vmatmul.mubr.bf16.gmra.mrb[0].mxu0 %v1154
      %v1193 = vpop.f32.mrb[0].mxu0
      %v1194 = vadd.f32 0.0, %v1193
      %v1195 = vpop.f32.mrb[0].mxu0
      %v1196 = vpop.f32.mrb[0].mxu0
      %v1197 = vadd.f32 0.0, %v1196
      %v1198 = vpop.f32.mrb[0].mxu0
      %1199 = vdwg.mxu0
      %v1200 = vsel %vm780, %v1194, -1e+30
      %v1201 = vsel %vm781, %v1197, -1e+30
      %v1202 = vsel %vm832, %v1200, -inf
      %1203 = vmax.xlane.f32.xlu0 %v1202
      %v1204 = vpop.xlane.xlu0 %1203
      %v1205 = vsel %vm832, %v1201, -inf
      %1206 = vmax.xlane.f32.xlu0 %v1205
      %v1207 = vpop.xlane.xlu0 %1206
      %v1208 = vsub.f32 %v1200, %v1204
      %v1209 = vsub.f32 %v1201, %v1207
      %v1210 = vmul.f32 %v1208, 1.442695
      %v1211 = vpow.pop %v1210
      %v1212 = vmul.f32 %v1209, 1.442695
      %v1213 = vpow.pop %v1212
      %v1214 = vsel %vm832, %v1211, 0.0
      %1215 = vadd.xlane.f32.xlu0 %v1214
      %v1216 = vpop.xlane.xlu0 %1215
      %v1217 = vsel %vm832, %v1213, 0.0
      %1218 = vadd.xlane.f32.xlu0 %v1217
      %v1219 = vpop.xlane.xlu0 %1218
      %v1220 = vrcp.pop %v1216
      %v1221 = vrcp.pop %v1219
      %v1222 = vmul.f32 %v1211, %v1220
      %v1223 = vmul.f32 %v1213, %v1221
      %v1224 = vpack.c.bf16 %v1223, %v1222
      %1225 = vrot.lane.b32.xlu0 %v774, 32
      %v1226 = vpop.permute.xlu0 %1225
      %v1229 = vsel %vm832, %v1224, 0
      %1231 = vmatprep.subr.bf16.mxu0 0
      %1232 = vmatpush1.bf16.msra.mxu0 %v1226
      %1233 = vmatprep.subr.bf16.mxu0 0
      %1234 = vmatpush1.bf16.msra.mxu0 0
      %1235 = vmatprep.subr.bf16.mxu0 0
      %1236 = vmatpush1.bf16.msra.mxu0 0
      %1237 = vmatprep.subr.bf16.mxu0 0
      %1238 = vmatpush1.bf16.msra.mxu0 0
      %1239 = vmatprep.subr.bf16.mxu0 0
      %1240 = vmatpush1.bf16.msra.mxu0 0
      %1241 = vmatprep.subr.bf16.mxu0 0
      %1242 = vmatpush1.bf16.msra.mxu0 0
      %1243 = vmatprep.subr.bf16.mxu0 0
      %1244 = vmatpush1.bf16.msra.mxu0 0
      %1245 = vmatprep.subr.bf16.mxu0 0
      %1246 = vmatpush1.bf16.msra.mxu0 0
      %1247 = vmatprep.subr.bf16.mxu0 0
      %1248 = vmatpush1.bf16.msra.mxu0 0
      %1249 = vmatprep.subr.bf16.mxu0 0
      %1250 = vmatpush1.bf16.msra.mxu0 0
      %1251 = vmatprep.subr.bf16.mxu0 0
      %1252 = vmatpush1.bf16.msra.mxu0 0
      %1253 = vmatprep.subr.bf16.mxu0 0
      %1254 = vmatpush1.bf16.msra.mxu0 0
      %1255 = vmatprep.subr.bf16.mxu0 0
      %1256 = vmatpush1.bf16.msra.mxu0 0
      %1257 = vmatprep.subr.bf16.mxu0 0
      %1258 = vmatpush1.bf16.msra.mxu0 0
      %1259 = vmatprep.subr.bf16.mxu0 0
      %1260 = vmatpush1.bf16.msra.mxu0 0
      %1261 = vmatprep.subr.bf16.mxu0 0
      %1262 = vmatpush1.bf16.msra.mxu0 0
      %1263 = vmatprep.mubr.bf16.mxu0 0
      %1264 = vmatmul.mubr.bf16.gmra.mrb[0].mxu0 %v1229
      %v1265 = vpop.f32.mrb[0].mxu0
      %v1266 = vadd.f32 0.0, %v1265
      %v1267 = vpop.f32.mrb[0].mxu0
      %v1268 = vpop.f32.mrb[0].mxu0
      %v1269 = vadd.f32 0.0, %v1268
      %v1270 = vpop.f32.mrb[0].mxu0
      %1271 = vdwg.mxu0
      %1274 = vrot.lane.b32.xlu0 %v1020, 32
      %v1275 = vpop.permute.xlu0 %1274
      %1276 = vrot.lane.b32.xlu0 %v1023, 32
      %v1277 = vpop.permute.xlu0 %1276
      %1282 = vrot.lane.b32.xlu0 %v1143, 64
      %v1283 = vpop.permute.xlu0 %1282
      %1284 = vrot.lane.b32.xlu0 %v1146, 64
      %v1285 = vpop.permute.xlu0 %1284
      %1290 = vrot.lane.b32.xlu0 %v1266, 96
      %v1291 = vpop.permute.xlu0 %1290
      %1292 = vrot.lane.b32.xlu0 %v1269, 96
      %v1293 = vpop.permute.xlu0 %1292
      %v1296 = vsel %vm782, %v894, %v1275
      %v1297 = vsel %vm782, %v897, %v1277
      %vm1298 = vcmask 523264
      %v1299 = vsel %vm1298, %v1296, %v1283
      %v1300 = vsel %vm1298, %v1297, %v1285
      %vm1301 = vcmask 785408
      %v1302 = vsel %vm1301, %v1299, %v1291
      %v1303 = vsel %vm1301, %v1300, %v1293
      %v1304 = vpack.c.bf16 %v1303, %v1302
      %v1305 = vld [vmem:[%s9] sm:$0xf]
      %v1306 = vld [vmem:[%s9 + $0x4] sm:$0xf]
      %v1307 = vld [vmem:[%s9 + $0x8] sm:$0xf]
      %v1308 = vld [vmem:[%s9 + $0xc] sm:$0xf]
      %v1309 = vld [vmem:[%s9 + $0x10] sm:$0xf]
      %v1310 = vld [vmem:[%s9 + $0x14] sm:$0xf]
      %v1311 = vld [vmem:[%s9 + $0x18] sm:$0xf]
      %v1312 = vld [vmem:[%s9 + $0x1c] sm:$0xf]
      %v1313 = vld [vmem:[%s9 + $0x20] sm:$0xf]
      %v1314 = vld [vmem:[%s9 + $0x24] sm:$0xf]
      %v1315 = vld [vmem:[%s9 + $0x28] sm:$0xf]
      %v1316 = vld [vmem:[%s9 + $0x2c] sm:$0xf]
      %v1317 = vld [vmem:[%s9 + $0x30] sm:$0xf]
      %v1318 = vld [vmem:[%s9 + $0x34] sm:$0xf]
      %v1319 = vld [vmem:[%s9 + $0x38] sm:$0xf]
      %v1320 = vld [vmem:[%s9 + $0x3c] sm:$0xf]
      %v1321 = vld [vmem:[%s10] sm:$0x1]
      %v1323 = vlaneseq
      %v1324 = vshrl.u32 %v1323, 7
      %v1325 = vsub.s32 0, %v1324
      %v1326 = vrot.slane %v1321, %v1325
      %v1344 = vunpack.c.l.b16 %v1305
      %v1345 = vunpack.c.l.b16 %v1306
      %v1346 = vunpack.c.l.b16 %v1307
      %v1347 = vunpack.c.l.b16 %v1308
      %v1348 = vunpack.c.l.b16 %v1309
      %v1349 = vunpack.c.l.b16 %v1310
      %v1350 = vunpack.c.l.b16 %v1311
      %v1351 = vunpack.c.l.b16 %v1312
      %v1352 = vunpack.c.l.b16 %v1313
      %v1353 = vunpack.c.l.b16 %v1314
      %v1354 = vunpack.c.l.b16 %v1315
      %v1355 = vunpack.c.l.b16 %v1316
      %v1356 = vunpack.c.l.b16 %v1317
      %v1357 = vunpack.c.l.b16 %v1318
      %v1358 = vunpack.c.l.b16 %v1319
      %v1359 = vunpack.c.l.b16 %v1320
      %v1360 = vpack.c.b16 %v1345, %v1344
      %v1361 = vpack.c.b16 %v1347, %v1346
      %v1362 = vpack.c.b16 %v1349, %v1348
      %v1363 = vpack.c.b16 %v1351, %v1350
      %v1364 = vpack.c.b16 %v1353, %v1352
      %v1365 = vpack.c.b16 %v1355, %v1354
      %v1366 = vpack.c.b16 %v1357, %v1356
      %v1367 = vpack.c.b16 %v1359, %v1358
      %1376 = vmatprep.subr.bf16.mxu0 0
      %1377 = vmatpush1.bf16.msra.mxu0 %v1360
      %1378 = vmatprep.subr.bf16.mxu0 0
      %1379 = vmatpush1.bf16.msra.mxu0 %v1361
      %1380 = vmatprep.subr.bf16.mxu0 0
      %1381 = vmatpush1.bf16.msra.mxu0 %v1362
      %1382 = vmatprep.subr.bf16.mxu0 0
      %1383 = vmatpush1.bf16.msra.mxu0 %v1363
      %1384 = vmatprep.subr.bf16.mxu0 0
      %1385 = vmatpush1.bf16.msra.mxu0 %v1364
      %1386 = vmatprep.subr.bf16.mxu0 0
      %1387 = vmatpush1.bf16.msra.mxu0 %v1365
      %1388 = vmatprep.subr.bf16.mxu0 0
      %1389 = vmatpush1.bf16.msra.mxu0 %v1366
      %1390 = vmatprep.subr.bf16.mxu0 0
      %1391 = vmatpush1.bf16.msra.mxu0 %v1367
      %1392 = vmatprep.subr.bf16.mxu0 0
      %1393 = vmatpush1.bf16.msra.mxu0 0
      %1394 = vmatprep.subr.bf16.mxu0 0
      %1395 = vmatpush1.bf16.msra.mxu0 0
      %1396 = vmatprep.subr.bf16.mxu0 0
      %1397 = vmatpush1.bf16.msra.mxu0 0
      %1398 = vmatprep.subr.bf16.mxu0 0
      %1399 = vmatpush1.bf16.msra.mxu0 0
      %1400 = vmatprep.subr.bf16.mxu0 0
      %1401 = vmatpush1.bf16.msra.mxu0 0
      %1402 = vmatprep.subr.bf16.mxu0 0
      %1403 = vmatpush1.bf16.msra.mxu0 0
      %1404 = vmatprep.subr.bf16.mxu0 0
      %1405 = vmatpush1.bf16.msra.mxu0 0
      %1406 = vmatprep.subr.bf16.mxu0 0
      %1407 = vmatpush1.bf16.msra.mxu0 0
      %1408 = vmatprep.mubr.bf16.mxu0 0
      %1409 = vmatmul.mubr.bf16.gmra.mrb[0].mxu0 %v1304
      %v1410 = vpop.f32.mrb[0].mxu0
      %v1411 = vadd.f32 %v1326, %v1410
      %v1412 = vpop.f32.mrb[0].mxu0
      %v1413 = vpop.f32.mrb[0].mxu0
      %v1414 = vadd.f32 %v1326, %v1413
      %v1415 = vpop.f32.mrb[0].mxu0
      %1416 = vdwg.mxu0
      %v1417 = vadd.f32 %v390, %v1411
      %v1418 = vadd.f32 %v391, %v1414
      %v1419 = vpack.c.bf16 %v1418, %v1417
      %v1421 = vunpack.c.l.b16 %v1419
      %v1422 = vunpack.c.h.b16 %v1419
      %v1423 = vpack.c.b16 %v1421, %v1421
      %v1424 = vpack.c.b16 %v1422, %v1422
      %1427 = vst [vmem:[%s386] sm:$0xf] %v1423
      %1428 = vst [vmem:[%s386 + $0x4] sm:$0xf] %v1424
      %p1429 = scmp.lt.s32.totalorder %s22, 1
      %s1430 = scalar_select %p1429, %s22, 1
      %s1431 = smul.addr %s1430, 2
      %s1432 = smul.addr %s1431, 4
      %s1433 = scalar_lea.vmem %s11, %s1432
      // Predicated region
      $region65: #{lairgpt_forward.7} parent=63 // pred_check
        %p1434 = pneg %p276
      $region66: #{lairgpt_forward.7} parent=63 // pred_check_branch
        %1436 = sbr.rel (%p1434) target = $region68
      $region67: #{lairgpt_forward.7} parent=63 // pred_region
        _
      $region68: #{lairgpt_forward.7} parent=63 // pred_fallthru
        _
    $region64: #{lairgpt_forward.7} parent=5 // pred_fallthru
      _
    %p1437 = scmp.le.s32.totalorder 2, %s17
    // Predicated region
    $region69: #{lairgpt_forward.7} parent=5 // pred_check
      %p1438 = pneg %p1437
    $region70: #{lairgpt_forward.7} parent=5 // pred_check_branch
      %1440 = sbr.rel (%p1438) target = $region72
    $region71: #{lairgpt_forward.7} parent=5 // pred_region
      %s1441 = ssub.s32 %s17, 2
      // Predicated region
      $region73: #{lairgpt_forward.7} parent=71 // pred_check
        %p1442 = pneg %p282
      $region74: #{lairgpt_forward.7} parent=71 // pred_check_branch
        %1444 = sbr.rel (%p1442) target = $region76
      $region75: #{lairgpt_forward.7} parent=71 // pred_region
        %p1445 = scmp.lt.s32.totalorder %s23, 1
        %s1446 = scalar_select %p1445, %s23, 1
        %s1447 = smul.addr %s1446, 2
        %s1448 = smul.addr %s1447, 4
        %s1449 = scalar_lea.vmem %s11, %s1448
      $region76: #{lairgpt_forward.7} parent=71 // pred_fallthru
        _
    $region72: #{lairgpt_forward.7} parent=5 // pred_fallthru
      _
  $region6: #{lairgpt_forward.7} parent=0 // loop_footer
    %s21 = sadd.s32 1, %s17
  $region7: #{lairgpt_forward.7} parent=0 // loop_footer_branch
    %16 = sbr.rel target = $region3
  $region8: #{lairgpt_forward.7} parent=0 // loop_exit
    _

// kernel: lairgpt_forward.5
$region0: #{lairgpt_forward.5}
  #allocation0 [shape = 'u32[]', space=smem, size = 0x4, offset = 0x4, fixed_abs, tag = 'smem constant byte address 0x4 - core index']
  #allocation1 [shape = 'u32[144,128]{1,0:T(1,128)}', space=vmem, size = 0x12000, scoped, tag = 'internal scratch']
  %s0 = inlined_call_operand.vmem [shape: bf16[2,16,128], index: 0, kind: input, shape index: {}, may-alias: {0,11}]
  %s1 = inlined_call_operand.vmem [shape: f32[1,128], index: 1, kind: input, shape index: {}]
  %s2 = inlined_call_operand.vmem [shape: f32[1,128], index: 2, kind: input, shape index: {}]
  %s3 = inlined_call_operand.vmem [shape: bf16[128,128], index: 3, kind: input, shape index: {}]
  %s4 = inlined_call_operand.vmem [shape: bf16[128,128], index: 4, kind: input, shape index: {}]
  %s5 = inlined_call_operand.vmem [shape: bf16[128,128], index: 5, kind: input, shape index: {}]
  %s6 = inlined_call_operand.vmem [shape: f32[1,128], index: 6, kind: input, shape index: {}]
  %s7 = inlined_call_operand.hbm [shape: f32[1,128], index: 7, kind: input, shape index: {}]
  %s8 = inlined_call_operand.vmem [shape: f32[1,128], index: 8, kind: input, shape index: {}]
  %s9 = inlined_call_operand.hbm [shape: bf16[128,128], index: 9, kind: input, shape index: {}]
  %s10 = inlined_call_operand.hbm [shape: f32[1,128], index: 10, kind: input, shape index: {}]
  %s11 = inlined_call_operand.vmem [shape: bf16[2,16,128], index: 11, kind: output, shape index: {}, may-alias: {0,11}]
  %s12 = sld [smem:[#allocation0]]
  $region89: #{lairgpt_forward.5} parent=0
    _
  %s14 = ssub.s32 1, %s12
  %s15 = scalar_select 0, %s14, %s12
  $region1: #{lairgpt_forward.5} parent=0
    #allocation2 [shape = 'u8[512]{0}', space=vmem, size = 0x400, scoped, tag = 'input window, operand 7, single buffered']
    #allocation3 [shape = 's32[2]{0}', space=sflag, size = 0x8, scoped, tag = 'scoped memory for lairgpt_forward.5']
    #allocation4 [shape = 'u8[32768]{0}', space=vmem, size = 0x8000, scoped, tag = 'input window, operand 9, single buffered']
    #allocation5 [shape = 's32[1]{0}', space=sflag, size = 0x4, scoped, tag = 'scoped memory for lairgpt_forward.5']
    #allocation6 [shape = 'u8[512]{0}', space=vmem, size = 0x400, scoped, tag = 'input window, operand 10, single buffered']
    %16 = vsyncpa [#allocation3], 0
    %17 = vsyncpa [#allocation5], 0
    loop: start=0, step=1, limit=4
    $region2: #{lairgpt_forward.5} parent=1 // loop_pre_header
      _
    $region3: #{lairgpt_forward.5} parent=1 // loop_header
      %s19 = sphi 0, %s23
      %p20 = scmp.ge.s32.totalorder %s19, 4
      %s29 = sphi 0, %s31
      %s32 = sphi 0, %s29
      %s33 = sphi 0, %s32
      %s49 = sphi 0, %s33
      %s53 = sphi 0, %s53
      %s55 = sphi 0, %s53
      %s56 = sphi 0, %s55
      %s70 = sphi 0, %s56
      %s74 = sphi 0, %s74
      %s76 = sphi 0, %s74
      %s77 = sphi 0, %s76
      %s91 = sphi 0, %s77
      %s95 = sphi 0, %s95
      %s97 = sphi 0, %s95
      %s98 = sphi 0, %s97
      %s112 = sphi 0, %s98
      %s116 = sphi 0, %s116
      %s118 = sphi 0, %s116
      %s119 = sphi 0, %s118
      %s133 = sphi 0, %s119
      %s137 = sphi 0, %s137
      %s139 = sphi 0, %s137
      %s140 = sphi 0, %s139
      %s154 = sphi 0, %s140
      %s158 = sphi 0, %s158
      %s160 = sphi 0, %s158
      %s161 = sphi 0, %s160
      %s175 = sphi 0, %s161
      %s179 = sphi 0, %s179
      %s181 = sphi 0, %s179
      %s182 = sphi 0, %s181
      %s196 = sphi 0, %s182
      %s200 = sphi 0, %s200
      %s202 = sphi 0, %s200
      %s203 = sphi 0, %s202
      %s217 = sphi 0, %s203
      %s221 = sphi 0, %s221
      %s223 = sphi 0, %s221
      %s224 = sphi 0, %s223
      %s238 = sphi 0, %s224
      %s242 = sphi 0, %s242
      %s244 = sphi 0, %s242
      %s245 = sphi 0, %s244
      %s259 = sphi 0, %s245
      %s265 = sphi 0, %s267
      %s268 = sphi 0, %s265
      %s269 = sphi 0, %s268
      %s285 = sphi 0, %s269
    $region4: #{lairgpt_forward.5} parent=1 // loop_header_branch
      %22 = sbr.rel (%p20) target = $region8
    $region5: #{lairgpt_forward.5} parent=1 // loop_body
      %s24 = ssub.s32 %s19, 1
      %s25 = ssub.s32 %s19, 2
      %s26 = sadd.s32 %s19, 1
      %s27 = ssub.s32 %s19, %s26
      %p28 = scmp.eq.s32.totalorder %s27, 0
      %s30 = sadd.s32 %s29, 1
      %s31 = scalar_select %p28, %s29, %s30
      %p34 = pneg %p28
      %p35 = scmp.eq.s32.totalorder %s19, 1
      %p36 = por %p34, %p35
      %p37 = scmp.ne.s32.totalorder %s29, %s32
      %p38 = scmp.eq.s32.totalorder %s19, 0
      %p39 = por %p37, %p38
      %p40 = scmp.ne.s32.totalorder %s29, %s32
      %p41 = scmp.eq.s32.totalorder %s24, 1
      %p42 = por %p40, %p41
      %p43 = scmp.ne.s32.totalorder %s32, %s33
      %p44 = scmp.eq.s32.totalorder %s24, 0
      %p45 = por %p43, %p44
      %p46 = scmp.ne.s32.totalorder %s32, %s33
      %p47 = scmp.eq.s32.totalorder %s25, 1
      %p48 = por %p46, %p47
      %p50 = scmp.ne.s32.totalorder %s33, %s49
      %p51 = scmp.eq.s32.totalorder %s25, 0
      %p52 = por %p50, %p51
      %s54 = sadd.s32 %s53, 1
      %p57 = scmp.eq.s32.totalorder %s19, 1
      %p58 = scmp.ne.s32.totalorder %s53, %s55
      %p59 = scmp.eq.s32.totalorder %s19, 0
      %p60 = por %p58, %p59
      %p61 = scmp.ne.s32.totalorder %s53, %s55
      %p62 = scmp.eq.s32.totalorder %s24, 1
      %p63 = por %p61, %p62
      %p64 = scmp.ne.s32.totalorder %s55, %s56
      %p65 = scmp.eq.s32.totalorder %s24, 0
      %p66 = por %p64, %p65
      %p67 = scmp.ne.s32.totalorder %s55, %s56
      %p68 = scmp.eq.s32.totalorder %s25, 1
      %p69 = por %p67, %p68
      %p71 = scmp.ne.s32.totalorder %s56, %s70
      %p72 = scmp.eq.s32.totalorder %s25, 0
      %p73 = por %p71, %p72
      %s75 = sadd.s32 %s74, 1
      %p78 = scmp.eq.s32.totalorder %s19, 1
      %p79 = scmp.ne.s32.totalorder %s74, %s76
      %p80 = scmp.eq.s32.totalorder %s19, 0
      %p81 = por %p79, %p80
      %p82 = scmp.ne.s32.totalorder %s74, %s76
      %p83 = scmp.eq.s32.totalorder %s24, 1
      %p84 = por %p82, %p83
      %p85 = scmp.ne.s32.totalorder %s76, %s77
      %p86 = scmp.eq.s32.totalorder %s24, 0
      %p87 = por %p85, %p86
      %p88 = scmp.ne.s32.totalorder %s76, %s77
      %p89 = scmp.eq.s32.totalorder %s25, 1
      %p90 = por %p88, %p89
      %p92 = scmp.ne.s32.totalorder %s77, %s91
      %p93 = scmp.eq.s32.totalorder %s25, 0
      %p94 = por %p92, %p93
      %s96 = sadd.s32 %s95, 1
      %p99 = scmp.eq.s32.totalorder %s19, 1
      %p100 = scmp.ne.s32.totalorder %s95, %s97
      %p101 = scmp.eq.s32.totalorder %s19, 0
      %p102 = por %p100, %p101
      %p103 = scmp.ne.s32.totalorder %s95, %s97
      %p104 = scmp.eq.s32.totalorder %s24, 1
      %p105 = por %p103, %p104
      %p106 = scmp.ne.s32.totalorder %s97, %s98
      %p107 = scmp.eq.s32.totalorder %s24, 0
      %p108 = por %p106, %p107
      %p109 = scmp.ne.s32.totalorder %s97, %s98
      %p110 = scmp.eq.s32.totalorder %s25, 1
      %p111 = por %p109, %p110
      %p113 = scmp.ne.s32.totalorder %s98, %s112
      %p114 = scmp.eq.s32.totalorder %s25, 0
      %p115 = por %p113, %p114
      %s117 = sadd.s32 %s116, 1
      %p120 = scmp.eq.s32.totalorder %s19, 1
      %p121 = scmp.ne.s32.totalorder %s116, %s118
      %p122 = scmp.eq.s32.totalorder %s19, 0
      %p123 = por %p121, %p122
      %p124 = scmp.ne.s32.totalorder %s116, %s118
      %p125 = scmp.eq.s32.totalorder %s24, 1
      %p126 = por %p124, %p125
      %p127 = scmp.ne.s32.totalorder %s118, %s119
      %p128 = scmp.eq.s32.totalorder %s24, 0
      %p129 = por %p127, %p128
      %p130 = scmp.ne.s32.totalorder %s118, %s119
      %p131 = scmp.eq.s32.totalorder %s25, 1
      %p132 = por %p130, %p131
      %p134 = scmp.ne.s32.totalorder %s119, %s133
      %p135 = scmp.eq.s32.totalorder %s25, 0
      %p136 = por %p134, %p135
      %s138 = sadd.s32 %s137, 1
      %p141 = scmp.eq.s32.totalorder %s19, 1
      %p142 = scmp.ne.s32.totalorder %s137, %s139
      %p143 = scmp.eq.s32.totalorder %s19, 0
      %p144 = por %p142, %p143
      %p145 = scmp.ne.s32.totalorder %s137, %s139
      %p146 = scmp.eq.s32.totalorder %s24, 1
      %p147 = por %p145, %p146
      %p148 = scmp.ne.s32.totalorder %s139, %s140
      %p149 = scmp.eq.s32.totalorder %s24, 0
      %p150 = por %p148, %p149
      %p151 = scmp.ne.s32.totalorder %s139, %s140
      %p152 = scmp.eq.s32.totalorder %s25, 1
      %p153 = por %p151, %p152
      %p155 = scmp.ne.s32.totalorder %s140, %s154
      %p156 = scmp.eq.s32.totalorder %s25, 0
      %p157 = por %p155, %p156
      %s159 = sadd.s32 %s158, 1
      %p162 = scmp.eq.s32.totalorder %s19, 1
      %p163 = scmp.ne.s32.totalorder %s158, %s160
      %p164 = scmp.eq.s32.totalorder %s19, 0
      %p165 = por %p163, %p164
      %p166 = scmp.ne.s32.totalorder %s158, %s160
      %p167 = scmp.eq.s32.totalorder %s24, 1
      %p168 = por %p166, %p167
      %p169 = scmp.ne.s32.totalorder %s160, %s161
      %p170 = scmp.eq.s32.totalorder %s24, 0
      %p171 = por %p169, %p170
      %p172 = scmp.ne.s32.totalorder %s160, %s161
      %p173 = scmp.eq.s32.totalorder %s25, 1
      %p174 = por %p172, %p173
      %p176 = scmp.ne.s32.totalorder %s161, %s175
      %p177 = scmp.eq.s32.totalorder %s25, 0
      %p178 = por %p176, %p177
      %s180 = sadd.s32 %s179, 1
      %p183 = scmp.eq.s32.totalorder %s19, 1
      %p184 = scmp.ne.s32.totalorder %s179, %s181
      %p185 = scmp.eq.s32.totalorder %s19, 0
      %p186 = por %p184, %p185
      %p187 = scmp.ne.s32.totalorder %s179, %s181
      %p188 = scmp.eq.s32.totalorder %s24, 1
      %p189 = por %p187, %p188
      %p190 = scmp.ne.s32.totalorder %s181, %s182
      %p191 = scmp.eq.s32.totalorder %s24, 0
      %p192 = por %p190, %p191
      %p193 = scmp.ne.s32.totalorder %s181, %s182
      %p194 = scmp.eq.s32.totalorder %s25, 1
      %p195 = por %p193, %p194
      %p197 = scmp.ne.s32.totalorder %s182, %s196
      %p198 = scmp.eq.s32.totalorder %s25, 0
      %p199 = por %p197, %p198
      %s201 = sadd.s32 %s200, 1
      %p204 = scmp.eq.s32.totalorder %s19, 1
      %p205 = scmp.ne.s32.totalorder %s200, %s202
      %p206 = scmp.eq.s32.totalorder %s19, 0
      %p207 = por %p205, %p206
      %p208 = scmp.ne.s32.totalorder %s200, %s202
      %p209 = scmp.eq.s32.totalorder %s24, 1
      %p210 = por %p208, %p209
      %p211 = scmp.ne.s32.totalorder %s202, %s203
      %p212 = scmp.eq.s32.totalorder %s24, 0
      %p213 = por %p211, %p212
      %p214 = scmp.ne.s32.totalorder %s202, %s203
      %p215 = scmp.eq.s32.totalorder %s25, 1
      %p216 = por %p214, %p215
      %p218 = scmp.ne.s32.totalorder %s203, %s217
      %p219 = scmp.eq.s32.totalorder %s25, 0
      %p220 = por %p218, %p219
      %s222 = sadd.s32 %s221, 1
      %p225 = scmp.eq.s32.totalorder %s19, 1
      %p226 = scmp.ne.s32.totalorder %s221, %s223
      %p227 = scmp.eq.s32.totalorder %s19, 0
      %p228 = por %p226, %p227
      %p229 = scmp.ne.s32.totalorder %s221, %s223
      %p230 = scmp.eq.s32.totalorder %s24, 1
      %p231 = por %p229, %p230
      %p232 = scmp.ne.s32.totalorder %s223, %s224
      %p233 = scmp.eq.s32.totalorder %s24, 0
      %p234 = por %p232, %p233
      %p235 = scmp.ne.s32.totalorder %s223, %s224
      %p236 = scmp.eq.s32.totalorder %s25, 1
      %p237 = por %p235, %p236
      %p239 = scmp.ne.s32.totalorder %s224, %s238
      %p240 = scmp.eq.s32.totalorder %s25, 0
      %p241 = por %p239, %p240
      %s243 = sadd.s32 %s242, 1
      %p246 = scmp.eq.s32.totalorder %s19, 1
      %p247 = scmp.ne.s32.totalorder %s242, %s244
      %p248 = scmp.eq.s32.totalorder %s19, 0
      %p249 = por %p247, %p248
      %p250 = scmp.ne.s32.totalorder %s242, %s244
      %p251 = scmp.eq.s32.totalorder %s24, 1
      %p252 = por %p250, %p251
      %p253 = scmp.ne.s32.totalorder %s244, %s245
      %p254 = scmp.eq.s32.totalorder %s24, 0
      %p255 = por %p253, %p254
      %p256 = scmp.ne.s32.totalorder %s244, %s245
      %p257 = scmp.eq.s32.totalorder %s25, 1
      %p258 = por %p256, %p257
      %p260 = scmp.ne.s32.totalorder %s245, %s259
      %p261 = scmp.eq.s32.totalorder %s25, 0
      %p262 = por %p260, %p261
      %s263 = ssub.s32 %s19, %s26
      %p264 = scmp.eq.s32.totalorder %s263, 0
      %s266 = sadd.s32 %s265, 1
      %s267 = scalar_select %p264, %s265, %s266
      %p270 = pneg %p264
      %p271 = scmp.eq.s32.totalorder %s19, 1
      %p272 = por %p270, %p271
      %p273 = scmp.ne.s32.totalorder %s265, %s268
      %p274 = scmp.eq.s32.totalorder %s19, 0
      %p275 = por %p273, %p274
      %p276 = scmp.ne.s32.totalorder %s265, %s268
      %p277 = scmp.eq.s32.totalorder %s24, 1
      %p278 = por %p276, %p277
      %p279 = scmp.ne.s32.totalorder %s268, %s269
      %p280 = scmp.eq.s32.totalorder %s24, 0
      %p281 = por %p279, %p280
      %p282 = scmp.ne.s32.totalorder %s268, %s269
      %p283 = scmp.eq.s32.totalorder %s25, 1
      %p284 = por %p282, %p283
      %p286 = scmp.ne.s32.totalorder %s269, %s285
      %p287 = scmp.eq.s32.totalorder %s25, 0
      %p288 = por %p286, %p287
      %p289 = scmp.le.s32.totalorder 1, %s19
      %p290 = scmp.lt.s32.totalorder %s19, 3
      %p291 = pnand %p289, %p290
      %p292 = pneg %p291
      // Predicated region
      $region9: #{lairgpt_forward.5} parent=5 // pred_check
        _
      $region10: #{lairgpt_forward.5} parent=5 // pred_check_branch
        %294 = sbr.rel (%p291) target = $region12
      $region11: #{lairgpt_forward.5} parent=5 // pred_region
        %s295 = ssub.s32 %s19, 1
        // Predicated region
        $region13: #{lairgpt_forward.5} parent=11 // pred_check
          %p296 = pneg %p66
        $region14: #{lairgpt_forward.5} parent=11 // pred_check_branch
          %298 = sbr.rel (%p296) target = $region16
        $region15: #{lairgpt_forward.5} parent=11 // pred_region
          _
        $region16: #{lairgpt_forward.5} parent=11 // pred_fallthru
          _
        // Predicated region
        $region17: #{lairgpt_forward.5} parent=11 // pred_check
          %p299 = pneg %p87
        $region18: #{lairgpt_forward.5} parent=11 // pred_check_branch
          %301 = sbr.rel (%p299) target = $region20
        $region19: #{lairgpt_forward.5} parent=11 // pred_region
          _
        $region20: #{lairgpt_forward.5} parent=11 // pred_fallthru
          _
        // Predicated region
        $region21: #{lairgpt_forward.5} parent=11 // pred_check
          %p302 = pneg %p108
        $region22: #{lairgpt_forward.5} parent=11 // pred_check_branch
          %304 = sbr.rel (%p302) target = $region24
        $region23: #{lairgpt_forward.5} parent=11 // pred_region
          _
        $region24: #{lairgpt_forward.5} parent=11 // pred_fallthru
          _
        // Predicated region
        $region25: #{lairgpt_forward.5} parent=11 // pred_check
          %p305 = pneg %p129
        $region26: #{lairgpt_forward.5} parent=11 // pred_check_branch
          %307 = sbr.rel (%p305) target = $region28
        $region27: #{lairgpt_forward.5} parent=11 // pred_region
          _
        $region28: #{lairgpt_forward.5} parent=11 // pred_fallthru
          _
        // Predicated region
        $region29: #{lairgpt_forward.5} parent=11 // pred_check
          %p308 = pneg %p150
        $region30: #{lairgpt_forward.5} parent=11 // pred_check_branch
          %310 = sbr.rel (%p308) target = $region32
        $region31: #{lairgpt_forward.5} parent=11 // pred_region
          _
        $region32: #{lairgpt_forward.5} parent=11 // pred_fallthru
          _
        // Predicated region
        $region33: #{lairgpt_forward.5} parent=11 // pred_check
          %p311 = pneg %p171
        $region34: #{lairgpt_forward.5} parent=11 // pred_check_branch
          %313 = sbr.rel (%p311) target = $region36
        $region35: #{lairgpt_forward.5} parent=11 // pred_region
          _
        $region36: #{lairgpt_forward.5} parent=11 // pred_fallthru
          _
        // Predicated region
        $region37: #{lairgpt_forward.5} parent=11 // pred_check
          %p314 = pneg %p192
        $region38: #{lairgpt_forward.5} parent=11 // pred_check_branch
          %316 = sbr.rel (%p314) target = $region40
        $region39: #{lairgpt_forward.5} parent=11 // pred_region
          %s318 = ssub.s32 16, 16
          %319 = vsyncadd [#allocation3], %s318
          %s321 = sshll.u32 [#allocation2], 4
          %s322 = int_to_ptr.vmem [resolvable:$true] %s321
          %324 = dma.hbm_to_vmem [thread:$0]  %s7, 16, %s322, [#allocation3]
        $region40: #{lairgpt_forward.5} parent=11 // pred_fallthru
          _
        // Predicated region
        $region41: #{lairgpt_forward.5} parent=11 // pred_check
          %p325 = pneg %p213
        $region42: #{lairgpt_forward.5} parent=11 // pred_check_branch
          %327 = sbr.rel (%p325) target = $region44
        $region43: #{lairgpt_forward.5} parent=11 // pred_region
          _
        $region44: #{lairgpt_forward.5} parent=11 // pred_fallthru
          _
        // Predicated region
        $region45: #{lairgpt_forward.5} parent=11 // pred_check
          %p328 = pneg %p234
        $region46: #{lairgpt_forward.5} parent=11 // pred_check_branch
          %330 = sbr.rel (%p328) target = $region48
        $region47: #{lairgpt_forward.5} parent=11 // pred_region
          %s332 = ssub.s32 1024, 1024
          %333 = vsyncadd [#allocation5], %s332
          %s334 = sshll.u32 [#allocation4], 4
          %s335 = int_to_ptr.vmem [resolvable:$true] %s334
          %340 = dma.hbm_to_vmem [thread:$0]  %s9, 1024, %s335, [#allocation5], 64, 64, 4
        $region48: #{lairgpt_forward.5} parent=11 // pred_fallthru
          _
        // Predicated region
        $region49: #{lairgpt_forward.5} parent=11 // pred_check
          %p341 = pneg %p255
        $region50: #{lairgpt_forward.5} parent=11 // pred_check_branch
          %343 = sbr.rel (%p341) target = $region52
        $region51: #{lairgpt_forward.5} parent=11 // pred_region
          %s345 = ssub.s32 16, 16
          %346 = vsyncadd [#allocation5], %s345
          %s348 = sshll.u32 [#allocation6], 4
          %s349 = int_to_ptr.vmem [resolvable:$true] %s348
          %351 = dma.hbm_to_vmem [thread:$0]  %s10, 16, %s349, [#allocation5]
        $region52: #{lairgpt_forward.5} parent=11 // pred_fallthru
          _
      $region12: #{lairgpt_forward.5} parent=5 // pred_fallthru
        _
      %p352 = scmp.lt.s32.totalorder %s19, 2
      // Predicated region
      $region53: #{lairgpt_forward.5} parent=5 // pred_check
        %p353 = pneg %p352
      $region54: #{lairgpt_forward.5} parent=5 // pred_check_branch
        %355 = sbr.rel (%p353) target = $region56
      $region55: #{lairgpt_forward.5} parent=5 // pred_region
        // Predicated region
        $region57: #{lairgpt_forward.5} parent=55 // pred_check
          %p356 = pneg %p39
        $region58: #{lairgpt_forward.5} parent=55 // pred_check_branch
          %358 = sbr.rel (%p356) target = $region60
        $region59: #{lairgpt_forward.5} parent=55 // pred_region
          %p359 = scmp.lt.s32.totalorder %s19, 1
          %s360 = scalar_select %p359, %s19, 1
          %s361 = smul.addr %s360, 2
          %s362 = smul.addr %s361, 4
          %s363 = scalar_lea.vmem %s0, %s362
        $region60: #{lairgpt_forward.5} parent=55 // pred_fallthru
          _
      $region56: #{lairgpt_forward.5} parent=5 // pred_fallthru
        _
      %p364 = scmp.le.s32.totalorder 1, %s19
      %p365 = scmp.lt.s32.totalorder %s19, 3
      %p366 = pnand %p364, %p365
      %p367 = pneg %p366
      // Predicated region
      $region61: #{lairgpt_forward.5} parent=5 // pred_check
        _
      $region62: #{lairgpt_forward.5} parent=5 // pred_check_branch
        %369 = sbr.rel (%p366) target = $region64
      $region63: #{lairgpt_forward.5} parent=5 // pred_region
        %s370 = ssub.s32 %s19, 1
        // Predicated region
        $region65: #{lairgpt_forward.5} parent=63 // pred_check
          %p371 = pneg %p192
        $region66: #{lairgpt_forward.5} parent=63 // pred_check_branch
          %373 = sbr.rel (%p371) target = $region68
        $region67: #{lairgpt_forward.5} parent=63 // pred_region
          %374 = dma.done [#allocation3], 16
        $region68: #{lairgpt_forward.5} parent=63 // pred_fallthru
          _
        // Predicated region
        $region69: #{lairgpt_forward.5} parent=63 // pred_check
          %p375 = pneg %p234
        $region70: #{lairgpt_forward.5} parent=63 // pred_check_branch
          %377 = sbr.rel (%p375) target = $region72
        $region71: #{lairgpt_forward.5} parent=63 // pred_region
          %378 = dma.done [#allocation5], 1024
        $region72: #{lairgpt_forward.5} parent=63 // pred_fallthru
          _
        // Predicated region
        $region73: #{lairgpt_forward.5} parent=63 // pred_check
          %p379 = pneg %p255
        $region74: #{lairgpt_forward.5} parent=63 // pred_check_branch
          %381 = sbr.rel (%p379) target = $region76
        $region75: #{lairgpt_forward.5} parent=63 // pred_region
          %382 = dma.done [#allocation5], 16
        $region76: #{lairgpt_forward.5} parent=63 // pred_fallthru
          _
        %p383 = scmp.lt.s32.totalorder %s24, 1
        %s384 = scalar_select %p383, %s24, 1
        %s385 = smul.addr %s384, 2
        %s386 = smul.addr %s385, 4
        %s387 = scalar_lea.vmem %s0, %s386
        %p388 = pneg %p45
        %p389 = pneg %p42
        %p390 = pneg %p66
        %p391 = pneg %p63
        %p392 = pneg %p87
        %p393 = pneg %p84
        %p394 = pneg %p108
        %p395 = pneg %p105
        %p396 = pneg %p129
        %p397 = pneg %p126
        %p398 = pneg %p150
        %p399 = pneg %p147
        %p400 = pneg %p171
        %p401 = pneg %p168
        %p402 = pneg %p192
        %p403 = pneg %p189
        %p404 = pneg %p213
        %p405 = pneg %p210
        %p406 = pneg %p234
        %p407 = pneg %p231
        %p408 = pneg %p255
        %p409 = pneg %p252
        %p410 = pneg %p281
        %p411 = pneg %p278
        %p412 = scmp.lt.s32.totalorder %s24, 1
        %s413 = scalar_select %p412, %s24, 1
        %s414 = smul.addr %s413, 2
        %s415 = smul.addr %s414, 4
        %s416 = scalar_lea.vmem %s11, %s415
        %p417 = scmp.lt.s32.totalorder %s24, 1
        %s418 = scalar_select %p417, %s24, 1
        %s419 = smul.addr %s418, 2
        %s420 = smul.addr %s419, 4
        %s421 = scalar_lea.vmem %s0, %s420
        %p422 = scmp.lt.s32.totalorder %s24, 1
        %s423 = scalar_select %p422, %s24, 1
        %s424 = smul.addr %s423, 2
        %s425 = smul.addr %s424, 4
        %s426 = scalar_lea.vmem %s11, %s425
        %v428 = vld [vmem:[%s421] sm:$0xf]
        %v429 = vld [vmem:[%s421 + $0x4] sm:$0xf]
        %v430 = vunpack.c.l.bf16 %v428
        %v431 = vunpack.c.l.bf16 %v429
        %v432 = vld [vmem:[%s1] sm:$0x1]
        %v433 = vld [vmem:[%s2] sm:$0x1]
        %434 = vadd.xlane.f32.xlu0 %v430
        %v435 = vpop.xlane.xlu0 %434
        %436 = vadd.xlane.f32.xlu0 %v431
        %v437 = vpop.xlane.xlu0 %436
        %v438 = vrcp.pop 128.0
        %v439 = vmul.f32 %v435, %v438
        %v440 = vmul.f32 %v437, %v438
        %v441 = vsub.f32 %v430, %v439
        %v442 = vsub.f32 %v431, %v440
        %v443 = vmul.f32 %v441, %v441
        %v444 = vmul.f32 %v442, %v442
        %445 = vadd.xlane.f32.xlu0 %v443
        %v446 = vpop.xlane.xlu0 %445
        %447 = vadd.xlane.f32.xlu0 %v444
        %v448 = vpop.xlane.xlu0 %447
        %v449 = vmul.f32 %v446, %v438
        %v450 = vmul.f32 %v448, %v438
        %v451 = vadd.f32 %v449, 1e-05
        %v452 = vadd.f32 %v450, 1e-05
        %v453 = vrsqrt.pop %v451
        %v454 = vrsqrt.pop %v452
        %v455 = vmul.f32 %v441, %v453
        %v456 = vmul.f32 %v442, %v454
        %v458 = vlaneseq
        %v459 = vshrl.u32 %v458, 7
        %v460 = vsub.s32 0, %v459
        %v461 = vrot.slane %v432, %v460
        %v463 = vmul.f32 %v455, %v461
        %v464 = vmul.f32 %v456, %v461
        %v466 = vlaneseq
        %v467 = vshrl.u32 %v466, 7
        %v468 = vsub.s32 0, %v467
        %v469 = vrot.slane %v433, %v468
        %v471 = vadd.f32 %v463, %v469
        %v472 = vadd.f32 %v464, %v469
        %v473 = vpack.c.bf16 %v472, %v471
        %v474 = vld [vmem:[%s3] sm:$0xf]
        %v475 = vld [vmem:[%s3 + $0x4] sm:$0xf]
        %v476 = vld [vmem:[%s3 + $0x8] sm:$0xf]
        %v477 = vld [vmem:[%s3 + $0xc] sm:$0xf]
        %v478 = vld [vmem:[%s3 + $0x10] sm:$0xf]
        %v479 = vld [vmem:[%s3 + $0x14] sm:$0xf]
        %v480 = vld [vmem:[%s3 + $0x18] sm:$0xf]
        %v481 = vld [vmem:[%s3 + $0x1c] sm:$0xf]
        %v482 = vld [vmem:[%s3 + $0x20] sm:$0xf]
        %v483 = vld [vmem:[%s3 + $0x24] sm:$0xf]
        %v484 = vld [vmem:[%s3 + $0x28] sm:$0xf]
        %v485 = vld [vmem:[%s3 + $0x2c] sm:$0xf]
        %v486 = vld [vmem:[%s3 + $0x30] sm:$0xf]
        %v487 = vld [vmem:[%s3 + $0x34] sm:$0xf]
        %v488 = vld [vmem:[%s3 + $0x38] sm:$0xf]
        %v489 = vld [vmem:[%s3 + $0x3c] sm:$0xf]
        %v490 = vld [vmem:[%s6] sm:$0x1]
        %v492 = vlaneseq
        %v493 = vshrl.u32 %v492, 7
        %v494 = vsub.s32 0, %v493
        %v495 = vrot.slane %v490, %v494
        %v513 = vunpack.c.l.b16 %v474
        %v514 = vunpack.c.l.b16 %v475
        %v515 = vunpack.c.l.b16 %v476
        %v516 = vunpack.c.l.b16 %v477
        %v517 = vunpack.c.l.b16 %v478
        %v518 = vunpack.c.l.b16 %v479
        %v519 = vunpack.c.l.b16 %v480
        %v520 = vunpack.c.l.b16 %v481
        %v521 = vunpack.c.l.b16 %v482
        %v522 = vunpack.c.l.b16 %v483
        %v523 = vunpack.c.l.b16 %v484
        %v524 = vunpack.c.l.b16 %v485
        %v525 = vunpack.c.l.b16 %v486
        %v526 = vunpack.c.l.b16 %v487
        %v527 = vunpack.c.l.b16 %v488
        %v528 = vunpack.c.l.b16 %v489
        %v529 = vpack.c.b16 %v514, %v513
        %v530 = vpack.c.b16 %v516, %v515
        %v531 = vpack.c.b16 %v518, %v517
        %v532 = vpack.c.b16 %v520, %v519
        %v533 = vpack.c.b16 %v522, %v521
        %v534 = vpack.c.b16 %v524, %v523
        %v535 = vpack.c.b16 %v526, %v525
        %v536 = vpack.c.b16 %v528, %v527
        %545 = vmatprep.subr.bf16.mxu0 0
        %546 = vmatpush1.bf16.msra.mxu0 %v529
        %547 = vmatprep.subr.bf16.mxu0 0
        %548 = vmatpush1.bf16.msra.mxu0 %v530
        %549 = vmatprep.subr.bf16.mxu0 0
        %550 = vmatpush1.bf16.msra.mxu0 %v531
        %551 = vmatprep.subr.bf16.mxu0 0
        %552 = vmatpush1.bf16.msra.mxu0 %v532
        %553 = vmatprep.subr.bf16.mxu0 0
        %554 = vmatpush1.bf16.msra.mxu0 %v533
        %555 = vmatprep.subr.bf16.mxu0 0
        %556 = vmatpush1.bf16.msra.mxu0 %v534
        %557 = vmatprep.subr.bf16.mxu0 0
        %558 = vmatpush1.bf16.msra.mxu0 %v535
        %559 = vmatprep.subr.bf16.mxu0 0
        %560 = vmatpush1.bf16.msra.mxu0 %v536
        %561 = vmatprep.subr.bf16.mxu0 0
        %562 = vmatpush1.bf16.msra.mxu0 0
        %563 = vmatprep.subr.bf16.mxu0 0
        %564 = vmatpush1.bf16.msra.mxu0 0
        %565 = vmatprep.subr.bf16.mxu0 0
        %566 = vmatpush1.bf16.msra.mxu0 0
        %567 = vmatprep.subr.bf16.mxu0 0
        %568 = vmatpush1.bf16.msra.mxu0 0
        %569 = vmatprep.subr.bf16.mxu0 0
        %570 = vmatpush1.bf16.msra.mxu0 0
        %571 = vmatprep.subr.bf16.mxu0 0
        %572 = vmatpush1.bf16.msra.mxu0 0
        %573 = vmatprep.subr.bf16.mxu0 0
        %574 = vmatpush1.bf16.msra.mxu0 0
        %575 = vmatprep.subr.bf16.mxu0 0
        %576 = vmatpush1.bf16.msra.mxu0 0
        %577 = vmatprep.mubr.bf16.mxu0 0
        %578 = vmatmul.mubr.bf16.gmra.mrb[0].mxu0 %v473
        %v579 = vpop.f32.mrb[0].mxu0
        %v580 = vadd.f32 %v495, %v579
        %v581 = vpop.f32.mrb[0].mxu0
        %v582 = vpop.f32.mrb[0].mxu0
        %v583 = vadd.f32 %v495, %v582
        %v584 = vpop.f32.mrb[0].mxu0
        %585 = vdwg.mxu0
        %v586 = vmul.f32 %v580, 0.17677669
        %v587 = vmul.f32 %v583, 0.17677669
        %v588 = vpack.c.bf16 %v587, %v586
        %v589 = vld [vmem:[%s4] sm:$0xf]
        %v590 = vld [vmem:[%s4 + $0x4] sm:$0xf]
        %v591 = vld [vmem:[%s4 + $0x8] sm:$0xf]
        %v592 = vld [vmem:[%s4 + $0xc] sm:$0xf]
        %v593 = vld [vmem:[%s4 + $0x10] sm:$0xf]
        %v594 = vld [vmem:[%s4 + $0x14] sm:$0xf]
        %v595 = vld [vmem:[%s4 + $0x18] sm:$0xf]
        %v596 = vld [vmem:[%s4 + $0x1c] sm:$0xf]
        %v597 = vld [vmem:[%s4 + $0x20] sm:$0xf]
        %v598 = vld [vmem:[%s4 + $0x24] sm:$0xf]
        %v599 = vld [vmem:[%s4 + $0x28] sm:$0xf]
        %v600 = vld [vmem:[%s4 + $0x2c] sm:$0xf]
        %v601 = vld [vmem:[%s4 + $0x30] sm:$0xf]
        %v602 = vld [vmem:[%s4 + $0x34] sm:$0xf]
        %v603 = vld [vmem:[%s4 + $0x38] sm:$0xf]
        %v604 = vld [vmem:[%s4 + $0x3c] sm:$0xf]
        %v605 = vld [vmem:[#allocation2] sm:$0x1]
        %v607 = vlaneseq
        %v608 = vshrl.u32 %v607, 7
        %v609 = vsub.s32 0, %v608
        %v610 = vrot.slane %v605, %v609
        %v628 = vunpack.c.l.b16 %v589
        %v629 = vunpack.c.l.b16 %v590
        %v630 = vunpack.c.l.b16 %v591
        %v631 = vunpack.c.l.b16 %v592
        %v632 = vunpack.c.l.b16 %v593
        %v633 = vunpack.c.l.b16 %v594
        %v634 = vunpack.c.l.b16 %v595
        %v635 = vunpack.c.l.b16 %v596
        %v636 = vunpack.c.l.b16 %v597
        %v637 = vunpack.c.l.b16 %v598
        %v638 = vunpack.c.l.b16 %v599
        %v639 = vunpack.c.l.b16 %v600
        %v640 = vunpack.c.l.b16 %v601
        %v641 = vunpack.c.l.b16 %v602
        %v642 = vunpack.c.l.b16 %v603
        %v643 = vunpack.c.l.b16 %v604
        %v644 = vpack.c.b16 %v629, %v628
        %v645 = vpack.c.b16 %v631, %v630
        %v646 = vpack.c.b16 %v633, %v632
        %v647 = vpack.c.b16 %v635, %v634
        %v648 = vpack.c.b16 %v637, %v636
        %v649 = vpack.c.b16 %v639, %v638
        %v650 = vpack.c.b16 %v641, %v640
        %v651 = vpack.c.b16 %v643, %v642
        %660 = vmatprep.subr.bf16.mxu0 0
        %661 = vmatpush1.bf16.msra.mxu0 %v644
        %662 = vmatprep.subr.bf16.mxu0 0
        %663 = vmatpush1.bf16.msra.mxu0 %v645
        %664 = vmatprep.subr.bf16.mxu0 0
        %665 = vmatpush1.bf16.msra.mxu0 %v646
        %666 = vmatprep.subr.bf16.mxu0 0
        %667 = vmatpush1.bf16.msra.mxu0 %v647
        %668 = vmatprep.subr.bf16.mxu0 0
        %669 = vmatpush1.bf16.msra.mxu0 %v648
        %670 = vmatprep.subr.bf16.mxu0 0
        %671 = vmatpush1.bf16.msra.mxu0 %v649
        %672 = vmatprep.subr.bf16.mxu0 0
        %673 = vmatpush1.bf16.msra.mxu0 %v650
        %674 = vmatprep.subr.bf16.mxu0 0
        %675 = vmatpush1.bf16.msra.mxu0 %v651
        %676 = vmatprep.subr.bf16.mxu0 0
        %677 = vmatpush1.bf16.msra.mxu0 0
        %678 = vmatprep.subr.bf16.mxu0 0
        %679 = vmatpush1.bf16.msra.mxu0 0
        %680 = vmatprep.subr.bf16.mxu0 0
        %681 = vmatpush1.bf16.msra.mxu0 0
        %682 = vmatprep.subr.bf16.mxu0 0
        %683 = vmatpush1.bf16.msra.mxu0 0
        %684 = vmatprep.subr.bf16.mxu0 0
        %685 = vmatpush1.bf16.msra.mxu0 0
        %686 = vmatprep.subr.bf16.mxu0 0
        %687 = vmatpush1.bf16.msra.mxu0 0
        %688 = vmatprep.subr.bf16.mxu0 0
        %689 = vmatpush1.bf16.msra.mxu0 0
        %690 = vmatprep.subr.bf16.mxu0 0
        %691 = vmatpush1.bf16.msra.mxu0 0
        %692 = vmatprep.mubr.bf16.mxu0 0
        %693 = vmatmul.mubr.bf16.gmra.mrb[0].mxu0 %v473
        %v694 = vpop.f32.mrb[0].mxu0
        %v695 = vadd.f32 %v610, %v694
        %v696 = vpop.f32.mrb[0].mxu0
        %v697 = vpop.f32.mrb[0].mxu0
        %v698 = vadd.f32 %v610, %v697
        %v699 = vpop.f32.mrb[0].mxu0
        %700 = vdwg.mxu0
        %v701 = vpack.c.bf16 %v698, %v695
        %v702 = vld [vmem:[%s5] sm:$0xf]
        %v703 = vld [vmem:[%s5 + $0x4] sm:$0xf]
        %v704 = vld [vmem:[%s5 + $0x8] sm:$0xf]
        %v705 = vld [vmem:[%s5 + $0xc] sm:$0xf]
        %v706 = vld [vmem:[%s5 + $0x10] sm:$0xf]
        %v707 = vld [vmem:[%s5 + $0x14] sm:$0xf]
        %v708 = vld [vmem:[%s5 + $0x18] sm:$0xf]
        %v709 = vld [vmem:[%s5 + $0x1c] sm:$0xf]
        %v710 = vld [vmem:[%s5 + $0x20] sm:$0xf]
        %v711 = vld [vmem:[%s5 + $0x24] sm:$0xf]
        %v712 = vld [vmem:[%s5 + $0x28] sm:$0xf]
        %v713 = vld [vmem:[%s5 + $0x2c] sm:$0xf]
        %v714 = vld [vmem:[%s5 + $0x30] sm:$0xf]
        %v715 = vld [vmem:[%s5 + $0x34] sm:$0xf]
        %v716 = vld [vmem:[%s5 + $0x38] sm:$0xf]
        %v717 = vld [vmem:[%s5 + $0x3c] sm:$0xf]
        %v718 = vld [vmem:[%s8] sm:$0x1]
        %v720 = vlaneseq
        %v721 = vshrl.u32 %v720, 7
        %v722 = vsub.s32 0, %v721
        %v723 = vrot.slane %v718, %v722
        %v741 = vunpack.c.l.b16 %v702
        %v742 = vunpack.c.l.b16 %v703
        %v743 = vunpack.c.l.b16 %v704
        %v744 = vunpack.c.l.b16 %v705
        %v745 = vunpack.c.l.b16 %v706
        %v746 = vunpack.c.l.b16 %v707
        %v747 = vunpack.c.l.b16 %v708
        %v748 = vunpack.c.l.b16 %v709
        %v749 = vunpack.c.l.b16 %v710
        %v750 = vunpack.c.l.b16 %v711
        %v751 = vunpack.c.l.b16 %v712
        %v752 = vunpack.c.l.b16 %v713
        %v753 = vunpack.c.l.b16 %v714
        %v754 = vunpack.c.l.b16 %v715
        %v755 = vunpack.c.l.b16 %v716
        %v756 = vunpack.c.l.b16 %v717
        %v757 = vpack.c.b16 %v742, %v741
        %v758 = vpack.c.b16 %v744, %v743
        %v759 = vpack.c.b16 %v746, %v745
        %v760 = vpack.c.b16 %v748, %v747
        %v761 = vpack.c.b16 %v750, %v749
        %v762 = vpack.c.b16 %v752, %v751
        %v763 = vpack.c.b16 %v754, %v753
        %v764 = vpack.c.b16 %v756, %v755
        %773 = vmatprep.subr.bf16.mxu0 0
        %774 = vmatpush1.bf16.msra.mxu0 %v757
        %775 = vmatprep.subr.bf16.mxu0 0
        %776 = vmatpush1.bf16.msra.mxu0 %v758
        %777 = vmatprep.subr.bf16.mxu0 0
        %778 = vmatpush1.bf16.msra.mxu0 %v759
        %779 = vmatprep.subr.bf16.mxu0 0
        %780 = vmatpush1.bf16.msra.mxu0 %v760
        %781 = vmatprep.subr.bf16.mxu0 0
        %782 = vmatpush1.bf16.msra.mxu0 %v761
        %783 = vmatprep.subr.bf16.mxu0 0
        %784 = vmatpush1.bf16.msra.mxu0 %v762
        %785 = vmatprep.subr.bf16.mxu0 0
        %786 = vmatpush1.bf16.msra.mxu0 %v763
        %787 = vmatprep.subr.bf16.mxu0 0
        %788 = vmatpush1.bf16.msra.mxu0 %v764
        %789 = vmatprep.subr.bf16.mxu0 0
        %790 = vmatpush1.bf16.msra.mxu0 0
        %791 = vmatprep.subr.bf16.mxu0 0
        %792 = vmatpush1.bf16.msra.mxu0 0
        %793 = vmatprep.subr.bf16.mxu0 0
        %794 = vmatpush1.bf16.msra.mxu0 0
        %795 = vmatprep.subr.bf16.mxu0 0
        %796 = vmatpush1.bf16.msra.mxu0 0
        %797 = vmatprep.subr.bf16.mxu0 0
        %798 = vmatpush1.bf16.msra.mxu0 0
        %799 = vmatprep.subr.bf16.mxu0 0
        %800 = vmatpush1.bf16.msra.mxu0 0
        %801 = vmatprep.subr.bf16.mxu0 0
        %802 = vmatpush1.bf16.msra.mxu0 0
        %803 = vmatprep.subr.bf16.mxu0 0
        %804 = vmatpush1.bf16.msra.mxu0 0
        %805 = vmatprep.mubr.bf16.mxu0 0
        %806 = vmatmul.mubr.bf16.gmra.mrb[0].mxu0 %v473
        %v807 = vpop.f32.mrb[0].mxu0
        %v808 = vadd.f32 %v723, %v807
        %v809 = vpop.f32.mrb[0].mxu0
        %v810 = vpop.f32.mrb[0].mxu0
        %v811 = vadd.f32 %v723, %v810
        %v812 = vpop.f32.mrb[0].mxu0
        %813 = vdwg.mxu0
        %v814 = vpack.c.bf16 %v811, %v808
        %v815 = vlaneseq
        %v816 = vshrl.u32 %v815, 7
        %v817 = vadd.s32 %v816, 8
        %v818 = vlaneseq
        %v819 = vand.u32 %v818, 127
        %vm820 = vcmp.ge.s32.totalorder %v816, %v819
        %vm821 = vcmp.ge.s32.totalorder %v817, %v819
        %vm822 = vcmask 261120
        %v824 = vsel %vm822, %v588, 0
        %v827 = vsel %vm822, %v701, 0
        %829 = vmatprep.subr.bf16.mxu0 0
        %830 = vmatpush1.bf16.xpose.msra.mxu0 %v827
        %831 = vmatprep.subr.bf16.mxu0 0
        %832 = vmatpush1.bf16.xpose.msra.mxu0 0
        %833 = vmatprep.subr.bf16.mxu0 0
        %834 = vmatpush1.bf16.xpose.msra.mxu0 0
        %835 = vmatprep.subr.bf16.mxu0 0
        %836 = vmatpush1.bf16.xpose.msra.mxu0 0
        %837 = vmatprep.subr.bf16.mxu0 0
        %838 = vmatpush1.bf16.xpose.msra.mxu0 0
        %839 = vmatprep.subr.bf16.mxu0 0
        %840 = vmatpush1.bf16.xpose.msra.mxu0 0
        %841 = vmatprep.subr.bf16.mxu0 0
        %842 = vmatpush1.bf16.xpose.msra.mxu0 0
        %843 = vmatprep.subr.bf16.mxu0 0
        %844 = vmatpush1.bf16.xpose.msra.mxu0 0
        %845 = vmatprep.subr.bf16.mxu0 0
        %846 = vmatpush1.bf16.xpose.msra.mxu0 0
        %847 = vmatprep.subr.bf16.mxu0 0
        %848 = vmatpush1.bf16.xpose.msra.mxu0 0
        %849 = vmatprep.subr.bf16.mxu0 0
        %850 = vmatpush1.bf16.xpose.msra.mxu0 0
        %851 = vmatprep.subr.bf16.mxu0 0
        %852 = vmatpush1.bf16.xpose.msra.mxu0 0
        %853 = vmatprep.subr.bf16.mxu0 0
        %854 = vmatpush1.bf16.xpose.msra.mxu0 0
        %855 = vmatprep.subr.bf16.mxu0 0
        %856 = vmatpush1.bf16.xpose.msra.mxu0 0
        %857 = vmatprep.subr.bf16.mxu0 0
        %858 = vmatpush1.bf16.xpose.msra.mxu0 0
        %859 = vmatprep.subr.bf16.mxu0 0
        %860 = vmatpush1.bf16.xpose.msra.mxu0 0
        %861 = vmatprep.mubr.bf16.mxu0 0
        %862 = vmatmul.mubr.bf16.gmra.mrb[0].mxu0 %v824
        %v863 = vpop.f32.mrb[0].mxu0
        %v864 = vadd.f32 0.0, %v863
        %v865 = vpop.f32.mrb[0].mxu0
        %v866 = vpop.f32.mrb[0].mxu0
        %v867 = vadd.f32 0.0, %v866
        %v868 = vpop.f32.mrb[0].mxu0
        %869 = vdwg.mxu0
        %v870 = vsel %vm820, %v864, -1e+30
        %v871 = vsel %vm821, %v867, -1e+30
        %vm872 = vcmask 130048
        %v873 = vsel %vm872, %v870, -inf
        %874 = vmax.xlane.f32.xlu0 %v873
        %v875 = vpop.xlane.xlu0 %874
        %v876 = vsel %vm872, %v871, -inf
        %877 = vmax.xlane.f32.xlu0 %v876
        %v878 = vpop.xlane.xlu0 %877
        %v879 = vsub.f32 %v870, %v875
        %v880 = vsub.f32 %v871, %v878
        %v881 = vmul.f32 %v879, 1.442695
        %v882 = vpow.pop %v881
        %v883 = vmul.f32 %v880, 1.442695
        %v884 = vpow.pop %v883
        %v885 = vsel %vm872, %v882, 0.0
        %886 = vadd.xlane.f32.xlu0 %v885
        %v887 = vpop.xlane.xlu0 %886
        %v888 = vsel %vm872, %v884, 0.0
        %889 = vadd.xlane.f32.xlu0 %v888
        %v890 = vpop.xlane.xlu0 %889
        %v891 = vrcp.pop %v887
        %v892 = vrcp.pop %v890
        %v893 = vmul.f32 %v882, %v891
        %v894 = vmul.f32 %v884, %v892
        %v895 = vpack.c.bf16 %v894, %v893
        %v897 = vsel %vm872, %v895, 0
        %899 = vmatprep.subr.bf16.mxu0 0
        %900 = vmatpush1.bf16.msra.mxu0 %v814
        %901 = vmatprep.subr.bf16.mxu0 0
        %902 = vmatpush1.bf16.msra.mxu0 0
        %903 = vmatprep.subr.bf16.mxu0 0
        %904 = vmatpush1.bf16.msra.mxu0 0
        %905 = vmatprep.subr.bf16.mxu0 0
        %906 = vmatpush1.bf16.msra.mxu0 0
        %907 = vmatprep.subr.bf16.mxu0 0
        %908 = vmatpush1.bf16.msra.mxu0 0
        %909 = vmatprep.subr.bf16.mxu0 0
        %910 = vmatpush1.bf16.msra.mxu0 0
        %911 = vmatprep.subr.bf16.mxu0 0
        %912 = vmatpush1.bf16.msra.mxu0 0
        %913 = vmatprep.subr.bf16.mxu0 0
        %914 = vmatpush1.bf16.msra.mxu0 0
        %915 = vmatprep.subr.bf16.mxu0 0
        %916 = vmatpush1.bf16.msra.mxu0 0
        %917 = vmatprep.subr.bf16.mxu0 0
        %918 = vmatpush1.bf16.msra.mxu0 0
        %919 = vmatprep.subr.bf16.mxu0 0
        %920 = vmatpush1.bf16.msra.mxu0 0
        %921 = vmatprep.subr.bf16.mxu0 0
        %922 = vmatpush1.bf16.msra.mxu0 0
        %923 = vmatprep.subr.bf16.mxu0 0
        %924 = vmatpush1.bf16.msra.mxu0 0
        %925 = vmatprep.subr.bf16.mxu0 0
        %926 = vmatpush1.bf16.msra.mxu0 0
        %927 = vmatprep.subr.bf16.mxu0 0
        %928 = vmatpush1.bf16.msra.mxu0 0
        %929 = vmatprep.subr.bf16.mxu0 0
        %930 = vmatpush1.bf16.msra.mxu0 0
        %931 = vmatprep.mubr.bf16.mxu0 0
        %932 = vmatmul.mubr.bf16.gmra.mrb[0].mxu0 %v897
        %v933 = vpop.f32.mrb[0].mxu0
        %v934 = vadd.f32 0.0, %v933
        %v935 = vpop.f32.mrb[0].mxu0
        %v936 = vpop.f32.mrb[0].mxu0
        %v937 = vadd.f32 0.0, %v936
        %v938 = vpop.f32.mrb[0].mxu0
        %939 = vdwg.mxu0
        %941 = vrot.lane.b32.xlu0 %v588, 96
        %v942 = vpop.permute.xlu0 %941
        %944 = vrot.lane.b32.xlu0 %v701, 96
        %v945 = vpop.permute.xlu0 %944
        %v947 = vsel %vm822, %v942, 0
        %v950 = vsel %vm822, %v945, 0
        %952 = vmatprep.subr.bf16.mxu0 0
        %953 = vmatpush1.bf16.xpose.msra.mxu0 %v950
        %954 = vmatprep.subr.bf16.mxu0 0
        %955 = vmatpush1.bf16.xpose.msra.mxu0 0
        %956 = vmatprep.subr.bf16.mxu0 0
        %957 = vmatpush1.bf16.xpose.msra.mxu0 0
        %958 = vmatprep.subr.bf16.mxu0 0
        %959 = vmatpush1.bf16.xpose.msra.mxu0 0
        %960 = vmatprep.subr.bf16.mxu0 0
        %961 = vmatpush1.bf16.xpose.msra.mxu0 0
        %962 = vmatprep.subr.bf16.mxu0 0
        %963 = vmatpush1.bf16.xpose.msra.mxu0 0
        %964 = vmatprep.subr.bf16.mxu0 0
        %965 = vmatpush1.bf16.xpose.msra.mxu0 0
        %966 = vmatprep.subr.bf16.mxu0 0
        %967 = vmatpush1.bf16.xpose.msra.mxu0 0
        %968 = vmatprep.subr.bf16.mxu0 0
        %969 = vmatpush1.bf16.xpose.msra.mxu0 0
        %970 = vmatprep.subr.bf16.mxu0 0
        %971 = vmatpush1.bf16.xpose.msra.mxu0 0
        %972 = vmatprep.subr.bf16.mxu0 0
        %973 = vmatpush1.bf16.xpose.msra.mxu0 0
        %974 = vmatprep.subr.bf16.mxu0 0
        %975 = vmatpush1.bf16.xpose.msra.mxu0 0
        %976 = vmatprep.subr.bf16.mxu0 0
        %977 = vmatpush1.bf16.xpose.msra.mxu0 0
        %978 = vmatprep.subr.bf16.mxu0 0
        %979 = vmatpush1.bf16.xpose.msra.mxu0 0
        %980 = vmatprep.subr.bf16.mxu0 0
        %981 = vmatpush1.bf16.xpose.msra.mxu0 0
        %982 = vmatprep.subr.bf16.mxu0 0
        %983 = vmatpush1.bf16.xpose.msra.mxu0 0
        %984 = vmatprep.mubr.bf16.mxu0 0
        %985 = vmatmul.mubr.bf16.gmra.mrb[0].mxu0 %v947
        %v986 = vpop.f32.mrb[0].mxu0
        %v987 = vadd.f32 0.0, %v986
        %v988 = vpop.f32.mrb[0].mxu0
        %v989 = vpop.f32.mrb[0].mxu0
        %v990 = vadd.f32 0.0, %v989
        %v991 = vpop.f32.mrb[0].mxu0
        %992 = vdwg.mxu0
        %v993 = vsel %vm820, %v987, -1e+30
        %v994 = vsel %vm821, %v990, -1e+30
        %v995 = vsel %vm872, %v993, -inf
        %996 = vmax.xlane.f32.xlu0 %v995
        %v997 = vpop.xlane.xlu0 %996
        %v998 = vsel %vm872, %v994, -inf
        %999 = vmax.xlane.f32.xlu0 %v998
        %v1000 = vpop.xlane.xlu0 %999
        %v1001 = vsub.f32 %v993, %v997
        %v1002 = vsub.f32 %v994, %v1000
        %v1003 = vmul.f32 %v1001, 1.442695
        %v1004 = vpow.pop %v1003
        %v1005 = vmul.f32 %v1002, 1.442695
        %v1006 = vpow.pop %v1005
        %v1007 = vsel %vm872, %v1004, 0.0
        %1008 = vadd.xlane.f32.xlu0 %v1007
        %v1009 = vpop.xlane.xlu0 %1008
        %v1010 = vsel %vm872, %v1006, 0.0
        %1011 = vadd.xlane.f32.xlu0 %v1010
        %v1012 = vpop.xlane.xlu0 %1011
        %v1013 = vrcp.pop %v1009
        %v1014 = vrcp.pop %v1012
        %v1015 = vmul.f32 %v1004, %v1013
        %v1016 = vmul.f32 %v1006, %v1014
        %v1017 = vpack.c.bf16 %v1016, %v1015
        %1019 = vrot.lane.b32.xlu0 %v814, 96
        %v1020 = vpop.permute.xlu0 %1019
        %v1023 = vsel %vm872, %v1017, 0
        %1025 = vmatprep.subr.bf16.mxu0 0
        %1026 = vmatpush1.bf16.msra.mxu0 %v1020
        %1027 = vmatprep.subr.bf16.mxu0 0
        %1028 = vmatpush1.bf16.msra.mxu0 0
        %1029 = vmatprep.subr.bf16.mxu0 0
        %1030 = vmatpush1.bf16.msra.mxu0 0
        %1031 = vmatprep.subr.bf16.mxu0 0
        %1032 = vmatpush1.bf16.msra.mxu0 0
        %1033 = vmatprep.subr.bf16.mxu0 0
        %1034 = vmatpush1.bf16.msra.mxu0 0
        %1035 = vmatprep.subr.bf16.mxu0 0
        %1036 = vmatpush1.bf16.msra.mxu0 0
        %1037 = vmatprep.subr.bf16.mxu0 0
        %1038 = vmatpush1.bf16.msra.mxu0 0
        %1039 = vmatprep.subr.bf16.mxu0 0
        %1040 = vmatpush1.bf16.msra.mxu0 0
        %1041 = vmatprep.subr.bf16.mxu0 0
        %1042 = vmatpush1.bf16.msra.mxu0 0
        %1043 = vmatprep.subr.bf16.mxu0 0
        %1044 = vmatpush1.bf16.msra.mxu0 0
        %1045 = vmatprep.subr.bf16.mxu0 0
        %1046 = vmatpush1.bf16.msra.mxu0 0
        %1047 = vmatprep.subr.bf16.mxu0 0
        %1048 = vmatpush1.bf16.msra.mxu0 0
        %1049 = vmatprep.subr.bf16.mxu0 0
        %1050 = vmatpush1.bf16.msra.mxu0 0
        %1051 = vmatprep.subr.bf16.mxu0 0
        %1052 = vmatpush1.bf16.msra.mxu0 0
        %1053 = vmatprep.subr.bf16.mxu0 0
        %1054 = vmatpush1.bf16.msra.mxu0 0
        %1055 = vmatprep.subr.bf16.mxu0 0
        %1056 = vmatpush1.bf16.msra.mxu0 0
        %1057 = vmatprep.mubr.bf16.mxu0 0
        %1058 = vmatmul.mubr.bf16.gmra.mrb[0].mxu0 %v1023
        %v1059 = vpop.f32.mrb[0].mxu0
        %v1060 = vadd.f32 0.0, %v1059
        %v1061 = vpop.f32.mrb[0].mxu0
        %v1062 = vpop.f32.mrb[0].mxu0
        %v1063 = vadd.f32 0.0, %v1062
        %v1064 = vpop.f32.mrb[0].mxu0
        %1065 = vdwg.mxu0
        %1066 = vrot.lane.b32.xlu0 %v588, 64
        %v1067 = vpop.permute.xlu0 %1066
        %1068 = vrot.lane.b32.xlu0 %v701, 64
        %v1069 = vpop.permute.xlu0 %1068
        %v1071 = vsel %vm822, %v1067, 0
        %v1074 = vsel %vm822, %v1069, 0
        %1076 = vmatprep.subr.bf16.mxu0 0
        %1077 = vmatpush1.bf16.xpose.msra.mxu0 %v1074
        %1078 = vmatprep.subr.bf16.mxu0 0
        %1079 = vmatpush1.bf16.xpose.msra.mxu0 0
        %1080 = vmatprep.subr.bf16.mxu0 0
        %1081 = vmatpush1.bf16.xpose.msra.mxu0 0
        %1082 = vmatprep.subr.bf16.mxu0 0
        %1083 = vmatpush1.bf16.xpose.msra.mxu0 0
        %1084 = vmatprep.subr.bf16.mxu0 0
        %1085 = vmatpush1.bf16.xpose.msra.mxu0 0
        %1086 = vmatprep.subr.bf16.mxu0 0
        %1087 = vmatpush1.bf16.xpose.msra.mxu0 0
        %1088 = vmatprep.subr.bf16.mxu0 0
        %1089 = vmatpush1.bf16.xpose.msra.mxu0 0
        %1090 = vmatprep.subr.bf16.mxu0 0
        %1091 = vmatpush1.bf16.xpose.msra.mxu0 0
        %1092 = vmatprep.subr.bf16.mxu0 0
        %1093 = vmatpush1.bf16.xpose.msra.mxu0 0
        %1094 = vmatprep.subr.bf16.mxu0 0
        %1095 = vmatpush1.bf16.xpose.msra.mxu0 0
        %1096 = vmatprep.subr.bf16.mxu0 0
        %1097 = vmatpush1.bf16.xpose.msra.mxu0 0
        %1098 = vmatprep.subr.bf16.mxu0 0
        %1099 = vmatpush1.bf16.xpose.msra.mxu0 0
        %1100 = vmatprep.subr.bf16.mxu0 0
        %1101 = vmatpush1.bf16.xpose.msra.mxu0 0
        %1102 = vmatprep.subr.bf16.mxu0 0
        %1103 = vmatpush1.bf16.xpose.msra.mxu0 0
        %1104 = vmatprep.subr.bf16.mxu0 0
        %1105 = vmatpush1.bf16.xpose.msra.mxu0 0
        %1106 = vmatprep.subr.bf16.mxu0 0
        %1107 = vmatpush1.bf16.xpose.msra.mxu0 0
        %1108 = vmatprep.mubr.bf16.mxu0 0
        %1109 = vmatmul.mubr.bf16.gmra.mrb[0].mxu0 %v1071
        %v1110 = vpop.f32.mrb[0].mxu0
        %v1111 = vadd.f32 0.0, %v1110
        %v1112 = vpop.f32.mrb[0].mxu0
        %v1113 = vpop.f32.mrb[0].mxu0
        %v1114 = vadd.f32 0.0, %v1113
        %v1115 = vpop.f32.mrb[0].mxu0
        %1116 = vdwg.mxu0
        %v1117 = vsel %vm820, %v1111, -1e+30
        %v1118 = vsel %vm821, %v1114, -1e+30
        %v1119 = vsel %vm872, %v1117, -inf
        %1120 = vmax.xlane.f32.xlu0 %v1119
        %v1121 = vpop.xlane.xlu0 %1120
        %v1122 = vsel %vm872, %v1118, -inf
        %1123 = vmax.xlane.f32.xlu0 %v1122
        %v1124 = vpop.xlane.xlu0 %1123
        %v1125 = vsub.f32 %v1117, %v1121
        %v1126 = vsub.f32 %v1118, %v1124
        %v1127 = vmul.f32 %v1125, 1.442695
        %v1128 = vpow.pop %v1127
        %v1129 = vmul.f32 %v1126, 1.442695
        %v1130 = vpow.pop %v1129
        %v1131 = vsel %vm872, %v1128, 0.0
        %1132 = vadd.xlane.f32.xlu0 %v1131
        %v1133 = vpop.xlane.xlu0 %1132
        %v1134 = vsel %vm872, %v1130, 0.0
        %1135 = vadd.xlane.f32.xlu0 %v1134
        %v1136 = vpop.xlane.xlu0 %1135
        %v1137 = vrcp.pop %v1133
        %v1138 = vrcp.pop %v1136
        %v1139 = vmul.f32 %v1128, %v1137
        %v1140 = vmul.f32 %v1130, %v1138
        %v1141 = vpack.c.bf16 %v1140, %v1139
        %1142 = vrot.lane.b32.xlu0 %v814, 64
        %v1143 = vpop.permute.xlu0 %1142
        %v1146 = vsel %vm872, %v1141, 0
        %1148 = vmatprep.subr.bf16.mxu0 0
        %1149 = vmatpush1.bf16.msra.mxu0 %v1143
        %1150 = vmatprep.subr.bf16.mxu0 0
        %1151 = vmatpush1.bf16.msra.mxu0 0
        %1152 = vmatprep.subr.bf16.mxu0 0
        %1153 = vmatpush1.bf16.msra.mxu0 0
        %1154 = vmatprep.subr.bf16.mxu0 0
        %1155 = vmatpush1.bf16.msra.mxu0 0
        %1156 = vmatprep.subr.bf16.mxu0 0
        %1157 = vmatpush1.bf16.msra.mxu0 0
        %1158 = vmatprep.subr.bf16.mxu0 0
        %1159 = vmatpush1.bf16.msra.mxu0 0
        %1160 = vmatprep.subr.bf16.mxu0 0
        %1161 = vmatpush1.bf16.msra.mxu0 0
        %1162 = vmatprep.subr.bf16.mxu0 0
        %1163 = vmatpush1.bf16.msra.mxu0 0
        %1164 = vmatprep.subr.bf16.mxu0 0
        %1165 = vmatpush1.bf16.msra.mxu0 0
        %1166 = vmatprep.subr.bf16.mxu0 0
        %1167 = vmatpush1.bf16.msra.mxu0 0
        %1168 = vmatprep.subr.bf16.mxu0 0
        %1169 = vmatpush1.bf16.msra.mxu0 0
        %1170 = vmatprep.subr.bf16.mxu0 0
        %1171 = vmatpush1.bf16.msra.mxu0 0
        %1172 = vmatprep.subr.bf16.mxu0 0
        %1173 = vmatpush1.bf16.msra.mxu0 0
        %1174 = vmatprep.subr.bf16.mxu0 0
        %1175 = vmatpush1.bf16.msra.mxu0 0
        %1176 = vmatprep.subr.bf16.mxu0 0
        %1177 = vmatpush1.bf16.msra.mxu0 0
        %1178 = vmatprep.subr.bf16.mxu0 0
        %1179 = vmatpush1.bf16.msra.mxu0 0
        %1180 = vmatprep.mubr.bf16.mxu0 0
        %1181 = vmatmul.mubr.bf16.gmra.mrb[0].mxu0 %v1146
        %v1182 = vpop.f32.mrb[0].mxu0
        %v1183 = vadd.f32 0.0, %v1182
        %v1184 = vpop.f32.mrb[0].mxu0
        %v1185 = vpop.f32.mrb[0].mxu0
        %v1186 = vadd.f32 0.0, %v1185
        %v1187 = vpop.f32.mrb[0].mxu0
        %1188 = vdwg.mxu0
        %1189 = vrot.lane.b32.xlu0 %v588, 32
        %v1190 = vpop.permute.xlu0 %1189
        %1191 = vrot.lane.b32.xlu0 %v701, 32
        %v1192 = vpop.permute.xlu0 %1191
        %v1194 = vsel %vm822, %v1190, 0
        %v1197 = vsel %vm822, %v1192, 0
        %1199 = vmatprep.subr.bf16.mxu0 0
        %1200 = vmatpush1.bf16.xpose.msra.mxu0 %v1197
        %1201 = vmatprep.subr.bf16.mxu0 0
        %1202 = vmatpush1.bf16.xpose.msra.mxu0 0
        %1203 = vmatprep.subr.bf16.mxu0 0
        %1204 = vmatpush1.bf16.xpose.msra.mxu0 0
        %1205 = vmatprep.subr.bf16.mxu0 0
        %1206 = vmatpush1.bf16.xpose.msra.mxu0 0
        %1207 = vmatprep.subr.bf16.mxu0 0
        %1208 = vmatpush1.bf16.xpose.msra.mxu0 0
        %1209 = vmatprep.subr.bf16.mxu0 0
        %1210 = vmatpush1.bf16.xpose.msra.mxu0 0
        %1211 = vmatprep.subr.bf16.mxu0 0
        %1212 = vmatpush1.bf16.xpose.msra.mxu0 0
        %1213 = vmatprep.subr.bf16.mxu0 0
        %1214 = vmatpush1.bf16.xpose.msra.mxu0 0
        %1215 = vmatprep.subr.bf16.mxu0 0
        %1216 = vmatpush1.bf16.xpose.msra.mxu0 0
        %1217 = vmatprep.subr.bf16.mxu0 0
        %1218 = vmatpush1.bf16.xpose.msra.mxu0 0
        %1219 = vmatprep.subr.bf16.mxu0 0
        %1220 = vmatpush1.bf16.xpose.msra.mxu0 0
        %1221 = vmatprep.subr.bf16.mxu0 0
        %1222 = vmatpush1.bf16.xpose.msra.mxu0 0
        %1223 = vmatprep.subr.bf16.mxu0 0
        %1224 = vmatpush1.bf16.xpose.msra.mxu0 0
        %1225 = vmatprep.subr.bf16.mxu0 0
        %1226 = vmatpush1.bf16.xpose.msra.mxu0 0
        %1227 = vmatprep.subr.bf16.mxu0 0
        %1228 = vmatpush1.bf16.xpose.msra.mxu0 0
        %1229 = vmatprep.subr.bf16.mxu0 0
        %1230 = vmatpush1.bf16.xpose.msra.mxu0 0
        %1231 = vmatprep.mubr.bf16.mxu0 0
        %1232 = vmatmul.mubr.bf16.gmra.mrb[0].mxu0 %v1194
        %v1233 = vpop.f32.mrb[0].mxu0
        %v1234 = vadd.f32 0.0, %v1233
        %v1235 = vpop.f32.mrb[0].mxu0
        %v1236 = vpop.f32.mrb[0].mxu0
        %v1237 = vadd.f32 0.0, %v1236
        %v1238 = vpop.f32.mrb[0].mxu0
        %1239 = vdwg.mxu0
        %v1240 = vsel %vm820, %v1234, -1e+30
        %v1241 = vsel %vm821, %v1237, -1e+30
        %v1242 = vsel %vm872, %v1240, -inf
        %1243 = vmax.xlane.f32.xlu0 %v1242
        %v1244 = vpop.xlane.xlu0 %1243
        %v1245 = vsel %vm872, %v1241, -inf
        %1246 = vmax.xlane.f32.xlu0 %v1245
        %v1247 = vpop.xlane.xlu0 %1246
        %v1248 = vsub.f32 %v1240, %v1244
        %v1249 = vsub.f32 %v1241, %v1247
        %v1250 = vmul.f32 %v1248, 1.442695
        %v1251 = vpow.pop %v1250
        %v1252 = vmul.f32 %v1249, 1.442695
        %v1253 = vpow.pop %v1252
        %v1254 = vsel %vm872, %v1251, 0.0
        %1255 = vadd.xlane.f32.xlu0 %v1254
        %v1256 = vpop.xlane.xlu0 %1255
        %v1257 = vsel %vm872, %v1253, 0.0
        %1258 = vadd.xlane.f32.xlu0 %v1257
        %v1259 = vpop.xlane.xlu0 %1258
        %v1260 = vrcp.pop %v1256
        %v1261 = vrcp.pop %v1259
        %v1262 = vmul.f32 %v1251, %v1260
        %v1263 = vmul.f32 %v1253, %v1261
        %v1264 = vpack.c.bf16 %v1263, %v1262
        %1265 = vrot.lane.b32.xlu0 %v814, 32
        %v1266 = vpop.permute.xlu0 %1265
        %v1269 = vsel %vm872, %v1264, 0
        %1271 = vmatprep.subr.bf16.mxu0 0
        %1272 = vmatpush1.bf16.msra.mxu0 %v1266
        %1273 = vmatprep.subr.bf16.mxu0 0
        %1274 = vmatpush1.bf16.msra.mxu0 0
        %1275 = vmatprep.subr.bf16.mxu0 0
        %1276 = vmatpush1.bf16.msra.mxu0 0
        %1277 = vmatprep.subr.bf16.mxu0 0
        %1278 = vmatpush1.bf16.msra.mxu0 0
        %1279 = vmatprep.subr.bf16.mxu0 0
        %1280 = vmatpush1.bf16.msra.mxu0 0
        %1281 = vmatprep.subr.bf16.mxu0 0
        %1282 = vmatpush1.bf16.msra.mxu0 0
        %1283 = vmatprep.subr.bf16.mxu0 0
        %1284 = vmatpush1.bf16.msra.mxu0 0
        %1285 = vmatprep.subr.bf16.mxu0 0
        %1286 = vmatpush1.bf16.msra.mxu0 0
        %1287 = vmatprep.subr.bf16.mxu0 0
        %1288 = vmatpush1.bf16.msra.mxu0 0
        %1289 = vmatprep.subr.bf16.mxu0 0
        %1290 = vmatpush1.bf16.msra.mxu0 0
        %1291 = vmatprep.subr.bf16.mxu0 0
        %1292 = vmatpush1.bf16.msra.mxu0 0
        %1293 = vmatprep.subr.bf16.mxu0 0
        %1294 = vmatpush1.bf16.msra.mxu0 0
        %1295 = vmatprep.subr.bf16.mxu0 0
        %1296 = vmatpush1.bf16.msra.mxu0 0
        %1297 = vmatprep.subr.bf16.mxu0 0
        %1298 = vmatpush1.bf16.msra.mxu0 0
        %1299 = vmatprep.subr.bf16.mxu0 0
        %1300 = vmatpush1.bf16.msra.mxu0 0
        %1301 = vmatprep.subr.bf16.mxu0 0
        %1302 = vmatpush1.bf16.msra.mxu0 0
        %1303 = vmatprep.mubr.bf16.mxu0 0
        %1304 = vmatmul.mubr.bf16.gmra.mrb[0].mxu0 %v1269
        %v1305 = vpop.f32.mrb[0].mxu0
        %v1306 = vadd.f32 0.0, %v1305
        %v1307 = vpop.f32.mrb[0].mxu0
        %v1308 = vpop.f32.mrb[0].mxu0
        %v1309 = vadd.f32 0.0, %v1308
        %v1310 = vpop.f32.mrb[0].mxu0
        %1311 = vdwg.mxu0
        %1314 = vrot.lane.b32.xlu0 %v1060, 32
        %v1315 = vpop.permute.xlu0 %1314
        %1316 = vrot.lane.b32.xlu0 %v1063, 32
        %v1317 = vpop.permute.xlu0 %1316
        %1322 = vrot.lane.b32.xlu0 %v1183, 64
        %v1323 = vpop.permute.xlu0 %1322
        %1324 = vrot.lane.b32.xlu0 %v1186, 64
        %v1325 = vpop.permute.xlu0 %1324
        %1330 = vrot.lane.b32.xlu0 %v1306, 96
        %v1331 = vpop.permute.xlu0 %1330
        %1332 = vrot.lane.b32.xlu0 %v1309, 96
        %v1333 = vpop.permute.xlu0 %1332
        %v1336 = vsel %vm822, %v934, %v1315
        %v1337 = vsel %vm822, %v937, %v1317
        %vm1338 = vcmask 523264
        %v1339 = vsel %vm1338, %v1336, %v1323
        %v1340 = vsel %vm1338, %v1337, %v1325
        %vm1341 = vcmask 785408
        %v1342 = vsel %vm1341, %v1339, %v1331
        %v1343 = vsel %vm1341, %v1340, %v1333
        %v1344 = vpack.c.bf16 %v1343, %v1342
        %v1345 = vld [vmem:[#allocation4] sm:$0xf]
        %v1346 = vld [vmem:[#allocation4 + $0x4] sm:$0xf]
        %v1347 = vld [vmem:[#allocation4 + $0x8] sm:$0xf]
        %v1348 = vld [vmem:[#allocation4 + $0xc] sm:$0xf]
        %v1349 = vld [vmem:[#allocation4 + $0x10] sm:$0xf]
        %v1350 = vld [vmem:[#allocation4 + $0x14] sm:$0xf]
        %v1351 = vld [vmem:[#allocation4 + $0x18] sm:$0xf]
        %v1352 = vld [vmem:[#allocation4 + $0x1c] sm:$0xf]
        %v1353 = vld [vmem:[#allocation4 + $0x20] sm:$0xf]
        %v1354 = vld [vmem:[#allocation4 + $0x24] sm:$0xf]
        %v1355 = vld [vmem:[#allocation4 + $0x28] sm:$0xf]
        %v1356 = vld [vmem:[#allocation4 + $0x2c] sm:$0xf]
        %v1357 = vld [vmem:[#allocation4 + $0x30] sm:$0xf]
        %v1358 = vld [vmem:[#allocation4 + $0x34] sm:$0xf]
        %v1359 = vld [vmem:[#allocation4 + $0x38] sm:$0xf]
        %v1360 = vld [vmem:[#allocation4 + $0x3c] sm:$0xf]
        %v1361 = vld [vmem:[#allocation6] sm:$0x1]
        %v1363 = vlaneseq
        %v1364 = vshrl.u32 %v1363, 7
        %v1365 = vsub.s32 0, %v1364
        %v1366 = vrot.slane %v1361, %v1365
        %v1384 = vunpack.c.l.b16 %v1345
        %v1385 = vunpack.c.l.b16 %v1346
        %v1386 = vunpack.c.l.b16 %v1347
        %v1387 = vunpack.c.l.b16 %v1348
        %v1388 = vunpack.c.l.b16 %v1349
        %v1389 = vunpack.c.l.b16 %v1350
        %v1390 = vunpack.c.l.b16 %v1351
        %v1391 = vunpack.c.l.b16 %v1352
        %v1392 = vunpack.c.l.b16 %v1353
        %v1393 = vunpack.c.l.b16 %v1354
        %v1394 = vunpack.c.l.b16 %v1355
        %v1395 = vunpack.c.l.b16 %v1356
        %v1396 = vunpack.c.l.b16 %v1357
        %v1397 = vunpack.c.l.b16 %v1358
        %v1398 = vunpack.c.l.b16 %v1359
        %v1399 = vunpack.c.l.b16 %v1360
        %v1400 = vpack.c.b16 %v1385, %v1384
        %v1401 = vpack.c.b16 %v1387, %v1386
        %v1402 = vpack.c.b16 %v1389, %v1388
        %v1403 = vpack.c.b16 %v1391, %v1390
        %v1404 = vpack.c.b16 %v1393, %v1392
        %v1405 = vpack.c.b16 %v1395, %v1394
        %v1406 = vpack.c.b16 %v1397, %v1396
        %v1407 = vpack.c.b16 %v1399, %v1398
        %1416 = vmatprep.subr.bf16.mxu0 0
        %1417 = vmatpush1.bf16.msra.mxu0 %v1400
        %1418 = vmatprep.subr.bf16.mxu0 0
        %1419 = vmatpush1.bf16.msra.mxu0 %v1401
        %1420 = vmatprep.subr.bf16.mxu0 0
        %1421 = vmatpush1.bf16.msra.mxu0 %v1402
        %1422 = vmatprep.subr.bf16.mxu0 0
        %1423 = vmatpush1.bf16.msra.mxu0 %v1403
        %1424 = vmatprep.subr.bf16.mxu0 0
        %1425 = vmatpush1.bf16.msra.mxu0 %v1404
        %1426 = vmatprep.subr.bf16.mxu0 0
        %1427 = vmatpush1.bf16.msra.mxu0 %v1405
        %1428 = vmatprep.subr.bf16.mxu0 0
        %1429 = vmatpush1.bf16.msra.mxu0 %v1406
        %1430 = vmatprep.subr.bf16.mxu0 0
        %1431 = vmatpush1.bf16.msra.mxu0 %v1407
        %1432 = vmatprep.subr.bf16.mxu0 0
        %1433 = vmatpush1.bf16.msra.mxu0 0
        %1434 = vmatprep.subr.bf16.mxu0 0
        %1435 = vmatpush1.bf16.msra.mxu0 0
        %1436 = vmatprep.subr.bf16.mxu0 0
        %1437 = vmatpush1.bf16.msra.mxu0 0
        %1438 = vmatprep.subr.bf16.mxu0 0
        %1439 = vmatpush1.bf16.msra.mxu0 0
        %1440 = vmatprep.subr.bf16.mxu0 0
        %1441 = vmatpush1.bf16.msra.mxu0 0
        %1442 = vmatprep.subr.bf16.mxu0 0
        %1443 = vmatpush1.bf16.msra.mxu0 0
        %1444 = vmatprep.subr.bf16.mxu0 0
        %1445 = vmatpush1.bf16.msra.mxu0 0
        %1446 = vmatprep.subr.bf16.mxu0 0
        %1447 = vmatpush1.bf16.msra.mxu0 0
        %1448 = vmatprep.mubr.bf16.mxu0 0
        %1449 = vmatmul.mubr.bf16.gmra.mrb[0].mxu0 %v1344
        %v1450 = vpop.f32.mrb[0].mxu0
        %v1451 = vadd.f32 %v1366, %v1450
        %v1452 = vpop.f32.mrb[0].mxu0
        %v1453 = vpop.f32.mrb[0].mxu0
        %v1454 = vadd.f32 %v1366, %v1453
        %v1455 = vpop.f32.mrb[0].mxu0
        %1456 = vdwg.mxu0
        %v1457 = vadd.f32 %v430, %v1451
        %v1458 = vadd.f32 %v431, %v1454
        %v1459 = vpack.c.bf16 %v1458, %v1457
        %v1461 = vunpack.c.l.b16 %v1459
        %v1462 = vunpack.c.h.b16 %v1459
        %v1463 = vpack.c.b16 %v1461, %v1461
        %v1464 = vpack.c.b16 %v1462, %v1462
        %1467 = vst [vmem:[%s426] sm:$0xf] %v1463
        %1468 = vst [vmem:[%s426 + $0x4] sm:$0xf] %v1464
        %p1469 = scmp.lt.s32.totalorder %s24, 1
        %s1470 = scalar_select %p1469, %s24, 1
        %s1471 = smul.addr %s1470, 2
        %s1472 = smul.addr %s1471, 4
        %s1473 = scalar_lea.vmem %s11, %s1472
        // Predicated region
        $region77: #{lairgpt_forward.5} parent=63 // pred_check
          %p1474 = pneg %p278
        $region78: #{lairgpt_forward.5} parent=63 // pred_check_branch
          %1476 = sbr.rel (%p1474) target = $region80
        $region79: #{lairgpt_forward.5} parent=63 // pred_region
          _
        $region80: #{lairgpt_forward.5} parent=63 // pred_fallthru
          _
      $region64: #{lairgpt_forward.5} parent=5 // pred_fallthru
        _
      %p1477 = scmp.le.s32.totalorder 2, %s19
      // Predicated region
      $region81: #{lairgpt_forward.5} parent=5 // pred_check
        %p1478 = pneg %p1477
      $region82: #{lairgpt_forward.5} parent=5 // pred_check_branch
        %1480 = sbr.rel (%p1478) target = $region84
      $region83: #{lairgpt_forward.5} parent=5 // pred_region
        %s1481 = ssub.s32 %s19, 2
        // Predicated region
        $region85: #{lairgpt_forward.5} parent=83 // pred_check
          %p1482 = pneg %p284
        $region86: #{lairgpt_forward.5} parent=83 // pred_check_branch
          %1484 = sbr.rel (%p1482) target = $region88
        $region87: #{lairgpt_forward.5} parent=83 // pred_region
          %p1485 = scmp.lt.s32.totalorder %s25, 1
          %s1486 = scalar_select %p1485, %s25, 1
          %s1487 = smul.addr %s1486, 2
          %s1488 = smul.addr %s1487, 4
          %s1489 = scalar_lea.vmem %s11, %s1488
        $region88: #{lairgpt_forward.5} parent=83 // pred_fallthru
          _
      $region84: #{lairgpt_forward.5} parent=5 // pred_fallthru
        _
    $region6: #{lairgpt_forward.5} parent=1 // loop_footer
      %s23 = sadd.s32 1, %s19
    $region7: #{lairgpt_forward.5} parent=1 // loop_footer_branch
      %18 = sbr.rel target = $region3
    $region8: #{lairgpt_forward.5} parent=1 // loop_exit
      _
    %1490 = vsyncpa [#allocation3], 1
    %s1491 = scalar_lea.sflag [#allocation3], 1
    %1492 = vsyncpa %s1491, 1
    %1493 = vsyncpa [#allocation5], 1

// kernel: lairgpt_forward.8
$region0: #{lairgpt_forward.8}
  #allocation0 [shape = 'u32[]', space=smem, size = 0x4, offset = 0x4, fixed_abs, tag = 'smem constant byte address 0x4 - core index']
  #allocation1 [shape = 'u32[144,128]{1,0:T(1,128)}', space=vmem, size = 0x12000, scoped, tag = 'internal scratch']
  #allocation2 [shape = 'bf16[32,128]{1,0:T(16,128)(2,1)}', space=vmem, size = 0x2000, scoped, tag = 'scratch operand']
  #allocation3 [shape = 'f32[32,128]{1,0:T(8,128)}', space=vmem, size = 0x4000, scoped, tag = 'scratch operand']
  %s0 = inlined_call_operand.vmem [shape: bf16[32,128], index: 0, kind: input, shape index: {}, may-alias: {0,7}]
  %s1 = inlined_call_operand.vmem [shape: f32[1,128], index: 1, kind: input, shape index: {}]
  %s2 = inlined_call_operand.vmem [shape: f32[1,128], index: 2, kind: input, shape index: {}]
  %s3 = inlined_call_operand.vmem [shape: bf16[128,512], index: 3, kind: input, shape index: {}]
  %s4 = inlined_call_operand.vmem [shape: f32[1,512], index: 4, kind: input, shape index: {}]
  %s5 = inlined_call_operand.vmem [shape: bf16[512,128], index: 5, kind: input, shape index: {}]
  %s6 = inlined_call_operand.vmem [shape: f32[1,128], index: 6, kind: input, shape index: {}]
  %s7 = inlined_call_operand.vmem [shape: bf16[32,128], index: 7, kind: output, shape index: {}, may-alias: {0,7}]
  %s8 = sld [smem:[#allocation0]]
  $region46: #{lairgpt_forward.8} parent=0
    _
  %s10 = ssub.s32 1, %s8
  %s11 = scalar_select 0, %s10, %s8
  // Predicated region
  $region2: #{lairgpt_forward.8} parent=0 // pred_check
    _
  $region3: #{lairgpt_forward.8} parent=0 // pred_check_branch
    %13 = sbr.rel (0) target = $region5
  $region4: #{lairgpt_forward.8} parent=0 // pred_region
    _
  $region5: #{lairgpt_forward.8} parent=0 // pred_fallthru
    _
  // Predicated region
  $region6: #{lairgpt_forward.8} parent=0 // pred_check
    _
  $region7: #{lairgpt_forward.8} parent=0 // pred_check_branch
    %15 = sbr.rel (0) target = $region9
  $region8: #{lairgpt_forward.8} parent=0 // pred_region
    _
  $region9: #{lairgpt_forward.8} parent=0 // pred_fallthru
    _
  // Predicated region
  $region10: #{lairgpt_forward.8} parent=0 // pred_check
    _
  $region11: #{lairgpt_forward.8} parent=0 // pred_check_branch
    %17 = sbr.rel (0) target = $region13
  $region12: #{lairgpt_forward.8} parent=0 // pred_region
    _
  $region13: #{lairgpt_forward.8} parent=0 // pred_fallthru
    _
  // Predicated region
  $region14: #{lairgpt_forward.8} parent=0 // pred_check
    _
  $region15: #{lairgpt_forward.8} parent=0 // pred_check_branch
    %19 = sbr.rel (0) target = $region17
  $region16: #{lairgpt_forward.8} parent=0 // pred_region
    _
  $region17: #{lairgpt_forward.8} parent=0 // pred_fallthru
    _
  // Predicated region
  $region18: #{lairgpt_forward.8} parent=0 // pred_check
    _
  $region19: #{lairgpt_forward.8} parent=0 // pred_check_branch
    %21 = sbr.rel (0) target = $region21
  $region20: #{lairgpt_forward.8} parent=0 // pred_region
    _
  $region21: #{lairgpt_forward.8} parent=0 // pred_fallthru
    _
  // Predicated region
  $region22: #{lairgpt_forward.8} parent=0 // pred_check
    _
  $region23: #{lairgpt_forward.8} parent=0 // pred_check_branch
    %23 = sbr.rel (0) target = $region25
  $region24: #{lairgpt_forward.8} parent=0 // pred_region
    _
  $region25: #{lairgpt_forward.8} parent=0 // pred_fallthru
    _
  // Predicated region
  $region26: #{lairgpt_forward.8} parent=0 // pred_check
    _
  $region27: #{lairgpt_forward.8} parent=0 // pred_check_branch
    %25 = sbr.rel (0) target = $region29
  $region28: #{lairgpt_forward.8} parent=0 // pred_region
    _
  $region29: #{lairgpt_forward.8} parent=0 // pred_fallthru
    _
  %p27 = scmp.eq.s32.totalorder 0, 0
  // Predicated region
  $region30: #{lairgpt_forward.8} parent=0 // pred_check
    %p28 = pneg %p27
  $region31: #{lairgpt_forward.8} parent=0 // pred_check_branch
    %30 = sbr.rel (%p28) target = $region33
  $region32: #{lairgpt_forward.8} parent=0 // pred_region
    %v31 = vld [vmem:[%s0] sm:$0xf]
    %v32 = vld [vmem:[%s0 + $0x4] sm:$0xf]
    %v33 = vld [vmem:[%s0 + $0x8] sm:$0xf]
    %v34 = vld [vmem:[%s0 + $0xc] sm:$0xf]
    %v35 = vunpack.c.l.bf16 %v31
    %v36 = vunpack.c.l.bf16 %v32
    %v37 = vunpack.c.l.bf16 %v33
    %v38 = vunpack.c.l.bf16 %v34
    %v39 = vld [vmem:[%s1] sm:$0x1]
    %v40 = vld [vmem:[%s2] sm:$0x1]
    %41 = vadd.xlane.f32.xlu0 %v35
    %v42 = vpop.xlane.xlu0 %41
    %43 = vadd.xlane.f32.xlu0 %v36
    %v44 = vpop.xlane.xlu0 %43
    %45 = vadd.xlane.f32.xlu0 %v37
    %v46 = vpop.xlane.xlu0 %45
    %47 = vadd.xlane.f32.xlu0 %v38
    %v48 = vpop.xlane.xlu0 %47
    %v49 = vrcp.pop 128.0
    %v50 = vmul.f32 %v42, %v49
    %v51 = vmul.f32 %v44, %v49
    %v52 = vmul.f32 %v46, %v49
    %v53 = vmul.f32 %v48, %v49
    %v54 = vsub.f32 %v35, %v50
    %v55 = vsub.f32 %v36, %v51
    %v56 = vsub.f32 %v37, %v52
    %v57 = vsub.f32 %v38, %v53
    %v58 = vmul.f32 %v54, %v54
    %v59 = vmul.f32 %v55, %v55
    %v60 = vmul.f32 %v56, %v56
    %v61 = vmul.f32 %v57, %v57
    %62 = vadd.xlane.f32.xlu0 %v58
    %v63 = vpop.xlane.xlu0 %62
    %64 = vadd.xlane.f32.xlu0 %v59
    %v65 = vpop.xlane.xlu0 %64
    %66 = vadd.xlane.f32.xlu0 %v60
    %v67 = vpop.xlane.xlu0 %66
    %68 = vadd.xlane.f32.xlu0 %v61
    %v69 = vpop.xlane.xlu0 %68
    %v70 = vmul.f32 %v63, %v49
    %v71 = vmul.f32 %v65, %v49
    %v72 = vmul.f32 %v67, %v49
    %v73 = vmul.f32 %v69, %v49
    %v74 = vadd.f32 %v70, 1e-05
    %v75 = vadd.f32 %v71, 1e-05
    %v76 = vadd.f32 %v72, 1e-05
    %v77 = vadd.f32 %v73, 1e-05
    %v78 = vrsqrt.pop %v74
    %v79 = vrsqrt.pop %v75
    %v80 = vrsqrt.pop %v76
    %v81 = vrsqrt.pop %v77
    %v82 = vmul.f32 %v54, %v78
    %v83 = vmul.f32 %v55, %v79
    %v84 = vmul.f32 %v56, %v80
    %v85 = vmul.f32 %v57, %v81
    %v87 = vlaneseq
    %v88 = vshrl.u32 %v87, 7
    %v89 = vsub.s32 0, %v88
    %v90 = vrot.slane %v39, %v89
    %v92 = vmul.f32 %v82, %v90
    %v93 = vmul.f32 %v83, %v90
    %v94 = vmul.f32 %v84, %v90
    %v95 = vmul.f32 %v85, %v90
    %v97 = vlaneseq
    %v98 = vshrl.u32 %v97, 7
    %v99 = vsub.s32 0, %v98
    %v100 = vrot.slane %v40, %v99
    %v102 = vadd.f32 %v92, %v100
    %v103 = vadd.f32 %v93, %v100
    %v104 = vadd.f32 %v94, %v100
    %v105 = vadd.f32 %v95, %v100
    %v106 = vpack.c.bf16 %v103, %v102
    %v107 = vpack.c.bf16 %v105, %v104
    %108 = vst [vmem:[#allocation2] sm:$0xff] %v106
    %109 = vst [vmem:[#allocation2 + $0x8] sm:$0xff] %v107
    %110 = vst [vmem:[#allocation3] sm:$0xff] %v35
    %111 = vst [vmem:[#allocation3 + $0x8] sm:$0xff] %v36
    %112 = vst [vmem:[#allocation3 + $0x10] sm:$0xff] %v37
    %113 = vst [vmem:[#allocation3 + $0x18] sm:$0xff] %v38
  $region33: #{lairgpt_forward.8} parent=0 // pred_fallthru
    _
  %v114 = vld [vmem:[#allocation2] sm:$0xff]
  %v115 = vld [vmem:[#allocation2 + $0x8] sm:$0xff]
  %v116 = vld [vmem:[%s3] sm:$0xff]
  %v117 = vld [vmem:[%s3 + $0x8] sm:$0xff]
  %v118 = vld [vmem:[%s3 + $0x10] sm:$0xff]
  %v119 = vld [vmem:[%s3 + $0x18] sm:$0xff]
  %v120 = vld [vmem:[%s3 + $0x20] sm:$0xff]
  %v121 = vld [vmem:[%s3 + $0x28] sm:$0xff]
  %v122 = vld [vmem:[%s3 + $0x30] sm:$0xff]
  %v123 = vld [vmem:[%s3 + $0x38] sm:$0xff]
  %v124 = vld [vmem:[%s3 + $0x40] sm:$0xff]
  %v125 = vld [vmem:[%s3 + $0x48] sm:$0xff]
  %v126 = vld [vmem:[%s3 + $0x50] sm:$0xff]
  %v127 = vld [vmem:[%s3 + $0x58] sm:$0xff]
  %v128 = vld [vmem:[%s3 + $0x60] sm:$0xff]
  %v129 = vld [vmem:[%s3 + $0x68] sm:$0xff]
  %v130 = vld [vmem:[%s3 + $0x70] sm:$0xff]
  %v131 = vld [vmem:[%s3 + $0x78] sm:$0xff]
  %v132 = vld [vmem:[%s3 + $0x80] sm:$0xff]
  %v133 = vld [vmem:[%s3 + $0x88] sm:$0xff]
  %v134 = vld [vmem:[%s3 + $0x90] sm:$0xff]
  %v135 = vld [vmem:[%s3 + $0x98] sm:$0xff]
  %v136 = vld [vmem:[%s3 + $0xa0] sm:$0xff]
  %v137 = vld [vmem:[%s3 + $0xa8] sm:$0xff]
  %v138 = vld [vmem:[%s3 + $0xb0] sm:$0xff]
  %v139 = vld [vmem:[%s3 + $0xb8] sm:$0xff]
  %v140 = vld [vmem:[%s3 + $0xc0] sm:$0xff]
  %v141 = vld [vmem:[%s3 + $0xc8] sm:$0xff]
  %v142 = vld [vmem:[%s3 + $0xd0] sm:$0xff]
  %v143 = vld [vmem:[%s3 + $0xd8] sm:$0xff]
  %v144 = vld [vmem:[%s3 + $0xe0] sm:$0xff]
  %v145 = vld [vmem:[%s3 + $0xe8] sm:$0xff]
  %v146 = vld [vmem:[%s3 + $0xf0] sm:$0xff]
  %v147 = vld [vmem:[%s3 + $0xf8] sm:$0xff]
  %v148 = vld [vmem:[%s4] sm:$0xf]
  %v150 = vlaneseq
  %v151 = vshrl.u32 %v150, 7
  %v152 = vsub.s32 0, %v151
  %v153 = vrot.slane %v148, %v152
  %v154 = vlaneseq
  %v155 = vshrl.u32 %v154, 7
  %v156 = vsub.s32 1, %v155
  %v157 = vrot.slane %v148, %v156
  %v158 = vlaneseq
  %v159 = vshrl.u32 %v158, 7
  %v160 = vsub.s32 2, %v159
  %v161 = vrot.slane %v148, %v160
  %v162 = vlaneseq
  %v163 = vshrl.u32 %v162, 7
  %v164 = vsub.s32 3, %v163
  %v165 = vrot.slane %v148, %v164
  %v202 = vunpack.c.l.b16 %v116
  %v203 = vunpack.c.h.b16 %v116
  %v204 = vunpack.c.l.b16 %v117
  %v205 = vunpack.c.h.b16 %v117
  %v206 = vunpack.c.l.b16 %v118
  %v207 = vunpack.c.h.b16 %v118
  %v208 = vunpack.c.l.b16 %v119
  %v209 = vunpack.c.h.b16 %v119
  %v210 = vunpack.c.l.b16 %v120
  %v211 = vunpack.c.h.b16 %v120
  %v212 = vunpack.c.l.b16 %v121
  %v213 = vunpack.c.h.b16 %v121
  %v214 = vunpack.c.l.b16 %v122
  %v215 = vunpack.c.h.b16 %v122
  %v216 = vunpack.c.l.b16 %v123
  %v217 = vunpack.c.h.b16 %v123
  %v218 = vunpack.c.l.b16 %v124
  %v219 = vunpack.c.h.b16 %v124
  %v220 = vunpack.c.l.b16 %v125
  %v221 = vunpack.c.h.b16 %v125
  %v222 = vunpack.c.l.b16 %v126
  %v223 = vunpack.c.h.b16 %v126
  %v224 = vunpack.c.l.b16 %v127
  %v225 = vunpack.c.h.b16 %v127
  %v226 = vunpack.c.l.b16 %v128
  %v227 = vunpack.c.h.b16 %v128
  %v228 = vunpack.c.l.b16 %v129
  %v229 = vunpack.c.h.b16 %v129
  %v230 = vunpack.c.l.b16 %v130
  %v231 = vunpack.c.h.b16 %v130
  %v232 = vunpack.c.l.b16 %v131
  %v233 = vunpack.c.h.b16 %v131
  %v234 = vunpack.c.l.b16 %v132
  %v235 = vunpack.c.h.b16 %v132
  %v236 = vunpack.c.l.b16 %v133
  %v237 = vunpack.c.h.b16 %v133
  %v238 = vunpack.c.l.b16 %v134
  %v239 = vunpack.c.h.b16 %v134
  %v240 = vunpack.c.l.b16 %v135
  %v241 = vunpack.c.h.b16 %v135
  %v242 = vunpack.c.l.b16 %v136
  %v243 = vunpack.c.h.b16 %v136
  %v244 = vunpack.c.l.b16 %v137
  %v245 = vunpack.c.h.b16 %v137
  %v246 = vunpack.c.l.b16 %v138
  %v247 = vunpack.c.h.b16 %v138
  %v248 = vunpack.c.l.b16 %v139
  %v249 = vunpack.c.h.b16 %v139
  %v250 = vunpack.c.l.b16 %v140
  %v251 = vunpack.c.h.b16 %v140
  %v252 = vunpack.c.l.b16 %v141
  %v253 = vunpack.c.h.b16 %v141
  %v254 = vunpack.c.l.b16 %v142
  %v255 = vunpack.c.h.b16 %v142
  %v256 = vunpack.c.l.b16 %v143
  %v257 = vunpack.c.h.b16 %v143
  %v258 = vunpack.c.l.b16 %v144
  %v259 = vunpack.c.h.b16 %v144
  %v260 = vunpack.c.l.b16 %v145
  %v261 = vunpack.c.h.b16 %v145
  %v262 = vunpack.c.l.b16 %v146
  %v263 = vunpack.c.h.b16 %v146
  %v264 = vunpack.c.l.b16 %v147
  %v265 = vunpack.c.h.b16 %v147
  %v266 = vpack.c.b16 %v206, %v202
  %v267 = vpack.c.b16 %v207, %v203
  %v268 = vpack.c.b16 %v208, %v204
  %v269 = vpack.c.b16 %v209, %v205
  %v270 = vpack.c.b16 %v214, %v210
  %v271 = vpack.c.b16 %v215, %v211
  %v272 = vpack.c.b16 %v216, %v212
  %v273 = vpack.c.b16 %v217, %v213
  %v274 = vpack.c.b16 %v222, %v218
  %v275 = vpack.c.b16 %v223, %v219
  %v276 = vpack.c.b16 %v224, %v220
  %v277 = vpack.c.b16 %v225, %v221
  %v278 = vpack.c.b16 %v230, %v226
  %v279 = vpack.c.b16 %v231, %v227
  %v280 = vpack.c.b16 %v232, %v228
  %v281 = vpack.c.b16 %v233, %v229
  %v282 = vpack.c.b16 %v238, %v234
  %v283 = vpack.c.b16 %v239, %v235
  %v284 = vpack.c.b16 %v240, %v236
  %v285 = vpack.c.b16 %v241, %v237
  %v286 = vpack.c.b16 %v246, %v242
  %v287 = vpack.c.b16 %v247, %v243
  %v288 = vpack.c.b16 %v248, %v244
  %v289 = vpack.c.b16 %v249, %v245
  %v290 = vpack.c.b16 %v254, %v250
  %v291 = vpack.c.b16 %v255, %v251
  %v292 = vpack.c.b16 %v256, %v252
  %v293 = vpack.c.b16 %v257, %v253
  %v294 = vpack.c.b16 %v262, %v258
  %v295 = vpack.c.b16 %v263, %v259
  %v296 = vpack.c.b16 %v264, %v260
  %v297 = vpack.c.b16 %v265, %v261
  %330 = vmatprep.subr.bf16.mxu0 %v267
  %331 = vmatpush1.bf16.msra.mxu0 %v266
  %332 = vmatprep.subr.bf16.mxu0 %v271
  %333 = vmatpush1.bf16.msra.mxu0 %v270
  %334 = vmatprep.subr.bf16.mxu0 %v275
  %335 = vmatpush1.bf16.msra.mxu0 %v274
  %336 = vmatprep.subr.bf16.mxu0 %v279
  %337 = vmatpush1.bf16.msra.mxu0 %v278
  %338 = vmatprep.subr.bf16.mxu0 %v283
  %339 = vmatpush1.bf16.msra.mxu0 %v282
  %340 = vmatprep.subr.bf16.mxu0 %v287
  %341 = vmatpush1.bf16.msra.mxu0 %v286
  %342 = vmatprep.subr.bf16.mxu0 %v291
  %343 = vmatpush1.bf16.msra.mxu0 %v290
  %344 = vmatprep.subr.bf16.mxu0 %v295
  %345 = vmatpush1.bf16.msra.mxu0 %v294
  %346 = vmatprep.subr.bf16.mxu0 0
  %347 = vmatpush1.bf16.msra.mxu0 0
  %348 = vmatprep.subr.bf16.mxu0 0
  %349 = vmatpush1.bf16.msra.mxu0 0
  %350 = vmatprep.subr.bf16.mxu0 0
  %351 = vmatpush1.bf16.msra.mxu0 0
  %352 = vmatprep.subr.bf16.mxu0 0
  %353 = vmatpush1.bf16.msra.mxu0 0
  %354 = vmatprep.subr.bf16.mxu0 0
  %355 = vmatpush1.bf16.msra.mxu0 0
  %356 = vmatprep.subr.bf16.mxu0 0
  %357 = vmatpush1.bf16.msra.mxu0 0
  %358 = vmatprep.subr.bf16.mxu0 0
  %359 = vmatpush1.bf16.msra.mxu0 0
  %360 = vmatprep.subr.bf16.mxu0 0
  %361 = vmatpush1.bf16.msra.mxu0 0
  %362 = vmatprep.mubr.bf16.mxu0 0
  %363 = vmatmul.mubr.bf16.gmra.mrb[0].mxu0 %v114
  %v364 = vpop.f32.mrb[0].mxu0
  %v365 = vadd.f32 %v153, %v364
  %v366 = vpop.f32.mrb[0].mxu0
  %v367 = vadd.f32 %v157, %v366
  %v368 = vpop.f32.mrb[0].mxu0
  %v369 = vadd.f32 %v153, %v368
  %v370 = vpop.f32.mrb[0].mxu0
  %v371 = vadd.f32 %v157, %v370
  %372 = vmatprep.mubr.bf16.mxu0 0
  %373 = vmatmul.mubr.bf16.gmra.mrb[0].mxu0 %v115
  %v374 = vpop.f32.mrb[0].mxu0
  %v375 = vadd.f32 %v153, %v374
  %v376 = vpop.f32.mrb[0].mxu0
  %v377 = vadd.f32 %v157, %v376
  %v378 = vpop.f32.mrb[0].mxu0
  %v379 = vadd.f32 %v153, %v378
  %v380 = vpop.f32.mrb[0].mxu0
  %v381 = vadd.f32 %v157, %v380
  %382 = vdwg.mxu0
  %383 = vmatprep.subr.bf16.mxu0 %v269
  %384 = vmatpush1.bf16.msra.mxu0 %v268
  %385 = vmatprep.subr.bf16.mxu0 %v273
  %386 = vmatpush1.bf16.msra.mxu0 %v272
  %387 = vmatprep.subr.bf16.mxu0 %v277
  %388 = vmatpush1.bf16.msra.mxu0 %v276
  %389 = vmatprep.subr.bf16.mxu0 %v281
  %390 = vmatpush1.bf16.msra.mxu0 %v280
  %391 = vmatprep.subr.bf16.mxu0 %v285
  %392 = vmatpush1.bf16.msra.mxu0 %v284
  %393 = vmatprep.subr.bf16.mxu0 %v289
  %394 = vmatpush1.bf16.msra.mxu0 %v288
  %395 = vmatprep.subr.bf16.mxu0 %v293
  %396 = vmatpush1.bf16.msra.mxu0 %v292
  %397 = vmatprep.subr.bf16.mxu0 %v297
  %398 = vmatpush1.bf16.msra.mxu0 %v296
  %399 = vmatprep.subr.bf16.mxu0 0
  %400 = vmatpush1.bf16.msra.mxu0 0
  %401 = vmatprep.subr.bf16.mxu0 0
  %402 = vmatpush1.bf16.msra.mxu0 0
  %403 = vmatprep.subr.bf16.mxu0 0
  %404 = vmatpush1.bf16.msra.mxu0 0
  %405 = vmatprep.subr.bf16.mxu0 0
  %406 = vmatpush1.bf16.msra.mxu0 0
  %407 = vmatprep.subr.bf16.mxu0 0
  %408 = vmatpush1.bf16.msra.mxu0 0
  %409 = vmatprep.subr.bf16.mxu0 0
  %410 = vmatpush1.bf16.msra.mxu0 0
  %411 = vmatprep.subr.bf16.mxu0 0
  %412 = vmatpush1.bf16.msra.mxu0 0
  %413 = vmatprep.subr.bf16.mxu0 0
  %414 = vmatpush1.bf16.msra.mxu0 0
  %415 = vmatprep.mubr.bf16.mxu0 0
  %416 = vmatmul.mubr.bf16.gmra.mrb[0].mxu0 %v114
  %v417 = vpop.f32.mrb[0].mxu0
  %v418 = vadd.f32 %v161, %v417
  %v419 = vpop.f32.mrb[0].mxu0
  %v420 = vadd.f32 %v165, %v419
  %v421 = vpop.f32.mrb[0].mxu0
  %v422 = vadd.f32 %v161, %v421
  %v423 = vpop.f32.mrb[0].mxu0
  %v424 = vadd.f32 %v165, %v423
  %425 = vmatprep.mubr.bf16.mxu0 0
  %426 = vmatmul.mubr.bf16.gmra.mrb[0].mxu0 %v115
  %v427 = vpop.f32.mrb[0].mxu0
  %v428 = vadd.f32 %v161, %v427
  %v429 = vpop.f32.mrb[0].mxu0
  %v430 = vadd.f32 %v165, %v429
  %v431 = vpop.f32.mrb[0].mxu0
  %v432 = vadd.f32 %v161, %v431
  %v433 = vpop.f32.mrb[0].mxu0
  %v434 = vadd.f32 %v165, %v433
  %435 = vdwg.mxu0
  %v436 = vmul.f32 %v365, %v365
  %v437 = vmul.f32 %v367, %v367
  %v438 = vmul.f32 %v418, %v418
  %v439 = vmul.f32 %v420, %v420
  %v440 = vmul.f32 %v369, %v369
  %v441 = vmul.f32 %v371, %v371
  %v442 = vmul.f32 %v422, %v422
  %v443 = vmul.f32 %v424, %v424
  %v444 = vmul.f32 %v375, %v375
  %v445 = vmul.f32 %v377, %v377
  %v446 = vmul.f32 %v428, %v428
  %v447 = vmul.f32 %v430, %v430
  %v448 = vmul.f32 %v379, %v379
  %v449 = vmul.f32 %v381, %v381
  %v450 = vmul.f32 %v432, %v432
  %v451 = vmul.f32 %v434, %v434
  %v452 = vmul.f32 %v365, %v436
  %v453 = vmul.f32 %v367, %v437
  %v454 = vmul.f32 %v418, %v438
  %v455 = vmul.f32 %v420, %v439
  %v456 = vmul.f32 %v369, %v440
  %v457 = vmul.f32 %v371, %v441
  %v458 = vmul.f32 %v422, %v442
  %v459 = vmul.f32 %v424, %v443
  %v460 = vmul.f32 %v375, %v444
  %v461 = vmul.f32 %v377, %v445
  %v462 = vmul.f32 %v428, %v446
  %v463 = vmul.f32 %v430, %v447
  %v464 = vmul.f32 %v379, %v448
  %v465 = vmul.f32 %v381, %v449
  %v466 = vmul.f32 %v432, %v450
  %v467 = vmul.f32 %v434, %v451
  %v468 = vmul.f32 %v452, 0.044715
  %v469 = vmul.f32 %v453, 0.044715
  %v470 = vmul.f32 %v454, 0.044715
  %v471 = vmul.f32 %v455, 0.044715
  %v472 = vmul.f32 %v456, 0.044715
  %v473 = vmul.f32 %v457, 0.044715
  %v474 = vmul.f32 %v458, 0.044715
  %v475 = vmul.f32 %v459, 0.044715
  %v476 = vmul.f32 %v460, 0.044715
  %v477 = vmul.f32 %v461, 0.044715
  %v478 = vmul.f32 %v462, 0.044715
  %v479 = vmul.f32 %v463, 0.044715
  %v480 = vmul.f32 %v464, 0.044715
  %v481 = vmul.f32 %v465, 0.044715
  %v482 = vmul.f32 %v466, 0.044715
  %v483 = vmul.f32 %v467, 0.044715
  %v484 = vadd.f32 %v365, %v468
  %v485 = vadd.f32 %v367, %v469
  %v486 = vadd.f32 %v418, %v470
  %v487 = vadd.f32 %v420, %v471
  %v488 = vadd.f32 %v369, %v472
  %v489 = vadd.f32 %v371, %v473
  %v490 = vadd.f32 %v422, %v474
  %v491 = vadd.f32 %v424, %v475
  %v492 = vadd.f32 %v375, %v476
  %v493 = vadd.f32 %v377, %v477
  %v494 = vadd.f32 %v428, %v478
  %v495 = vadd.f32 %v430, %v479
  %v496 = vadd.f32 %v379, %v480
  %v497 = vadd.f32 %v381, %v481
  %v498 = vadd.f32 %v432, %v482
  %v499 = vadd.f32 %v434, %v483
  %v500 = vmul.f32 %v484, 0.7978846
  %v501 = vmul.f32 %v485, 0.7978846
  %v502 = vmul.f32 %v486, 0.7978846
  %v503 = vmul.f32 %v487, 0.7978846
  %v504 = vmul.f32 %v488, 0.7978846
  %v505 = vmul.f32 %v489, 0.7978846
  %v506 = vmul.f32 %v490, 0.7978846
  %v507 = vmul.f32 %v491, 0.7978846
  %v508 = vmul.f32 %v492, 0.7978846
  %v509 = vmul.f32 %v493, 0.7978846
  %v510 = vmul.f32 %v494, 0.7978846
  %v511 = vmul.f32 %v495, 0.7978846
  %v512 = vmul.f32 %v496, 0.7978846
  %v513 = vmul.f32 %v497, 0.7978846
  %v514 = vmul.f32 %v498, 0.7978846
  %v515 = vmul.f32 %v499, 0.7978846
  %v516 = vtanh.pop %v500
  %v517 = vtanh.pop %v501
  %v518 = vtanh.pop %v502
  %v519 = vtanh.pop %v503
  %v520 = vtanh.pop %v504
  %v521 = vtanh.pop %v505
  %v522 = vtanh.pop %v506
  %v523 = vtanh.pop %v507
  %v524 = vtanh.pop %v508
  %v525 = vtanh.pop %v509
  %v526 = vtanh.pop %v510
  %v527 = vtanh.pop %v511
  %v528 = vtanh.pop %v512
  %v529 = vtanh.pop %v513
  %v530 = vtanh.pop %v514
  %v531 = vtanh.pop %v515
  %v532 = vadd.f32 %v516, 1.0
  %v533 = vadd.f32 %v517, 1.0
  %v534 = vadd.f32 %v518, 1.0
  %v535 = vadd.f32 %v519, 1.0
  %v536 = vadd.f32 %v520, 1.0
  %v537 = vadd.f32 %v521, 1.0
  %v538 = vadd.f32 %v522, 1.0
  %v539 = vadd.f32 %v523, 1.0
  %v540 = vadd.f32 %v524, 1.0
  %v541 = vadd.f32 %v525, 1.0
  %v542 = vadd.f32 %v526, 1.0
  %v543 = vadd.f32 %v527, 1.0
  %v544 = vadd.f32 %v528, 1.0
  %v545 = vadd.f32 %v529, 1.0
  %v546 = vadd.f32 %v530, 1.0
  %v547 = vadd.f32 %v531, 1.0
  %v548 = vmul.f32 %v532, 0.5
  %v549 = vmul.f32 %v533, 0.5
  %v550 = vmul.f32 %v534, 0.5
  %v551 = vmul.f32 %v535, 0.5
  %v552 = vmul.f32 %v536, 0.5
  %v553 = vmul.f32 %v537, 0.5
  %v554 = vmul.f32 %v538, 0.5
  %v555 = vmul.f32 %v539, 0.5
  %v556 = vmul.f32 %v540, 0.5
  %v557 = vmul.f32 %v541, 0.5
  %v558 = vmul.f32 %v542, 0.5
  %v559 = vmul.f32 %v543, 0.5
  %v560 = vmul.f32 %v544, 0.5
  %v561 = vmul.f32 %v545, 0.5
  %v562 = vmul.f32 %v546, 0.5
  %v563 = vmul.f32 %v547, 0.5
  %v564 = vmul.f32 %v365, %v548
  %v565 = vmul.f32 %v367, %v549
  %v566 = vmul.f32 %v418, %v550
  %v567 = vmul.f32 %v420, %v551
  %v568 = vmul.f32 %v369, %v552
  %v569 = vmul.f32 %v371, %v553
  %v570 = vmul.f32 %v422, %v554
  %v571 = vmul.f32 %v424, %v555
  %v572 = vmul.f32 %v375, %v556
  %v573 = vmul.f32 %v377, %v557
  %v574 = vmul.f32 %v428, %v558
  %v575 = vmul.f32 %v430, %v559
  %v576 = vmul.f32 %v379, %v560
  %v577 = vmul.f32 %v381, %v561
  %v578 = vmul.f32 %v432, %v562
  %v579 = vmul.f32 %v434, %v563
  %v580 = vld [vmem:[#allocation3] sm:$0xff]
  %v581 = vld [vmem:[#allocation3 + $0x8] sm:$0xff]
  %v582 = vld [vmem:[#allocation3 + $0x10] sm:$0xff]
  %v583 = vld [vmem:[#allocation3 + $0x18] sm:$0xff]
  %v584 = vpack.c.bf16 %v568, %v564
  %v585 = vpack.c.bf16 %v569, %v565
  %v586 = vpack.c.bf16 %v570, %v566
  %v587 = vpack.c.bf16 %v571, %v567
  %v588 = vpack.c.bf16 %v576, %v572
  %v589 = vpack.c.bf16 %v577, %v573
  %v590 = vpack.c.bf16 %v578, %v574
  %v591 = vpack.c.bf16 %v579, %v575
  %v592 = vld [vmem:[%s5] sm:$0xf]
  %v593 = vld [vmem:[%s5 + $0x4] sm:$0xf]
  %v594 = vld [vmem:[%s5 + $0x8] sm:$0xf]
  %v595 = vld [vmem:[%s5 + $0xc] sm:$0xf]
  %v596 = vld [vmem:[%s5 + $0x10] sm:$0xf]
  %v597 = vld [vmem:[%s5 + $0x14] sm:$0xf]
  %v598 = vld [vmem:[%s5 + $0x18] sm:$0xf]
  %v599 = vld [vmem:[%s5 + $0x1c] sm:$0xf]
  %v600 = vld [vmem:[%s5 + $0x20] sm:$0xf]
  %v601 = vld [vmem:[%s5 + $0x24] sm:$0xf]
  %v602 = vld [vmem:[%s5 + $0x28] sm:$0xf]
  %v603 = vld [vmem:[%s5 + $0x2c] sm:$0xf]
  %v604 = vld [vmem:[%s5 + $0x30] sm:$0xf]
  %v605 = vld [vmem:[%s5 + $0x34] sm:$0xf]
  %v606 = vld [vmem:[%s5 + $0x38] sm:$0xf]
  %v607 = vld [vmem:[%s5 + $0x3c] sm:$0xf]
  %v608 = vld [vmem:[%s5 + $0x40] sm:$0xf]
  %v609 = vld [vmem:[%s5 + $0x44] sm:$0xf]
  %v610 = vld [vmem:[%s5 + $0x48] sm:$0xf]
  %v611 = vld [vmem:[%s5 + $0x4c] sm:$0xf]
  %v612 = vld [vmem:[%s5 + $0x50] sm:$0xf]
  %v613 = vld [vmem:[%s5 + $0x54] sm:$0xf]
  %v614 = vld [vmem:[%s5 + $0x58] sm:$0xf]
  %v615 = vld [vmem:[%s5 + $0x5c] sm:$0xf]
  %v616 = vld [vmem:[%s5 + $0x60] sm:$0xf]
  %v617 = vld [vmem:[%s5 + $0x64] sm:$0xf]
  %v618 = vld [vmem:[%s5 + $0x68] sm:$0xf]
  %v619 = vld [vmem:[%s5 + $0x6c] sm:$0xf]
  %v620 = vld [vmem:[%s5 + $0x70] sm:$0xf]
  %v621 = vld [vmem:[%s5 + $0x74] sm:$0xf]
  %v622 = vld [vmem:[%s5 + $0x78] sm:$0xf]
  %v623 = vld [vmem:[%s5 + $0x7c] sm:$0xf]
  %v624 = vld [vmem:[%s5 + $0x80] sm:$0xf]
  %v625 = vld [vmem:[%s5 + $0x84] sm:$0xf]
  %v626 = vld [vmem:[%s5 + $0x88] sm:$0xf]
  %v627 = vld [vmem:[%s5 + $0x8c] sm:$0xf]
  %v628 = vld [vmem:[%s5 + $0x90] sm:$0xf]
  %v629 = vld [vmem:[%s5 + $0x94] sm:$0xf]
  %v630 = vld [vmem:[%s5 + $0x98] sm:$0xf]
  %v631 = vld [vmem:[%s5 + $0x9c] sm:$0xf]
  %v632 = vld [vmem:[%s5 + $0xa0] sm:$0xf]
  %v633 = vld [vmem:[%s5 + $0xa4] sm:$0xf]
  %v634 = vld [vmem:[%s5 + $0xa8] sm:$0xf]
  %v635 = vld [vmem:[%s5 + $0xac] sm:$0xf]
  %v636 = vld [vmem:[%s5 + $0xb0] sm:$0xf]
  %v637 = vld [vmem:[%s5 + $0xb4] sm:$0xf]
  %v638 = vld [vmem:[%s5 + $0xb8] sm:$0xf]
  %v639 = vld [vmem:[%s5 + $0xbc] sm:$0xf]
  %v640 = vld [vmem:[%s5 + $0xc0] sm:$0xf]
  %v641 = vld [vmem:[%s5 + $0xc4] sm:$0xf]
  %v642 = vld [vmem:[%s5 + $0xc8] sm:$0xf]
  %v643 = vld [vmem:[%s5 + $0xcc] sm:$0xf]
  %v644 = vld [vmem:[%s5 + $0xd0] sm:$0xf]
  %v645 = vld [vmem:[%s5 + $0xd4] sm:$0xf]
  %v646 = vld [vmem:[%s5 + $0xd8] sm:$0xf]
  %v647 = vld [vmem:[%s5 + $0xdc] sm:$0xf]
  %v648 = vld [vmem:[%s5 + $0xe0] sm:$0xf]
  %v649 = vld [vmem:[%s5 + $0xe4] sm:$0xf]
  %v650 = vld [vmem:[%s5 + $0xe8] sm:$0xf]
  %v651 = vld [vmem:[%s5 + $0xec] sm:$0xf]
  %v652 = vld [vmem:[%s5 + $0xf0] sm:$0xf]
  %v653 = vld [vmem:[%s5 + $0xf4] sm:$0xf]
  %v654 = vld [vmem:[%s5 + $0xf8] sm:$0xf]
  %v655 = vld [vmem:[%s5 + $0xfc] sm:$0xf]
  %v720 = vunpack.c.l.b16 %v592
  %v721 = vunpack.c.l.b16 %v593
  %v722 = vunpack.c.l.b16 %v594
  %v723 = vunpack.c.l.b16 %v595
  %v724 = vunpack.c.l.b16 %v596
  %v725 = vunpack.c.l.b16 %v597
  %v726 = vunpack.c.l.b16 %v598
  %v727 = vunpack.c.l.b16 %v599
  %v728 = vunpack.c.l.b16 %v600
  %v729 = vunpack.c.l.b16 %v601
  %v730 = vunpack.c.l.b16 %v602
  %v731 = vunpack.c.l.b16 %v603
  %v732 = vunpack.c.l.b16 %v604
  %v733 = vunpack.c.l.b16 %v605
  %v734 = vunpack.c.l.b16 %v606
  %v735 = vunpack.c.l.b16 %v607
  %v736 = vunpack.c.l.b16 %v608
  %v737 = vunpack.c.l.b16 %v609
  %v738 = vunpack.c.l.b16 %v610
  %v739 = vunpack.c.l.b16 %v611
  %v740 = vunpack.c.l.b16 %v612
  %v741 = vunpack.c.l.b16 %v613
  %v742 = vunpack.c.l.b16 %v614
  %v743 = vunpack.c.l.b16 %v615
  %v744 = vunpack.c.l.b16 %v616
  %v745 = vunpack.c.l.b16 %v617
  %v746 = vunpack.c.l.b16 %v618
  %v747 = vunpack.c.l.b16 %v619
  %v748 = vunpack.c.l.b16 %v620
  %v749 = vunpack.c.l.b16 %v621
  %v750 = vunpack.c.l.b16 %v622
  %v751 = vunpack.c.l.b16 %v623
  %v752 = vunpack.c.l.b16 %v624
  %v753 = vunpack.c.l.b16 %v625
  %v754 = vunpack.c.l.b16 %v626
  %v755 = vunpack.c.l.b16 %v627
  %v756 = vunpack.c.l.b16 %v628
  %v757 = vunpack.c.l.b16 %v629
  %v758 = vunpack.c.l.b16 %v630
  %v759 = vunpack.c.l.b16 %v631
  %v760 = vunpack.c.l.b16 %v632
  %v761 = vunpack.c.l.b16 %v633
  %v762 = vunpack.c.l.b16 %v634
  %v763 = vunpack.c.l.b16 %v635
  %v764 = vunpack.c.l.b16 %v636
  %v765 = vunpack.c.l.b16 %v637
  %v766 = vunpack.c.l.b16 %v638
  %v767 = vunpack.c.l.b16 %v639
  %v768 = vunpack.c.l.b16 %v640
  %v769 = vunpack.c.l.b16 %v641
  %v770 = vunpack.c.l.b16 %v642
  %v771 = vunpack.c.l.b16 %v643
  %v772 = vunpack.c.l.b16 %v644
  %v773 = vunpack.c.l.b16 %v645
  %v774 = vunpack.c.l.b16 %v646
  %v775 = vunpack.c.l.b16 %v647
  %v776 = vunpack.c.l.b16 %v648
  %v777 = vunpack.c.l.b16 %v649
  %v778 = vunpack.c.l.b16 %v650
  %v779 = vunpack.c.l.b16 %v651
  %v780 = vunpack.c.l.b16 %v652
  %v781 = vunpack.c.l.b16 %v653
  %v782 = vunpack.c.l.b16 %v654
  %v783 = vunpack.c.l.b16 %v655
  %v784 = vpack.c.b16 %v721, %v720
  %v785 = vpack.c.b16 %v723, %v722
  %v786 = vpack.c.b16 %v725, %v724
  %v787 = vpack.c.b16 %v727, %v726
  %v788 = vpack.c.b16 %v729, %v728
  %v789 = vpack.c.b16 %v731, %v730
  %v790 = vpack.c.b16 %v733, %v732
  %v791 = vpack.c.b16 %v735, %v734
  %v792 = vpack.c.b16 %v737, %v736
  %v793 = vpack.c.b16 %v739, %v738
  %v794 = vpack.c.b16 %v741, %v740
  %v795 = vpack.c.b16 %v743, %v742
  %v796 = vpack.c.b16 %v745, %v744
  %v797 = vpack.c.b16 %v747, %v746
  %v798 = vpack.c.b16 %v749, %v748
  %v799 = vpack.c.b16 %v751, %v750
  %v800 = vpack.c.b16 %v753, %v752
  %v801 = vpack.c.b16 %v755, %v754
  %v802 = vpack.c.b16 %v757, %v756
  %v803 = vpack.c.b16 %v759, %v758
  %v804 = vpack.c.b16 %v761, %v760
  %v805 = vpack.c.b16 %v763, %v762
  %v806 = vpack.c.b16 %v765, %v764
  %v807 = vpack.c.b16 %v767, %v766
  %v808 = vpack.c.b16 %v769, %v768
  %v809 = vpack.c.b16 %v771, %v770
  %v810 = vpack.c.b16 %v773, %v772
  %v811 = vpack.c.b16 %v775, %v774
  %v812 = vpack.c.b16 %v777, %v776
  %v813 = vpack.c.b16 %v779, %v778
  %v814 = vpack.c.b16 %v781, %v780
  %v815 = vpack.c.b16 %v783, %v782
  %848 = vmatprep.subr.bf16.mxu0 0
  %849 = vmatpush1.bf16.msra.mxu0 %v784
  %850 = vmatprep.subr.bf16.mxu0 0
  %851 = vmatpush1.bf16.msra.mxu0 %v785
  %852 = vmatprep.subr.bf16.mxu0 0
  %853 = vmatpush1.bf16.msra.mxu0 %v786
  %854 = vmatprep.subr.bf16.mxu0 0
  %855 = vmatpush1.bf16.msra.mxu0 %v787
  %856 = vmatprep.subr.bf16.mxu0 0
  %857 = vmatpush1.bf16.msra.mxu0 %v788
  %858 = vmatprep.subr.bf16.mxu0 0
  %859 = vmatpush1.bf16.msra.mxu0 %v789
  %860 = vmatprep.subr.bf16.mxu0 0
  %861 = vmatpush1.bf16.msra.mxu0 %v790
  %862 = vmatprep.subr.bf16.mxu0 0
  %863 = vmatpush1.bf16.msra.mxu0 %v791
  %864 = vmatprep.subr.bf16.mxu0 0
  %865 = vmatpush1.bf16.msra.mxu0 %v792
  %866 = vmatprep.subr.bf16.mxu0 0
  %867 = vmatpush1.bf16.msra.mxu0 %v793
  %868 = vmatprep.subr.bf16.mxu0 0
  %869 = vmatpush1.bf16.msra.mxu0 %v794
  %870 = vmatprep.subr.bf16.mxu0 0
  %871 = vmatpush1.bf16.msra.mxu0 %v795
  %872 = vmatprep.subr.bf16.mxu0 0
  %873 = vmatpush1.bf16.msra.mxu0 %v796
  %874 = vmatprep.subr.bf16.mxu0 0
  %875 = vmatpush1.bf16.msra.mxu0 %v797
  %876 = vmatprep.subr.bf16.mxu0 0
  %877 = vmatpush1.bf16.msra.mxu0 %v798
  %878 = vmatprep.subr.bf16.mxu0 0
  %879 = vmatpush1.bf16.msra.mxu0 %v799
  %880 = vmatprep.mubr.bf16.mxu0 %v585
  %881 = vmatmul.mubr.bf16.gmra.mrb[0].mxu0 %v584
  %v882 = vpop.f32.mrb[0].mxu0
  %v883 = vadd.f32 0.0, %v882
  %v884 = vpop.f32.mrb[0].mxu0
  %v885 = vpop.f32.mrb[0].mxu0
  %v886 = vadd.f32 0.0, %v885
  %v887 = vpop.f32.mrb[0].mxu0
  %888 = vmatprep.mubr.bf16.mxu0 %v589
  %889 = vmatmul.mubr.bf16.gmra.mrb[0].mxu0 %v588
  %v890 = vpop.f32.mrb[0].mxu0
  %v891 = vadd.f32 0.0, %v890
  %v892 = vpop.f32.mrb[0].mxu0
  %v893 = vpop.f32.mrb[0].mxu0
  %v894 = vadd.f32 0.0, %v893
  %v895 = vpop.f32.mrb[0].mxu0
  %896 = vdwg.mxu0
  %897 = vmatprep.subr.bf16.mxu0 0
  %898 = vmatpush1.bf16.msra.mxu0 %v800
  %899 = vmatprep.subr.bf16.mxu0 0
  %900 = vmatpush1.bf16.msra.mxu0 %v801
  %901 = vmatprep.subr.bf16.mxu0 0
  %902 = vmatpush1.bf16.msra.mxu0 %v802
  %903 = vmatprep.subr.bf16.mxu0 0
  %904 = vmatpush1.bf16.msra.mxu0 %v803
  %905 = vmatprep.subr.bf16.mxu0 0
  %906 = vmatpush1.bf16.msra.mxu0 %v804
  %907 = vmatprep.subr.bf16.mxu0 0
  %908 = vmatpush1.bf16.msra.mxu0 %v805
  %909 = vmatprep.subr.bf16.mxu0 0
  %910 = vmatpush1.bf16.msra.mxu0 %v806
  %911 = vmatprep.subr.bf16.mxu0 0
  %912 = vmatpush1.bf16.msra.mxu0 %v807
  %913 = vmatprep.subr.bf16.mxu0 0
  %914 = vmatpush1.bf16.msra.mxu0 %v808
  %915 = vmatprep.subr.bf16.mxu0 0
  %916 = vmatpush1.bf16.msra.mxu0 %v809
  %917 = vmatprep.subr.bf16.mxu0 0
  %918 = vmatpush1.bf16.msra.mxu0 %v810
  %919 = vmatprep.subr.bf16.mxu0 0
  %920 = vmatpush1.bf16.msra.mxu0 %v811
  %921 = vmatprep.subr.bf16.mxu0 0
  %922 = vmatpush1.bf16.msra.mxu0 %v812
  %923 = vmatprep.subr.bf16.mxu0 0
  %924 = vmatpush1.bf16.msra.mxu0 %v813
  %925 = vmatprep.subr.bf16.mxu0 0
  %926 = vmatpush1.bf16.msra.mxu0 %v814
  %927 = vmatprep.subr.bf16.mxu0 0
  %928 = vmatpush1.bf16.msra.mxu0 %v815
  %929 = vmatprep.mubr.bf16.mxu0 %v587
  %930 = vmatmul.mubr.bf16.gmra.mrb[0].mxu0 %v586
  %v931 = vpop.f32.mrb[0].mxu0
  %v932 = vadd.f32 %v883, %v931
  %v933 = vpop.f32.mrb[0].mxu0
  %v934 = vpop.f32.mrb[0].mxu0
  %v935 = vadd.f32 %v886, %v934
  %v936 = vpop.f32.mrb[0].mxu0
  %937 = vmatprep.mubr.bf16.mxu0 %v591
  %938 = vmatmul.mubr.bf16.gmra.mrb[0].mxu0 %v590
  %v939 = vpop.f32.mrb[0].mxu0
  %v940 = vadd.f32 %v891, %v939
  %v941 = vpop.f32.mrb[0].mxu0
  %v942 = vpop.f32.mrb[0].mxu0
  %v943 = vadd.f32 %v894, %v942
  %v944 = vpop.f32.mrb[0].mxu0
  %945 = vdwg.mxu0
  %v946 = vadd.f32 %v580, %v932
  %v947 = vadd.f32 %v581, %v935
  %v948 = vadd.f32 %v582, %v940
  %v949 = vadd.f32 %v583, %v943
  %950 = vst [vmem:[#allocation3] sm:$0xff] %v946
  %951 = vst [vmem:[#allocation3 + $0x8] sm:$0xff] %v947
  %952 = vst [vmem:[#allocation3 + $0x10] sm:$0xff] %v948
  %953 = vst [vmem:[#allocation3 + $0x18] sm:$0xff] %v949
  // Predicated region
  $region34: #{lairgpt_forward.8} parent=0 // pred_check
    %p954 = pneg %p27
  $region35: #{lairgpt_forward.8} parent=0 // pred_check_branch
    %956 = sbr.rel (%p954) target = $region37
  $region36: #{lairgpt_forward.8} parent=0 // pred_region
    %v957 = vld [vmem:[#allocation3] sm:$0xff]
    %v958 = vld [vmem:[#allocation3 + $0x8] sm:$0xff]
    %v959 = vld [vmem:[#allocation3 + $0x10] sm:$0xff]
    %v960 = vld [vmem:[#allocation3 + $0x18] sm:$0xff]
    %v961 = vld [vmem:[%s6] sm:$0x1]
    %v963 = vlaneseq
    %v964 = vshrl.u32 %v963, 7
    %v965 = vsub.s32 0, %v964
    %v966 = vrot.slane %v961, %v965
    %v968 = vadd.f32 %v957, %v966
    %v969 = vadd.f32 %v958, %v966
    %v970 = vadd.f32 %v959, %v966
    %v971 = vadd.f32 %v960, %v966
    %v972 = vpack.c.bf16 %v969, %v968
    %v973 = vpack.c.bf16 %v971, %v970
    %v976 = vunpack.c.l.b16 %v972
    %v977 = vunpack.c.h.b16 %v972
    %v978 = vunpack.c.l.b16 %v973
    %v979 = vunpack.c.h.b16 %v973
    %v980 = vpack.c.b16 %v976, %v976
    %v981 = vpack.c.b16 %v977, %v977
    %v982 = vpack.c.b16 %v978, %v978
    %v983 = vpack.c.b16 %v979, %v979
    %988 = vst [vmem:[%s7] sm:$0xf] %v980
    %989 = vst [vmem:[%s7 + $0x4] sm:$0xf] %v981
    %990 = vst [vmem:[%s7 + $0x8] sm:$0xf] %v982
    %991 = vst [vmem:[%s7 + $0xc] sm:$0xf] %v983
  $region37: #{lairgpt_forward.8} parent=0 // pred_fallthru
    _
  // Predicated region
  $region38: #{lairgpt_forward.8} parent=0 // pred_check
    _
  $region39: #{lairgpt_forward.8} parent=0 // pred_check_branch
    %993 = sbr.rel (0) target = $region41
  $region40: #{lairgpt_forward.8} parent=0 // pred_region
    _
  $region41: #{lairgpt_forward.8} parent=0 // pred_fallthru
    _
  // Predicated region
  $region42: #{lairgpt_forward.8} parent=0 // pred_check
    _
  $region43: #{lairgpt_forward.8} parent=0 // pred_check_branch
    %995 = sbr.rel (0) target = $region45
  $region44: #{lairgpt_forward.8} parent=0 // pred_region
    _
  $region45: #{lairgpt_forward.8} parent=0 // pred_fallthru
    _

// kernel: lairgpt_forward.9
$region0: #{lairgpt_forward.9}
  #allocation0 [shape = 'u32[]', space=smem, size = 0x4, offset = 0x4, fixed_abs, tag = 'smem constant byte address 0x4 - core index']
  #allocation1 [shape = 'u32[144,128]{1,0:T(1,128)}', space=vmem, size = 0x12000, scoped, tag = 'internal scratch']
  #allocation2 [shape = 'bf16[32,128]{1,0:T(16,128)(2,1)}', space=vmem, size = 0x2000, scoped, tag = 'scratch operand']
  %s0 = inlined_call_operand.vmem [shape: bf16[32,128], index: 0, kind: input, shape index: {}]
  %s1 = inlined_call_operand.vmem [shape: f32[1,128], index: 1, kind: input, shape index: {}]
  %s2 = inlined_call_operand.vmem [shape: f32[1,128], index: 2, kind: input, shape index: {}]
  %s3 = inlined_call_operand.vmem [shape: bf16[128,256], index: 3, kind: input, shape index: {}]
  %s4 = inlined_call_operand.hbm [shape: f32[32,256], index: 4, kind: output, shape index: {}]
  %s5 = sld [smem:[#allocation0]]
  $region30: #{lairgpt_forward.9} parent=0
    _
  %s7 = ssub.s32 1, %s5
  %s8 = scalar_select 0, %s7, %s5
  $region1: #{lairgpt_forward.9} parent=0
    #allocation3 [shape = 'u8[32768]{0}', space=vmem, size = 0x8000, scoped, tag = 'output window, operand 0, single buffered']
    #allocation4 [shape = 's32[1]{0}', space=sflag, size = 0x4, scoped, tag = 'scoped memory for lairgpt_forward.9']
    %9 = vsyncpa [#allocation4], 0
    // Predicated region
    $region2: #{lairgpt_forward.9} parent=1 // pred_check
      _
    $region3: #{lairgpt_forward.9} parent=1 // pred_check_branch
      %11 = sbr.rel (0) target = $region5
    $region4: #{lairgpt_forward.9} parent=1 // pred_region
      _
    $region5: #{lairgpt_forward.9} parent=1 // pred_fallthru
      _
    // Predicated region
    $region6: #{lairgpt_forward.9} parent=1 // pred_check
      _
    $region7: #{lairgpt_forward.9} parent=1 // pred_check_branch
      %13 = sbr.rel (0) target = $region9
    $region8: #{lairgpt_forward.9} parent=1 // pred_region
      _
    $region9: #{lairgpt_forward.9} parent=1 // pred_fallthru
      _
    // Predicated region
    $region10: #{lairgpt_forward.9} parent=1 // pred_check
      _
    $region11: #{lairgpt_forward.9} parent=1 // pred_check_branch
      %15 = sbr.rel (0) target = $region13
    $region12: #{lairgpt_forward.9} parent=1 // pred_region
      _
    $region13: #{lairgpt_forward.9} parent=1 // pred_fallthru
      _
    // Predicated region
    $region14: #{lairgpt_forward.9} parent=1 // pred_check
      _
    $region15: #{lairgpt_forward.9} parent=1 // pred_check_branch
      %17 = sbr.rel (0) target = $region17
    $region16: #{lairgpt_forward.9} parent=1 // pred_region
      _
    $region17: #{lairgpt_forward.9} parent=1 // pred_fallthru
      _
    %p19 = scmp.eq.s32.totalorder 0, 0
    // Predicated region
    $region18: #{lairgpt_forward.9} parent=1 // pred_check
      %p20 = pneg %p19
    $region19: #{lairgpt_forward.9} parent=1 // pred_check_branch
      %22 = sbr.rel (%p20) target = $region21
    $region20: #{lairgpt_forward.9} parent=1 // pred_region
      %v23 = vld [vmem:[%s0] sm:$0xf]
      %v24 = vld [vmem:[%s0 + $0x4] sm:$0xf]
      %v25 = vld [vmem:[%s0 + $0x8] sm:$0xf]
      %v26 = vld [vmem:[%s0 + $0xc] sm:$0xf]
      %v27 = vunpack.c.l.bf16 %v23
      %v28 = vunpack.c.l.bf16 %v24
      %v29 = vunpack.c.l.bf16 %v25
      %v30 = vunpack.c.l.bf16 %v26
      %v31 = vld [vmem:[%s1] sm:$0x1]
      %v32 = vld [vmem:[%s2] sm:$0x1]
      %33 = vadd.xlane.f32.xlu0 %v27
      %v34 = vpop.xlane.xlu0 %33
      %35 = vadd.xlane.f32.xlu0 %v28
      %v36 = vpop.xlane.xlu0 %35
      %37 = vadd.xlane.f32.xlu0 %v29
      %v38 = vpop.xlane.xlu0 %37
      %39 = vadd.xlane.f32.xlu0 %v30
      %v40 = vpop.xlane.xlu0 %39
      %v41 = vrcp.pop 128.0
      %v42 = vmul.f32 %v34, %v41
      %v43 = vmul.f32 %v36, %v41
      %v44 = vmul.f32 %v38, %v41
      %v45 = vmul.f32 %v40, %v41
      %v46 = vsub.f32 %v27, %v42
      %v47 = vsub.f32 %v28, %v43
      %v48 = vsub.f32 %v29, %v44
      %v49 = vsub.f32 %v30, %v45
      %v50 = vmul.f32 %v46, %v46
      %v51 = vmul.f32 %v47, %v47
      %v52 = vmul.f32 %v48, %v48
      %v53 = vmul.f32 %v49, %v49
      %54 = vadd.xlane.f32.xlu0 %v50
      %v55 = vpop.xlane.xlu0 %54
      %56 = vadd.xlane.f32.xlu0 %v51
      %v57 = vpop.xlane.xlu0 %56
      %58 = vadd.xlane.f32.xlu0 %v52
      %v59 = vpop.xlane.xlu0 %58
      %60 = vadd.xlane.f32.xlu0 %v53
      %v61 = vpop.xlane.xlu0 %60
      %v62 = vmul.f32 %v55, %v41
      %v63 = vmul.f32 %v57, %v41
      %v64 = vmul.f32 %v59, %v41
      %v65 = vmul.f32 %v61, %v41
      %v66 = vadd.f32 %v62, 1e-05
      %v67 = vadd.f32 %v63, 1e-05
      %v68 = vadd.f32 %v64, 1e-05
      %v69 = vadd.f32 %v65, 1e-05
      %v70 = vrsqrt.pop %v66
      %v71 = vrsqrt.pop %v67
      %v72 = vrsqrt.pop %v68
      %v73 = vrsqrt.pop %v69
      %v74 = vmul.f32 %v46, %v70
      %v75 = vmul.f32 %v47, %v71
      %v76 = vmul.f32 %v48, %v72
      %v77 = vmul.f32 %v49, %v73
      %v79 = vlaneseq
      %v80 = vshrl.u32 %v79, 7
      %v81 = vsub.s32 0, %v80
      %v82 = vrot.slane %v31, %v81
      %v84 = vmul.f32 %v74, %v82
      %v85 = vmul.f32 %v75, %v82
      %v86 = vmul.f32 %v76, %v82
      %v87 = vmul.f32 %v77, %v82
      %v89 = vlaneseq
      %v90 = vshrl.u32 %v89, 7
      %v91 = vsub.s32 0, %v90
      %v92 = vrot.slane %v32, %v91
      %v94 = vadd.f32 %v84, %v92
      %v95 = vadd.f32 %v85, %v92
      %v96 = vadd.f32 %v86, %v92
      %v97 = vadd.f32 %v87, %v92
      %v98 = vpack.c.bf16 %v95, %v94
      %v99 = vpack.c.bf16 %v97, %v96
      %100 = vst [vmem:[#allocation2] sm:$0xff] %v98
      %101 = vst [vmem:[#allocation2 + $0x8] sm:$0xff] %v99
    $region21: #{lairgpt_forward.9} parent=1 // pred_fallthru
      _
    %v102 = vld [vmem:[#allocation2] sm:$0xff]
    %v103 = vld [vmem:[#allocation2 + $0x8] sm:$0xff]
    %v104 = vld [vmem:[%s3] sm:$0xff]
    %v105 = vld [vmem:[%s3 + $0x8] sm:$0xff]
    %v106 = vld [vmem:[%s3 + $0x10] sm:$0xff]
    %v107 = vld [vmem:[%s3 + $0x18] sm:$0xff]
    %v108 = vld [vmem:[%s3 + $0x20] sm:$0xff]
    %v109 = vld [vmem:[%s3 + $0x28] sm:$0xff]
    %v110 = vld [vmem:[%s3 + $0x30] sm:$0xff]
    %v111 = vld [vmem:[%s3 + $0x38] sm:$0xff]
    %v112 = vld [vmem:[%s3 + $0x40] sm:$0xff]
    %v113 = vld [vmem:[%s3 + $0x48] sm:$0xff]
    %v114 = vld [vmem:[%s3 + $0x50] sm:$0xff]
    %v115 = vld [vmem:[%s3 + $0x58] sm:$0xff]
    %v116 = vld [vmem:[%s3 + $0x60] sm:$0xff]
    %v117 = vld [vmem:[%s3 + $0x68] sm:$0xff]
    %v118 = vld [vmem:[%s3 + $0x70] sm:$0xff]
    %v119 = vld [vmem:[%s3 + $0x78] sm:$0xff]
    %v136 = vunpack.c.l.b16 %v104
    %v137 = vunpack.c.h.b16 %v104
    %v138 = vunpack.c.l.b16 %v105
    %v139 = vunpack.c.h.b16 %v105
    %v140 = vunpack.c.l.b16 %v106
    %v141 = vunpack.c.h.b16 %v106
    %v142 = vunpack.c.l.b16 %v107
    %v143 = vunpack.c.h.b16 %v107
    %v144 = vunpack.c.l.b16 %v108
    %v145 = vunpack.c.h.b16 %v108
    %v146 = vunpack.c.l.b16 %v109
    %v147 = vunpack.c.h.b16 %v109
    %v148 = vunpack.c.l.b16 %v110
    %v149 = vunpack.c.h.b16 %v110
    %v150 = vunpack.c.l.b16 %v111
    %v151 = vunpack.c.h.b16 %v111
    %v152 = vunpack.c.l.b16 %v112
    %v153 = vunpack.c.h.b16 %v112
    %v154 = vunpack.c.l.b16 %v113
    %v155 = vunpack.c.h.b16 %v113
    %v156 = vunpack.c.l.b16 %v114
    %v157 = vunpack.c.h.b16 %v114
    %v158 = vunpack.c.l.b16 %v115
    %v159 = vunpack.c.h.b16 %v115
    %v160 = vunpack.c.l.b16 %v116
    %v161 = vunpack.c.h.b16 %v116
    %v162 = vunpack.c.l.b16 %v117
    %v163 = vunpack.c.h.b16 %v117
    %v164 = vunpack.c.l.b16 %v118
    %v165 = vunpack.c.h.b16 %v118
    %v166 = vunpack.c.l.b16 %v119
    %v167 = vunpack.c.h.b16 %v119
    %v168 = vpack.c.b16 %v138, %v136
    %v169 = vpack.c.b16 %v139, %v137
    %v170 = vpack.c.b16 %v142, %v140
    %v171 = vpack.c.b16 %v143, %v141
    %v172 = vpack.c.b16 %v146, %v144
    %v173 = vpack.c.b16 %v147, %v145
    %v174 = vpack.c.b16 %v150, %v148
    %v175 = vpack.c.b16 %v151, %v149
    %v176 = vpack.c.b16 %v154, %v152
    %v177 = vpack.c.b16 %v155, %v153
    %v178 = vpack.c.b16 %v158, %v156
    %v179 = vpack.c.b16 %v159, %v157
    %v180 = vpack.c.b16 %v162, %v160
    %v181 = vpack.c.b16 %v163, %v161
    %v182 = vpack.c.b16 %v166, %v164
    %v183 = vpack.c.b16 %v167, %v165
    %200 = vmatprep.subr.bf16.mxu0 %v169
    %201 = vmatpush1.bf16.msra.mxu0 %v168
    %202 = vmatprep.subr.bf16.mxu0 %v171
    %203 = vmatpush1.bf16.msra.mxu0 %v170
    %204 = vmatprep.subr.bf16.mxu0 %v173
    %205 = vmatpush1.bf16.msra.mxu0 %v172
    %206 = vmatprep.subr.bf16.mxu0 %v175
    %207 = vmatpush1.bf16.msra.mxu0 %v174
    %208 = vmatprep.subr.bf16.mxu0 %v177
    %209 = vmatpush1.bf16.msra.mxu0 %v176
    %210 = vmatprep.subr.bf16.mxu0 %v179
    %211 = vmatpush1.bf16.msra.mxu0 %v178
    %212 = vmatprep.subr.bf16.mxu0 %v181
    %213 = vmatpush1.bf16.msra.mxu0 %v180
    %214 = vmatprep.subr.bf16.mxu0 %v183
    %215 = vmatpush1.bf16.msra.mxu0 %v182
    %216 = vmatprep.subr.bf16.mxu0 0
    %217 = vmatpush1.bf16.msra.mxu0 0
    %218 = vmatprep.subr.bf16.mxu0 0
    %219 = vmatpush1.bf16.msra.mxu0 0
    %220 = vmatprep.subr.bf16.mxu0 0
    %221 = vmatpush1.bf16.msra.mxu0 0
    %222 = vmatprep.subr.bf16.mxu0 0
    %223 = vmatpush1.bf16.msra.mxu0 0
    %224 = vmatprep.subr.bf16.mxu0 0
    %225 = vmatpush1.bf16.msra.mxu0 0
    %226 = vmatprep.subr.bf16.mxu0 0
    %227 = vmatpush1.bf16.msra.mxu0 0
    %228 = vmatprep.subr.bf16.mxu0 0
    %229 = vmatpush1.bf16.msra.mxu0 0
    %230 = vmatprep.subr.bf16.mxu0 0
    %231 = vmatpush1.bf16.msra.mxu0 0
    %232 = vmatprep.mubr.bf16.mxu0 0
    %233 = vmatmul.mubr.bf16.gmra.mrb[0].mxu0 %v102
    %v234 = vpop.f32.mrb[0].mxu0
    %v235 = vadd.f32 0.0, %v234
    %v236 = vpop.f32.mrb[0].mxu0
    %v237 = vadd.f32 0.0, %v236
    %v238 = vpop.f32.mrb[0].mxu0
    %v239 = vadd.f32 0.0, %v238
    %v240 = vpop.f32.mrb[0].mxu0
    %v241 = vadd.f32 0.0, %v240
    %242 = vmatprep.mubr.bf16.mxu0 0
    %243 = vmatmul.mubr.bf16.gmra.mrb[0].mxu0 %v103
    %v244 = vpop.f32.mrb[0].mxu0
    %v245 = vadd.f32 0.0, %v244
    %v246 = vpop.f32.mrb[0].mxu0
    %v247 = vadd.f32 0.0, %v246
    %v248 = vpop.f32.mrb[0].mxu0
    %v249 = vadd.f32 0.0, %v248
    %v250 = vpop.f32.mrb[0].mxu0
    %v251 = vadd.f32 0.0, %v250
    %252 = vdwg.mxu0
    %253 = vst [vmem:[#allocation3] sm:$0xff] %v235
    %254 = vst [vmem:[#allocation3 + $0x8] sm:$0xff] %v237
    %255 = vst [vmem:[#allocation3 + $0x10] sm:$0xff] %v239
    %256 = vst [vmem:[#allocation3 + $0x18] sm:$0xff] %v241
    %257 = vst [vmem:[#allocation3 + $0x20] sm:$0xff] %v245
    %258 = vst [vmem:[#allocation3 + $0x28] sm:$0xff] %v247
    %259 = vst [vmem:[#allocation3 + $0x30] sm:$0xff] %v249
    %260 = vst [vmem:[#allocation3 + $0x38] sm:$0xff] %v251
    // Predicated region
    $region22: #{lairgpt_forward.9} parent=1 // pred_check
      _
    $region23: #{lairgpt_forward.9} parent=1 // pred_check_branch
      %262 = sbr.rel (0) target = $region25
    $region24: #{lairgpt_forward.9} parent=1 // pred_region
      %s264 = ssub.s32 1024, 1024
      %265 = vsyncadd [#allocation4], %s264
      %s266 = sshll.u32 [#allocation3], 4
      %s267 = int_to_ptr.vmem [resolvable:$true] %s266
      %272 = dma.vmem_to_hbm [thread:$0]  %s267, 1024, %s4, [#allocation4], 256, 256, 16
    $region25: #{lairgpt_forward.9} parent=1 // pred_fallthru
      _
    // Predicated region
    $region26: #{lairgpt_forward.9} parent=1 // pred_check
      _
    $region27: #{lairgpt_forward.9} parent=1 // pred_check_branch
      %274 = sbr.rel (0) target = $region29
    $region28: #{lairgpt_forward.9} parent=1 // pred_region
      %275 = dma.done [#allocation4], 1024
    $region29: #{lairgpt_forward.9} parent=1 // pred_fallthru
      _
    %276 = vsyncpa [#allocation4], 1

</llo_original>
